<compile_context>
chip_gen: v7x
topology: tpu7x:2x2x1
jax: 0.10.0
libtpu: 0.0.40
codegen_flags: <defaults>
</compile_context>

<pallas_src>
import jax
import jax.numpy as jnp
from jax.experimental import pallas as pl
from jax.experimental.pallas import tpu as pltpu

C_IN = 10
C_OUT = 10
KSIZE = 3            # conv kernel size
POOL = 3             # maxpool kernel size == stride
_HIGH = jax.lax.Precision.HIGHEST   # exact-enough f32 matmuls (selection gathers, conv GEMM)


# ------------------------------ Conv + act ----------------------------------

def _conv_act(x, w, b, slope):
    """Conv2d(10,10,3, stride=1, no padding) + activation, NCHW in/out."""
    B, Cin, H, W = x.shape
    assert Cin == C_IN and H >= KSIZE and W >= KSIZE
    Ho, Wo = H - KSIZE + 1, W - KSIZE + 1
    HW = H * W
    # Flattened output column n = ho*W + wo.  Last valid output is
    # n = (Ho-1)*W + (Wo-1), so computing ncols = (Ho-1)*W + Wo columns means
    # the largest shifted input index is ncols-1 + (2*W+2) = H*W-1 exactly:
    # the kernel can read the un-padded flattened image.
    ncols = (Ho - 1) * W + Wo

    x_flat = x.reshape(B, C_IN, HW)                                  # free (row-major)
    w_r = jnp.transpose(w, (2, 3, 0, 1)).reshape(KSIZE * KSIZE, C_OUT, C_IN)
    b2 = b.reshape(C_OUT, 1)

    def kernel(slope_ref, w_ref, b_ref, x_ref, o_ref):
        # slope_ref: SMEM (1,)   w_ref: (9, C_OUT, C_IN)   b_ref: (C_OUT, 1)
        # x_ref: (1, C_IN, H*W)  o_ref: (1, C_OUT, ncols)
        acc = jnp.zeros((C_OUT, ncols), jnp.float32)
        for kh in range(KSIZE):
            for kw in range(KSIZE):
                d = kh * W + kw                                      # static shift
                xs = x_ref[0, :, pl.ds(d, ncols)]                    # (C_IN, ncols)
                acc = acc + jnp.dot(w_ref[kh * KSIZE + kw], xs,
                                    precision=_HIGH,
                                    preferred_element_type=jnp.float32)
        y = acc + b_ref[...]                                         # bias bcast over lanes
        s = slope_ref[0]
        o_ref[0] = jnp.where(y >= 0.0, y, s * y)

    # TODO(synk): for B == 1 the parallel grid has a single step (one v7x TC);
    # a lane-tiled variant would be needed to use both cores in that case.
    out = pl.pallas_call(
        kernel,
        out_shape=jax.ShapeDtypeStruct((B, C_OUT, ncols), jnp.float32),
        grid=(B,),
        in_specs=[
            pl.BlockSpec(memory_space=pltpu.MemorySpace.SMEM),                 # slope
            pl.BlockSpec((KSIZE * KSIZE, C_OUT, C_IN), lambda bi: (0, 0, 0)),  # weights
            pl.BlockSpec((C_OUT, 1), lambda bi: (0, 0)),                       # bias
            pl.BlockSpec((1, C_IN, HW), lambda bi: (bi, 0, 0)),                # image
        ],
        out_specs=pl.BlockSpec((1, C_OUT, ncols), lambda bi: (bi, 0, 0)),
        compiler_params=pltpu.CompilerParams(
            dimension_semantics=("parallel",),
            vmem_limit_bytes=32 * 1024 * 1024),
    )(slope, w_r, b2, x_flat)

    # Drop the interleaved garbage columns (wo in {W-2, W-1}); XLA fuses
    # pad+reshape+slice into one pass over the (conv-sized) output.
    out = jnp.pad(out, ((0, 0), (0, 0), (0, Ho * W - ncols)))
    return out.reshape(B, C_OUT, Ho, W)[:, :, :, :Wo]


# ------------------------------ Pool + act ----------------------------------

def _pick_pool_group(n, h, w, target_bytes=4 << 20):
    """Largest divisor g of n giving <= ~4 MiB blocks and (if possible) >=2 grid steps."""
    best = 1
    for g in range(1, n + 1):
        if n % g:
            continue
        if g * h * w * 4 > target_bytes:
            continue
        if n >= 2 and n // g < 2:
            continue
        best = g
    return best


def _pool_act(x, slope):
    """MaxPool2d(3) (kernel=stride=3, no padding) + activation, NCHW in/out."""
    B, C, H, W = x.shape
    Ho, Wo = H // POOL, W // POOL
    N = B * C

    xr = x.reshape(N, H, W)                                          # free
    # Exact one-hot selectors: rs[kh, ho, 3*ho+kh] = 1 ; cs[kw, 3*wo+kw, wo] = 1.
    ho_i = jnp.arange(Ho)
    rs = jnp.stack([(jnp.arange(H)[None, :] == (POOL * ho_i[:, None] + kh))
                    .astype(jnp.float32) for kh in range(POOL)])     # (3, Ho, H)
    wo_i = jnp.arange(Wo)
    cs = jnp.stack([(jnp.arange(W)[:, None] == (POOL * wo_i[None, :] + kw))
                    .astype(jnp.float32) for kw in range(POOL)])     # (3, W, Wo)

    G = _pick_pool_group(N, H, W)

    def kernel(slope_ref, rs_ref, cs_ref, x_ref, o_ref):
        # slope_ref: SMEM (1,)  rs_ref: (3, Ho, H)  cs_ref: (3, W, Wo)
        # x_ref: (G, H, W)      o_ref: (G, Ho, Wo)
        xb = x_ref[...]
        dn = (((2,), (1,)), ((0,), (0,)))                 # batched matmul dims
        # Rows: m[g, ho, w] = max_kh x[g, 3*ho + kh, w]   (gather via 0/1 matmul)
        m = None
        for kh in range(POOL):
            sel = jnp.broadcast_to(rs_ref[kh], (G, Ho, H))
            t = jax.lax.dot_general(sel, xb, dn, precision=_HIGH,
                                    preferred_element_type=jnp.float32)
            m = t if m is None else jnp.maximum(m, t)
        # Cols: y[g, ho, wo] = max_kw m[g, ho, 3*wo + kw]
        y = None
        for kw in range(POOL):
            sel = jnp.broadcast_to(cs_ref[kw], (G, W, Wo))
            c = jax.lax.dot_general(m, sel, dn, precision=_HIGH,
                                    preferred_element_type=jnp.float32)
            y = c if y is None else jnp.maximum(y, c)
        s = slope_ref[0]
        o_ref[...] = jnp.where(y >= 0.0, y, s * y)

    out = pl.pallas_call(
        kernel,
        out_shape=jax.ShapeDtypeStruct((N, Ho, Wo), jnp.float32),
        grid=(N // G,),
        in_specs=[
            pl.BlockSpec(memory_space=pltpu.MemorySpace.SMEM),       # slope
            pl.BlockSpec((POOL, Ho, H), lambda i: (0, 0, 0)),        # row selectors
            pl.BlockSpec((POOL, W, Wo), lambda i: (0, 0, 0)),        # col selectors
            pl.BlockSpec((G, H, W), lambda i: (i, 0, 0)),            # images
        ],
        out_specs=pl.BlockSpec((G, Ho, Wo), lambda i: (i, 0, 0)),
        compiler_params=pltpu.CompilerParams(
            dimension_semantics=("parallel",),
            vmem_limit_bytes=32 * 1024 * 1024),
    )(slope, rs, cs, xr)

    return out.reshape(B, C, Ho, Wo)


# ------------------------------ Module API -----------------------------------

def init_params(key):
    """Deterministic parameter init mirroring PyTorch defaults (shapes only matter)."""
    kw, kb = jax.random.split(key)
    fan_in = C_IN * KSIZE * KSIZE
    bound = 1.0 / jnp.sqrt(fan_in)
    return {
        "conv_w": jax.random.uniform(kw, (C_OUT, C_IN, KSIZE, KSIZE),
                                     jnp.float32, -bound, bound),
        "conv_b": jax.random.uniform(kb, (C_OUT,), jnp.float32, -bound, bound),
        "prelu_a": jnp.full((1,), 0.25, jnp.float32),      # PReLU init (num_parameters=1)
        "lrelu_slope": jnp.full((1,), 0.01, jnp.float32),  # LeakyReLU default slope
    }


def dynamic_module_forward(params, x, choice, act):
    """choice in {'conv','pool'}, act in {'lrelu','prelu'} (static Python strings)."""
    slope = params["lrelu_slope"] if act == "lrelu" else params["prelu_a"]
    if choice == "conv":
        return _conv_act(x, params["conv_w"], params["conv_b"], slope)
    elif choice == "pool":
        return _pool_act(x, slope)
    else:
        raise ValueError(f"unknown choice {choice!r}")


# ------------------------------- Reference -----------------------------------

def _reference(params, x, choice, act):
    if choice == "conv":
        y = jax.lax.conv_general_dilated(
            x, params["conv_w"], (1, 1), "VALID",
            dimension_numbers=("NCHW", "OIHW", "NCHW"),
            precision=jax.lax.Precision.HIGHEST)
        y = y + params["conv_b"][None, :, None, None]
    else:
        y = jax.lax.reduce_window(x, -jnp.inf, jax.lax.max,
                                  (1, 1, POOL, POOL), (1, 1, POOL, POOL), "VALID")
    s = (0.01 if act == "lrelu" else float(params["prelu_a"][0]))
    return jnp.where(y >= 0.0, y, s * y)


if __name__ == "__main__":
    key = jax.random.PRNGKey(0)
    kp, kx = jax.random.split(key)
    params = init_params(kp)
    x = jax.random.normal(kx, (2, C_IN, 16, 16), jnp.float32)

    for choice in ("conv", "pool"):
        for act in ("lrelu", "prelu"):
            y = dynamic_module_forward(params, x, choice, act)
            y = jax.block_until_ready(y)
            y_ref = _reference(params, x, choice, act)
            assert y.shape == y_ref.shape, (choice, act, y.shape, y_ref.shape)
            assert jnp.max(jnp.abs(y - y_ref)) < 1e-4, (choice, act)

    print("KERNEL_OK")
</pallas_src>

<mosaic_0001>
module attributes {stable_mosaic.version = 11 : i64} {
  func.func @kernel(%arg0: i32, %arg1: memref<1xf32, #tpu.memory_space<smem>>, %arg2: memref<9x10x10xf32, #tpu.memory_space<vmem>>, %arg3: memref<10x1xf32, #tpu.memory_space<vmem>>, %arg4: memref<1x10x256xf32, #tpu.memory_space<vmem>>, %arg5: memref<1x10x222xf32, #tpu.memory_space<vmem>>) attributes {dimension_semantics = [#tpu.dimension_semantics<parallel>], iteration_bounds = array<i64: 2>, scalar_prefetch = 0 : i64, scratch_operands = 0 : i64, tpu.core_type = #tpu.core_type<tc>, window_params = [{transform_indices = @transform_0, window_bounds = array<i64: 1>}, {pipeline_mode = #tpu.pipeline_mode<synchronous>, transform_indices = @transform_1, window_bounds = array<i64: 9, 10, 10>}, {pipeline_mode = #tpu.pipeline_mode<synchronous>, transform_indices = @transform_2, window_bounds = array<i64: 10, 1>}, {transform_indices = @transform_3, window_bounds = array<i64: 1, 10, 256>}, {transform_indices = @transform_4, window_bounds = array<i64: 1, 10, 222>}]} {
    %cst = arith.constant 0.000000e+00 : f32
    %0 = vector.broadcast %cst : f32 to vector<10x222xf32>
    %c0 = arith.constant 0 : index
    %c0_0 = arith.constant 0 : index
    %c0_1 = arith.constant 0 : index
    %1 = vector.load %arg4[%c0, %c0_0, %c0_1] : memref<1x10x256xf32, #tpu.memory_space<vmem>>, vector<1x10x222xf32>
    %2 = vector.shape_cast %1 : vector<1x10x222xf32> to vector<10x222xf32>
    %c0_2 = arith.constant 0 : index
    %c0_3 = arith.constant 0 : index
    %c0_4 = arith.constant 0 : index
    %3 = vector.load %arg2[%c0_2, %c0_3, %c0_4] : memref<9x10x10xf32, #tpu.memory_space<vmem>>, vector<1x10x10xf32>
    %4 = vector.shape_cast %3 : vector<1x10x10xf32> to vector<10x10xf32>
    %cst_5 = arith.constant dense<0.000000e+00> : vector<10x222xf32>
    %5 = tpu.matmul %4, %2, %cst_5 {dimension_numbers = #tpu.dot_dimension_numbers<[1], [0], [0], [1], [0, 0, 1, 1], [], []>, precision = #tpu.contract_precision<fp32>} : vector<10x10xf32>, vector<10x222xf32>, vector<10x222xf32> -> vector<10x222xf32>
    %6 = arith.addf %0, %5 : vector<10x222xf32>
    %c0_6 = arith.constant 0 : index
    %c0_7 = arith.constant 0 : index
    %c1 = arith.constant 1 : index
    %7 = vector.load %arg4[%c0_6, %c0_7, %c1] : memref<1x10x256xf32, #tpu.memory_space<vmem>>, vector<1x10x222xf32>
    %8 = vector.shape_cast %7 : vector<1x10x222xf32> to vector<10x222xf32>
    %c1_8 = arith.constant 1 : index
    %c0_9 = arith.constant 0 : index
    %c0_10 = arith.constant 0 : index
    %9 = vector.load %arg2[%c1_8, %c0_9, %c0_10] : memref<9x10x10xf32, #tpu.memory_space<vmem>>, vector<1x10x10xf32>
    %10 = vector.shape_cast %9 : vector<1x10x10xf32> to vector<10x10xf32>
    %cst_11 = arith.constant dense<0.000000e+00> : vector<10x222xf32>
    %11 = tpu.matmul %10, %8, %cst_11 {dimension_numbers = #tpu.dot_dimension_numbers<[1], [0], [0], [1], [0, 0, 1, 1], [], []>, precision = #tpu.contract_precision<fp32>} : vector<10x10xf32>, vector<10x222xf32>, vector<10x222xf32> -> vector<10x222xf32>
    %12 = arith.addf %6, %11 : vector<10x222xf32>
    %c0_12 = arith.constant 0 : index
    %c0_13 = arith.constant 0 : index
    %c2 = arith.constant 2 : index
    %13 = vector.load %arg4[%c0_12, %c0_13, %c2] : memref<1x10x256xf32, #tpu.memory_space<vmem>>, vector<1x10x222xf32>
    %14 = vector.shape_cast %13 : vector<1x10x222xf32> to vector<10x222xf32>
    %c2_14 = arith.constant 2 : index
    %c0_15 = arith.constant 0 : index
    %c0_16 = arith.constant 0 : index
    %15 = vector.load %arg2[%c2_14, %c0_15, %c0_16] : memref<9x10x10xf32, #tpu.memory_space<vmem>>, vector<1x10x10xf32>
    %16 = vector.shape_cast %15 : vector<1x10x10xf32> to vector<10x10xf32>
    %cst_17 = arith.constant dense<0.000000e+00> : vector<10x222xf32>
    %17 = tpu.matmul %16, %14, %cst_17 {dimension_numbers = #tpu.dot_dimension_numbers<[1], [0], [0], [1], [0, 0, 1, 1], [], []>, precision = #tpu.contract_precision<fp32>} : vector<10x10xf32>, vector<10x222xf32>, vector<10x222xf32> -> vector<10x222xf32>
    %18 = arith.addf %12, %17 : vector<10x222xf32>
    %c0_18 = arith.constant 0 : index
    %c0_19 = arith.constant 0 : index
    %c16 = arith.constant 16 : index
    %19 = vector.load %arg4[%c0_18, %c0_19, %c16] : memref<1x10x256xf32, #tpu.memory_space<vmem>>, vector<1x10x222xf32>
    %20 = vector.shape_cast %19 : vector<1x10x222xf32> to vector<10x222xf32>
    %c3 = arith.constant 3 : index
    %c0_20 = arith.constant 0 : index
    %c0_21 = arith.constant 0 : index
    %21 = vector.load %arg2[%c3, %c0_20, %c0_21] : memref<9x10x10xf32, #tpu.memory_space<vmem>>, vector<1x10x10xf32>
    %22 = vector.shape_cast %21 : vector<1x10x10xf32> to vector<10x10xf32>
    %cst_22 = arith.constant dense<0.000000e+00> : vector<10x222xf32>
    %23 = tpu.matmul %22, %20, %cst_22 {dimension_numbers = #tpu.dot_dimension_numbers<[1], [0], [0], [1], [0, 0, 1, 1], [], []>, precision = #tpu.contract_precision<fp32>} : vector<10x10xf32>, vector<10x222xf32>, vector<10x222xf32> -> vector<10x222xf32>
    %24 = arith.addf %18, %23 : vector<10x222xf32>
    %c0_23 = arith.constant 0 : index
    %c0_24 = arith.constant 0 : index
    %c17 = arith.constant 17 : index
    %25 = vector.load %arg4[%c0_23, %c0_24, %c17] : memref<1x10x256xf32, #tpu.memory_space<vmem>>, vector<1x10x222xf32>
    %26 = vector.shape_cast %25 : vector<1x10x222xf32> to vector<10x222xf32>
    %c4 = arith.constant 4 : index
    %c0_25 = arith.constant 0 : index
    %c0_26 = arith.constant 0 : index
    %27 = vector.load %arg2[%c4, %c0_25, %c0_26] : memref<9x10x10xf32, #tpu.memory_space<vmem>>, vector<1x10x10xf32>
    %28 = vector.shape_cast %27 : vector<1x10x10xf32> to vector<10x10xf32>
    %cst_27 = arith.constant dense<0.000000e+00> : vector<10x222xf32>
    %29 = tpu.matmul %28, %26, %cst_27 {dimension_numbers = #tpu.dot_dimension_numbers<[1], [0], [0], [1], [0, 0, 1, 1], [], []>, precision = #tpu.contract_precision<fp32>} : vector<10x10xf32>, vector<10x222xf32>, vector<10x222xf32> -> vector<10x222xf32>
    %30 = arith.addf %24, %29 : vector<10x222xf32>
    %c0_28 = arith.constant 0 : index
    %c0_29 = arith.constant 0 : index
    %c18 = arith.constant 18 : index
    %31 = vector.load %arg4[%c0_28, %c0_29, %c18] : memref<1x10x256xf32, #tpu.memory_space<vmem>>, vector<1x10x222xf32>
    %32 = vector.shape_cast %31 : vector<1x10x222xf32> to vector<10x222xf32>
    %c5 = arith.constant 5 : index
    %c0_30 = arith.constant 0 : index
    %c0_31 = arith.constant 0 : index
    %33 = vector.load %arg2[%c5, %c0_30, %c0_31] : memref<9x10x10xf32, #tpu.memory_space<vmem>>, vector<1x10x10xf32>
    %34 = vector.shape_cast %33 : vector<1x10x10xf32> to vector<10x10xf32>
    %cst_32 = arith.constant dense<0.000000e+00> : vector<10x222xf32>
    %35 = tpu.matmul %34, %32, %cst_32 {dimension_numbers = #tpu.dot_dimension_numbers<[1], [0], [0], [1], [0, 0, 1, 1], [], []>, precision = #tpu.contract_precision<fp32>} : vector<10x10xf32>, vector<10x222xf32>, vector<10x222xf32> -> vector<10x222xf32>
    %36 = arith.addf %30, %35 : vector<10x222xf32>
    %c0_33 = arith.constant 0 : index
    %c0_34 = arith.constant 0 : index
    %c32 = arith.constant 32 : index
    %37 = vector.load %arg4[%c0_33, %c0_34, %c32] : memref<1x10x256xf32, #tpu.memory_space<vmem>>, vector<1x10x222xf32>
    %38 = vector.shape_cast %37 : vector<1x10x222xf32> to vector<10x222xf32>
    %c6 = arith.constant 6 : index
    %c0_35 = arith.constant 0 : index
    %c0_36 = arith.constant 0 : index
    %39 = vector.load %arg2[%c6, %c0_35, %c0_36] : memref<9x10x10xf32, #tpu.memory_space<vmem>>, vector<1x10x10xf32>
    %40 = vector.shape_cast %39 : vector<1x10x10xf32> to vector<10x10xf32>
    %cst_37 = arith.constant dense<0.000000e+00> : vector<10x222xf32>
    %41 = tpu.matmul %40, %38, %cst_37 {dimension_numbers = #tpu.dot_dimension_numbers<[1], [0], [0], [1], [0, 0, 1, 1], [], []>, precision = #tpu.contract_precision<fp32>} : vector<10x10xf32>, vector<10x222xf32>, vector<10x222xf32> -> vector<10x222xf32>
    %42 = arith.addf %36, %41 : vector<10x222xf32>
    %c0_38 = arith.constant 0 : index
    %c0_39 = arith.constant 0 : index
    %c33 = arith.constant 33 : index
    %43 = vector.load %arg4[%c0_38, %c0_39, %c33] : memref<1x10x256xf32, #tpu.memory_space<vmem>>, vector<1x10x222xf32>
    %44 = vector.shape_cast %43 : vector<1x10x222xf32> to vector<10x222xf32>
    %c7 = arith.constant 7 : index
    %c0_40 = arith.constant 0 : index
    %c0_41 = arith.constant 0 : index
    %45 = vector.load %arg2[%c7, %c0_40, %c0_41] : memref<9x10x10xf32, #tpu.memory_space<vmem>>, vector<1x10x10xf32>
    %46 = vector.shape_cast %45 : vector<1x10x10xf32> to vector<10x10xf32>
    %cst_42 = arith.constant dense<0.000000e+00> : vector<10x222xf32>
    %47 = tpu.matmul %46, %44, %cst_42 {dimension_numbers = #tpu.dot_dimension_numbers<[1], [0], [0], [1], [0, 0, 1, 1], [], []>, precision = #tpu.contract_precision<fp32>} : vector<10x10xf32>, vector<10x222xf32>, vector<10x222xf32> -> vector<10x222xf32>
    %48 = arith.addf %42, %47 : vector<10x222xf32>
    %c0_43 = arith.constant 0 : index
    %c0_44 = arith.constant 0 : index
    %c34 = arith.constant 34 : index
    %49 = vector.load %arg4[%c0_43, %c0_44, %c34] : memref<1x10x256xf32, #tpu.memory_space<vmem>>, vector<1x10x222xf32>
    %50 = vector.shape_cast %49 : vector<1x10x222xf32> to vector<10x222xf32>
    %c8 = arith.constant 8 : index
    %c0_45 = arith.constant 0 : index
    %c0_46 = arith.constant 0 : index
    %51 = vector.load %arg2[%c8, %c0_45, %c0_46] : memref<9x10x10xf32, #tpu.memory_space<vmem>>, vector<1x10x10xf32>
    %52 = vector.shape_cast %51 : vector<1x10x10xf32> to vector<10x10xf32>
    %cst_47 = arith.constant dense<0.000000e+00> : vector<10x222xf32>
    %53 = tpu.matmul %52, %50, %cst_47 {dimension_numbers = #tpu.dot_dimension_numbers<[1], [0], [0], [1], [0, 0, 1, 1], [], []>, precision = #tpu.contract_precision<fp32>} : vector<10x10xf32>, vector<10x222xf32>, vector<10x222xf32> -> vector<10x222xf32>
    %54 = arith.addf %48, %53 : vector<10x222xf32>
    %c0_48 = arith.constant 0 : index
    %c0_49 = arith.constant 0 : index
    %55 = vector.load %arg3[%c0_48, %c0_49] : memref<10x1xf32, #tpu.memory_space<vmem>>, vector<10x1xf32>
    %56 = vector.broadcast %55 : vector<10x1xf32> to vector<10x222xf32>
    %57 = arith.addf %54, %56 : vector<10x222xf32>
    %c0_50 = arith.constant 0 : index
    %58 = memref.load %arg1[%c0_50] : memref<1xf32, #tpu.memory_space<smem>>
    %cst_51 = arith.constant 0.000000e+00 : f32
    %59 = vector.broadcast %cst_51 : f32 to vector<10x222xf32>
    %60 = arith.cmpf oge, %57, %59 : vector<10x222xf32>
    %61 = vector.broadcast %58 : f32 to vector<10x222xf32>
    %62 = arith.mulf %61, %57 : vector<10x222xf32>
    %63 = arith.select %60, %57, %62 : vector<10x222xi1>, vector<10x222xf32>
    %c0_52 = arith.constant 0 : index
    %c0_53 = arith.constant 0 : index
    %c0_54 = arith.constant 0 : index
    %64 = vector.load %arg5[%c0_52, %c0_53, %c0_54] : memref<1x10x222xf32, #tpu.memory_space<vmem>>, vector<1x10x222xf32>
    %65 = vector.shape_cast %64 : vector<1x10x222xf32> to vector<10x222xf32>
    %66 = vector.shape_cast %63 : vector<10x222xf32> to vector<1x10x222xf32>
    tpu.vector_store %arg5[%c0_52, %c0_53, %c0_54], %66 {strides = array<i32>} : memref<1x10x222xf32, #tpu.memory_space<vmem>>, vector<1x10x222xf32>,
    return
  }
  func.func @transform_0(%arg0: i32) -> i32 {
    %c0_i32 = arith.constant 0 : i32
    %c0_i32_0 = arith.constant 0 : i32
    return %c0_i32 : i32
  }
  func.func @transform_1(%arg0: i32) -> (i32, i32, i32) {
    %c0_i32 = arith.constant 0 : i32
    %c0_i32_0 = arith.constant 0 : i32
    %c0_i32_1 = arith.constant 0 : i32
    %c0_i32_2 = arith.constant 0 : i32
    return %c0_i32, %c0_i32_0, %c0_i32_1 : i32, i32, i32
  }
  func.func @transform_2(%arg0: i32) -> (i32, i32) {
    %c0_i32 = arith.constant 0 : i32
    %c0_i32_0 = arith.constant 0 : i32
    %c0_i32_1 = arith.constant 0 : i32
    return %c0_i32, %c0_i32_0 : i32, i32
  }
  func.func @transform_3(%arg0: i32) -> (i32, i32, i32) {
    %c0_i32 = arith.constant 0 : i32
    %c0_i32_0 = arith.constant 0 : i32
    %c0_i32_1 = arith.constant 0 : i32
    return %arg0, %c0_i32, %c0_i32_0 : i32, i32, i32
  }
  func.func @transform_4(%arg0: i32) -> (i32, i32, i32) {
    %c0_i32 = arith.constant 0 : i32
    %c0_i32_0 = arith.constant 0 : i32
    %c0_i32_1 = arith.constant 0 : i32
    return %arg0, %c0_i32, %c0_i32_0 : i32, i32, i32
  }
}

</mosaic_0001>

<llo_original>
// kernel: tpu_custom_call.1
$region0: #{tpu_custom_call.1}
  #allocation0 [shape = 'u32[]', space=smem, size = 0x4, offset = 0x4, fixed_abs, tag = 'smem constant byte address 0x4 - core index']
  #allocation1 [shape = 'u32[144,128]{1,0:T(1,128)}', space=vmem, size = 0x12000, scoped, tag = 'internal scratch']
  #allocation2 [shape = 'f32[1]{0:T(128)S(6)}', space=smem, size = 0x200, scoped, tag = 'scoped memory for tpu_custom_call.1']
  %s0 = inlined_call_operand.<no memory space> [shape: f32[1], index: 0, kind: input, shape index: {}]
  %s1 = inlined_call_operand.hbm [shape: f32[9,10,10], index: 1, kind: input, shape index: {}]
  %s2 = inlined_call_operand.vmem [shape: f32[10,1], index: 2, kind: input, shape index: {}]
  %s3 = inlined_call_operand.vmem [shape: f32[2,10,256], index: 3, kind: input, shape index: {}]
  %s4 = inlined_call_operand.vmem [shape: f32[2,10,222], index: 4, kind: output, shape index: {}]
  %s5 = sld [smem:[#allocation0]]
  $region53: #{tpu_custom_call.1} parent=0
    _
  %s7 = ssub.s32 1, %s5
  %s8 = scalar_select 0, %s7, %s5
  %9 = sst [smem:[#allocation2]] %s0
  $region1: #{tpu_custom_call.1} parent=0
    #allocation3 [shape = 'u8[73728]{0}', space=vmem, size = 0x12000, scoped, tag = 'input window, operand 1, single buffered']
    #allocation4 [shape = 's32[2]{0}', space=sflag, size = 0x8, scoped, tag = 'scoped memory for tpu_custom_call.1']
    %10 = vsyncpa [#allocation4], 0
    loop: start=0, step=1, limit=4
    $region2: #{tpu_custom_call.1} parent=1 // loop_pre_header
      _
    $region3: #{tpu_custom_call.1} parent=1 // loop_header
      %s12 = sphi 0, %s16
      %p13 = scmp.ge.s32.totalorder %s12, 4
      %s20 = sphi 0, %s20
      %s22 = sphi 0, %s20
      %s23 = sphi 0, %s22
      %s37 = sphi 0, %s23
      %s41 = sphi 0, %s41
      %s43 = sphi 0, %s41
      %s44 = sphi 0, %s43
      %s58 = sphi 0, %s44
      %s62 = sphi 0, %s62
      %s64 = sphi 0, %s62
      %s65 = sphi 0, %s64
      %s79 = sphi 0, %s65
      %s85 = sphi 0, %s87
      %s88 = sphi 0, %s85
      %s89 = sphi 0, %s88
      %s105 = sphi 0, %s89
      %s111 = sphi 0, %s113
      %s114 = sphi 0, %s111
      %s115 = sphi 0, %s114
      %s131 = sphi 0, %s115
    $region4: #{tpu_custom_call.1} parent=1 // loop_header_branch
      %15 = sbr.rel (%p13) target = $region8
    $region5: #{tpu_custom_call.1} parent=1 // loop_body
      %s17 = ssub.s32 %s12, 1
      %s18 = ssub.s32 %s12, 2
      %s19 = sadd.s32 %s12, 1
      %s21 = sadd.s32 %s20, 1
      %p24 = scmp.eq.s32.totalorder %s12, 1
      %p25 = scmp.ne.s32.totalorder %s20, %s22
      %p26 = scmp.eq.s32.totalorder %s12, 0
      %p27 = por %p25, %p26
      %p28 = scmp.ne.s32.totalorder %s20, %s22
      %p29 = scmp.eq.s32.totalorder %s17, 1
      %p30 = por %p28, %p29
      %p31 = scmp.ne.s32.totalorder %s22, %s23
      %p32 = scmp.eq.s32.totalorder %s17, 0
      %p33 = por %p31, %p32
      %p34 = scmp.ne.s32.totalorder %s22, %s23
      %p35 = scmp.eq.s32.totalorder %s18, 1
      %p36 = por %p34, %p35
      %p38 = scmp.ne.s32.totalorder %s23, %s37
      %p39 = scmp.eq.s32.totalorder %s18, 0
      %p40 = por %p38, %p39
      %s42 = sadd.s32 %s41, 1
      %p45 = scmp.eq.s32.totalorder %s12, 1
      %p46 = scmp.ne.s32.totalorder %s41, %s43
      %p47 = scmp.eq.s32.totalorder %s12, 0
      %p48 = por %p46, %p47
      %p49 = scmp.ne.s32.totalorder %s41, %s43
      %p50 = scmp.eq.s32.totalorder %s17, 1
      %p51 = por %p49, %p50
      %p52 = scmp.ne.s32.totalorder %s43, %s44
      %p53 = scmp.eq.s32.totalorder %s17, 0
      %p54 = por %p52, %p53
      %p55 = scmp.ne.s32.totalorder %s43, %s44
      %p56 = scmp.eq.s32.totalorder %s18, 1
      %p57 = por %p55, %p56
      %p59 = scmp.ne.s32.totalorder %s44, %s58
      %p60 = scmp.eq.s32.totalorder %s18, 0
      %p61 = por %p59, %p60
      %s63 = sadd.s32 %s62, 1
      %p66 = scmp.eq.s32.totalorder %s12, 1
      %p67 = scmp.ne.s32.totalorder %s62, %s64
      %p68 = scmp.eq.s32.totalorder %s12, 0
      %p69 = por %p67, %p68
      %p70 = scmp.ne.s32.totalorder %s62, %s64
      %p71 = scmp.eq.s32.totalorder %s17, 1
      %p72 = por %p70, %p71
      %p73 = scmp.ne.s32.totalorder %s64, %s65
      %p74 = scmp.eq.s32.totalorder %s17, 0
      %p75 = por %p73, %p74
      %p76 = scmp.ne.s32.totalorder %s64, %s65
      %p77 = scmp.eq.s32.totalorder %s18, 1
      %p78 = por %p76, %p77
      %p80 = scmp.ne.s32.totalorder %s65, %s79
      %p81 = scmp.eq.s32.totalorder %s18, 0
      %p82 = por %p80, %p81
      %s83 = ssub.s32 %s12, %s19
      %p84 = scmp.eq.s32.totalorder %s83, 0
      %s86 = sadd.s32 %s85, 1
      %s87 = scalar_select %p84, %s85, %s86
      %p90 = pneg %p84
      %p91 = scmp.eq.s32.totalorder %s12, 1
      %p92 = por %p90, %p91
      %p93 = scmp.ne.s32.totalorder %s85, %s88
      %p94 = scmp.eq.s32.totalorder %s12, 0
      %p95 = por %p93, %p94
      %p96 = scmp.ne.s32.totalorder %s85, %s88
      %p97 = scmp.eq.s32.totalorder %s17, 1
      %p98 = por %p96, %p97
      %p99 = scmp.ne.s32.totalorder %s88, %s89
      %p100 = scmp.eq.s32.totalorder %s17, 0
      %p101 = por %p99, %p100
      %p102 = scmp.ne.s32.totalorder %s88, %s89
      %p103 = scmp.eq.s32.totalorder %s18, 1
      %p104 = por %p102, %p103
      %p106 = scmp.ne.s32.totalorder %s89, %s105
      %p107 = scmp.eq.s32.totalorder %s18, 0
      %p108 = por %p106, %p107
      %s109 = ssub.s32 %s12, %s19
      %p110 = scmp.eq.s32.totalorder %s109, 0
      %s112 = sadd.s32 %s111, 1
      %s113 = scalar_select %p110, %s111, %s112
      %p116 = pneg %p110
      %p117 = scmp.eq.s32.totalorder %s12, 1
      %p118 = por %p116, %p117
      %p119 = scmp.ne.s32.totalorder %s111, %s114
      %p120 = scmp.eq.s32.totalorder %s12, 0
      %p121 = por %p119, %p120
      %p122 = scmp.ne.s32.totalorder %s111, %s114
      %p123 = scmp.eq.s32.totalorder %s17, 1
      %p124 = por %p122, %p123
      %p125 = scmp.ne.s32.totalorder %s114, %s115
      %p126 = scmp.eq.s32.totalorder %s17, 0
      %p127 = por %p125, %p126
      %p128 = scmp.ne.s32.totalorder %s114, %s115
      %p129 = scmp.eq.s32.totalorder %s18, 1
      %p130 = por %p128, %p129
      %p132 = scmp.ne.s32.totalorder %s115, %s131
      %p133 = scmp.eq.s32.totalorder %s18, 0
      %p134 = por %p132, %p133
      %p135 = scmp.le.s32.totalorder 1, %s12
      %p136 = scmp.lt.s32.totalorder %s12, 3
      %p137 = pnand %p135, %p136
      %p138 = pneg %p137
      // Predicated region
      $region9: #{tpu_custom_call.1} parent=5 // pred_check
        _
      $region10: #{tpu_custom_call.1} parent=5 // pred_check_branch
        %140 = sbr.rel (%p137) target = $region12
      $region11: #{tpu_custom_call.1} parent=5 // pred_region
        %s141 = ssub.s32 %s12, 1
        // Predicated region
        $region13: #{tpu_custom_call.1} parent=11 // pred_check
          %p142 = pneg %p33
        $region14: #{tpu_custom_call.1} parent=11 // pred_check_branch
          %144 = sbr.rel (%p142) target = $region16
        $region15: #{tpu_custom_call.1} parent=11 // pred_region
          _
        $region16: #{tpu_custom_call.1} parent=11 // pred_fallthru
          _
        // Predicated region
        $region17: #{tpu_custom_call.1} parent=11 // pred_check
          %p145 = pneg %p54
        $region18: #{tpu_custom_call.1} parent=11 // pred_check_branch
          %147 = sbr.rel (%p145) target = $region20
        $region19: #{tpu_custom_call.1} parent=11 // pred_region
          %s149 = ssub.s32 2304, 2304
          %150 = vsyncadd [#allocation4], %s149
          %s151 = sshll.u32 [#allocation3], 4
          %s152 = int_to_ptr.vmem [resolvable:$true] %s151
          %157 = dma.hbm_to_vmem [thread:$0]  %s1, 2304, %s152, [#allocation4], 128, 128, 8
        $region20: #{tpu_custom_call.1} parent=11 // pred_fallthru
          _
        // Predicated region
        $region21: #{tpu_custom_call.1} parent=11 // pred_check
          %p158 = pneg %p75
        $region22: #{tpu_custom_call.1} parent=11 // pred_check_branch
          %160 = sbr.rel (%p158) target = $region24
        $region23: #{tpu_custom_call.1} parent=11 // pred_region
          _
        $region24: #{tpu_custom_call.1} parent=11 // pred_fallthru
          _
      $region12: #{tpu_custom_call.1} parent=5 // pred_fallthru
        _
      %p161 = scmp.lt.s32.totalorder %s12, 2
      // Predicated region
      $region25: #{tpu_custom_call.1} parent=5 // pred_check
        %p162 = pneg %p161
      $region26: #{tpu_custom_call.1} parent=5 // pred_check_branch
        %164 = sbr.rel (%p162) target = $region28
      $region27: #{tpu_custom_call.1} parent=5 // pred_region
        // Predicated region
        $region29: #{tpu_custom_call.1} parent=27 // pred_check
          %p165 = pneg %p95
        $region30: #{tpu_custom_call.1} parent=27 // pred_check_branch
          %167 = sbr.rel (%p165) target = $region32
        $region31: #{tpu_custom_call.1} parent=27 // pred_region
          %p168 = scmp.lt.s32.totalorder %s12, 1
          %s169 = scalar_select %p168, %s12, 1
          %s170 = smul.addr %s169, 4
          %s171 = smul.addr %s170, 8
          %s172 = scalar_lea.vmem %s3, %s171
        $region32: #{tpu_custom_call.1} parent=27 // pred_fallthru
          _
      $region28: #{tpu_custom_call.1} parent=5 // pred_fallthru
        _
      %p173 = scmp.le.s32.totalorder 1, %s12
      %p174 = scmp.lt.s32.totalorder %s12, 3
      %p175 = pnand %p173, %p174
      %p176 = pneg %p175
      // Predicated region
      $region33: #{tpu_custom_call.1} parent=5 // pred_check
        _
      $region34: #{tpu_custom_call.1} parent=5 // pred_check_branch
        %178 = sbr.rel (%p175) target = $region36
      $region35: #{tpu_custom_call.1} parent=5 // pred_region
        %s179 = ssub.s32 %s12, 1
        // Predicated region
        $region37: #{tpu_custom_call.1} parent=35 // pred_check
          %p180 = pneg %p54
        $region38: #{tpu_custom_call.1} parent=35 // pred_check_branch
          %182 = sbr.rel (%p180) target = $region40
        $region39: #{tpu_custom_call.1} parent=35 // pred_region
          %183 = dma.done [#allocation4], 2304
        $region40: #{tpu_custom_call.1} parent=35 // pred_fallthru
          _
        %p184 = pneg %p33
        %p185 = pneg %p30
        %p186 = pneg %p54
        %p187 = pneg %p51
        %p188 = pneg %p75
        %p189 = pneg %p72
        %p190 = scmp.lt.s32.totalorder %s17, 1
        %s191 = scalar_select %p190, %s17, 1
        %s192 = smul.addr %s191, 4
        %s193 = smul.addr %s192, 8
        %s194 = scalar_lea.vmem %s3, %s193
        %p195 = pneg %p101
        %p196 = pneg %p98
        %p197 = pneg %p127
        %p198 = pneg %p124
        %p199 = scmp.lt.s32.totalorder %s17, 1
        %s200 = scalar_select %p199, %s17, 1
        %s201 = smul.addr %s200, 4
        %s202 = smul.addr %s201, 8
        %s203 = scalar_lea.vmem %s4, %s202
        %p204 = scmp.lt.s32.totalorder %s17, 1
        %s205 = scalar_select %p204, %s17, 1
        %s206 = smul.addr %s205, 4
        %s207 = smul.addr %s206, 8
        %s208 = scalar_lea.vmem %s3, %s207
        %p209 = scmp.lt.s32.totalorder %s17, 1
        %s210 = scalar_select %p209, %s17, 1
        %s211 = smul.addr %s210, 4
        %s212 = smul.addr %s211, 8
        %s213 = scalar_lea.vmem %s4, %s212
        %v214 = vld [vmem:[%s208] sm:$0xff]
        %v215 = vld [vmem:[%s208 + $0x8] sm:$0xff]
        %v216 = vld [vmem:[%s208 + $0x10] sm:$0x3]
        %v217 = vld [vmem:[%s208 + $0x18] sm:$0x3]
        %v218 = vld [vmem:[#allocation3] sm:$0xff]
        %v219 = vld [vmem:[#allocation3 + $0x8] sm:$0x3]
        %s220 = scalar_lea.vmem [#allocation3], 16
        %v221 = vld [vmem:[%s220] sm:$0xff]
        %v222 = vld [vmem:[%s220 + $0x8] sm:$0x3]
        %227 = vrot.lane.b32.xlu0 %v214, 127
        %v228 = vpop.permute.xlu0 %227
        %229 = vrot.lane.b32.xlu0 %v215, 127
        %v230 = vpop.permute.xlu0 %229
        %231 = vrot.lane.b32.xlu0 %v216, 127
        %v232 = vpop.permute.xlu0 %231
        %233 = vrot.lane.b32.xlu0 %v217, 127
        %v234 = vpop.permute.xlu0 %233
        %vm235 = vcmask 1039360
        %v236 = vsel %vm235, %v228, %v230
        %v237 = vsel %vm235, %v232, %v234
        %vm240 = vcmask 80896
        %v242 = vsel %vm240, %v221, 0
        %v245 = vsel %vm240, %v222, 0
        %vm247 = vcmask 1041408
        %v248 = vsel %vm247, %v237, 0
        %v250 = vsel %vm247, %v234, 0
        %v252 = vand.u32 %v230, 4294901760
        %253 = vmatprep.subr.mxu0 %v252
        %v254 = vand.u32 %v236, 4294901760
        %255 = vmatpush1.msra.mxu0 %v254
        %v256 = vand.u32 %v250, 4294901760
        %257 = vmatprep.subr.mxu0 %v256
        %v258 = vand.u32 %v248, 4294901760
        %259 = vmatpush1.msra.mxu0 %v258
        %260 = vmatprep.subr.mxu0 0.0
        %261 = vmatpush1.msra.mxu0 0.0
        %262 = vmatprep.subr.mxu0 0.0
        %263 = vmatpush1.msra.mxu0 0.0
        %264 = vmatprep.subr.mxu0 0.0
        %265 = vmatpush1.msra.mxu0 0.0
        %266 = vmatprep.subr.mxu0 0.0
        %267 = vmatpush1.msra.mxu0 0.0
        %268 = vmatprep.subr.mxu0 0.0
        %269 = vmatpush1.msra.mxu0 0.0
        %270 = vmatprep.subr.mxu0 0.0
        %271 = vmatpush1.msra.mxu0 0.0
        %272 = vmatprep.subr.mxu0 0.0
        %273 = vmatpush1.msra.mxu0 0.0
        %274 = vmatprep.subr.mxu0 0.0
        %275 = vmatpush1.msra.mxu0 0.0
        %276 = vmatprep.subr.mxu0 0.0
        %277 = vmatpush1.msra.mxu0 0.0
        %278 = vmatprep.subr.mxu0 0.0
        %279 = vmatpush1.msra.mxu0 0.0
        %280 = vmatprep.subr.mxu0 0.0
        %281 = vmatpush1.msra.mxu0 0.0
        %282 = vmatprep.subr.mxu0 0.0
        %283 = vmatpush1.msra.mxu0 0.0
        %284 = vmatprep.subr.mxu0 0.0
        %285 = vmatpush1.msra.mxu0 0.0
        %286 = vmatprep.subr.mxu0 0.0
        %287 = vmatpush1.msra.mxu0 0.0
        %288 = vmatprep.subr.mxu0 0.0
        %289 = vmatpush1.msra.mxu0 0.0
        %290 = vmatprep.subr.mxu0 0.0
        %291 = vmatpush1.msra.mxu0 0.0
        %292 = vmatprep.subr.mxu0 0.0
        %293 = vmatpush1.msra.mxu0 0.0
        %294 = vmatprep.subr.mxu0 0.0
        %295 = vmatpush1.msra.mxu0 0.0
        %296 = vmatprep.subr.mxu0 0.0
        %297 = vmatpush1.msra.mxu0 0.0
        %298 = vmatprep.subr.mxu0 0.0
        %299 = vmatpush1.msra.mxu0 0.0
        %300 = vmatprep.subr.mxu0 0.0
        %301 = vmatpush1.msra.mxu0 0.0
        %302 = vmatprep.subr.mxu0 0.0
        %303 = vmatpush1.msra.mxu0 0.0
        %304 = vmatprep.subr.mxu0 0.0
        %305 = vmatpush1.msra.mxu0 0.0
        %306 = vmatprep.subr.mxu0 0.0
        %307 = vmatpush1.msra.mxu0 0.0
        %308 = vmatprep.subr.mxu0 0.0
        %309 = vmatpush1.msra.mxu0 0.0
        %310 = vmatprep.subr.mxu0 0.0
        %311 = vmatpush1.msra.mxu0 0.0
        %312 = vmatprep.subr.mxu0 0.0
        %313 = vmatpush1.msra.mxu0 0.0
        %314 = vmatprep.subr.mxu0 0.0
        %315 = vmatpush1.msra.mxu0 0.0
        %316 = vmatprep.subr.mxu0 0.0
        %317 = vmatpush1.msra.mxu0 0.0
        %318 = vmatprep.subr.mxu0 0.0
        %319 = vmatpush1.msra.mxu0 0.0
        %320 = vmatprep.mubr.f32.mxu0 0.0
        %v321 = vand.u32 %v242, 4294901760
        %v322 = vsub.f32 %v242, %v321
        %v323 = vand.u32 %v322, 4294901760
        %v324 = vsub.f32 %v322, %v323
        %v325 = vand.u32 %v324, 4294901760
        %326 = vmatmul.mubr.f32.gmra.mrb[0].mxu0 %v325
        %v327 = vpop.f32.mrb[0].mxu0
        %v328 = vadd.f32 0.0, %v327
        %v329 = vpop.f32.mrb[0].mxu0
        %v330 = vadd.f32 0.0, %v329
        %331 = vmatprep.mubr.f32.mxu0 0.0
        %v332 = vand.u32 %v245, 4294901760
        %v333 = vsub.f32 %v245, %v332
        %v334 = vand.u32 %v333, 4294901760
        %v335 = vsub.f32 %v333, %v334
        %v336 = vand.u32 %v335, 4294901760
        %337 = vmatmul.mubr.f32.gmra.mrb[0].mxu0 %v336
        %v338 = vpop.f32.mrb[0].mxu0
        %v339 = vadd.f32 0.0, %v338
        %v340 = vpop.f32.mrb[0].mxu0
        %v341 = vadd.f32 0.0, %v340
        %342 = vdwg.mxu0
        %v343 = vand.u32 %v230, 4294901760
        %v344 = vsub.f32 %v230, %v343
        %v345 = vand.u32 %v344, 4294901760
        %v346 = vsub.f32 %v344, %v345
        %v347 = vand.u32 %v346, 4294901760
        %348 = vmatprep.subr.mxu0 %v347
        %v349 = vand.u32 %v236, 4294901760
        %v350 = vsub.f32 %v236, %v349
        %v351 = vand.u32 %v350, 4294901760
        %v352 = vsub.f32 %v350, %v351
        %v353 = vand.u32 %v352, 4294901760
        %354 = vmatpush1.msra.mxu0 %v353
        %v355 = vand.u32 %v250, 4294901760
        %v356 = vsub.f32 %v250, %v355
        %v357 = vand.u32 %v356, 4294901760
        %v358 = vsub.f32 %v356, %v357
        %v359 = vand.u32 %v358, 4294901760
        %360 = vmatprep.subr.mxu0 %v359
        %v361 = vand.u32 %v248, 4294901760
        %v362 = vsub.f32 %v248, %v361
        %v363 = vand.u32 %v362, 4294901760
        %v364 = vsub.f32 %v362, %v363
        %v365 = vand.u32 %v364, 4294901760
        %366 = vmatpush1.msra.mxu0 %v365
        %367 = vmatprep.subr.mxu0 0.0
        %368 = vmatpush1.msra.mxu0 0.0
        %369 = vmatprep.subr.mxu0 0.0
        %370 = vmatpush1.msra.mxu0 0.0
        %371 = vmatprep.subr.mxu0 0.0
        %372 = vmatpush1.msra.mxu0 0.0
        %373 = vmatprep.subr.mxu0 0.0
        %374 = vmatpush1.msra.mxu0 0.0
        %375 = vmatprep.subr.mxu0 0.0
        %376 = vmatpush1.msra.mxu0 0.0
        %377 = vmatprep.subr.mxu0 0.0
        %378 = vmatpush1.msra.mxu0 0.0
        %379 = vmatprep.subr.mxu0 0.0
        %380 = vmatpush1.msra.mxu0 0.0
        %381 = vmatprep.subr.mxu0 0.0
        %382 = vmatpush1.msra.mxu0 0.0
        %383 = vmatprep.subr.mxu0 0.0
        %384 = vmatpush1.msra.mxu0 0.0
        %385 = vmatprep.subr.mxu0 0.0
        %386 = vmatpush1.msra.mxu0 0.0
        %387 = vmatprep.subr.mxu0 0.0
        %388 = vmatpush1.msra.mxu0 0.0
        %389 = vmatprep.subr.mxu0 0.0
        %390 = vmatpush1.msra.mxu0 0.0
        %391 = vmatprep.subr.mxu0 0.0
        %392 = vmatpush1.msra.mxu0 0.0
        %393 = vmatprep.subr.mxu0 0.0
        %394 = vmatpush1.msra.mxu0 0.0
        %395 = vmatprep.subr.mxu0 0.0
        %396 = vmatpush1.msra.mxu0 0.0
        %397 = vmatprep.subr.mxu0 0.0
        %398 = vmatpush1.msra.mxu0 0.0
        %399 = vmatprep.subr.mxu0 0.0
        %400 = vmatpush1.msra.mxu0 0.0
        %401 = vmatprep.subr.mxu0 0.0
        %402 = vmatpush1.msra.mxu0 0.0
        %403 = vmatprep.subr.mxu0 0.0
        %404 = vmatpush1.msra.mxu0 0.0
        %405 = vmatprep.subr.mxu0 0.0
        %406 = vmatpush1.msra.mxu0 0.0
        %407 = vmatprep.subr.mxu0 0.0
        %408 = vmatpush1.msra.mxu0 0.0
        %409 = vmatprep.subr.mxu0 0.0
        %410 = vmatpush1.msra.mxu0 0.0
        %411 = vmatprep.subr.mxu0 0.0
        %412 = vmatpush1.msra.mxu0 0.0
        %413 = vmatprep.subr.mxu0 0.0
        %414 = vmatpush1.msra.mxu0 0.0
        %415 = vmatprep.subr.mxu0 0.0
        %416 = vmatpush1.msra.mxu0 0.0
        %417 = vmatprep.subr.mxu0 0.0
        %418 = vmatpush1.msra.mxu0 0.0
        %419 = vmatprep.subr.mxu0 0.0
        %420 = vmatpush1.msra.mxu0 0.0
        %421 = vmatprep.subr.mxu0 0.0
        %422 = vmatpush1.msra.mxu0 0.0
        %423 = vmatprep.subr.mxu0 0.0
        %424 = vmatpush1.msra.mxu0 0.0
        %425 = vmatprep.subr.mxu0 0.0
        %426 = vmatpush1.msra.mxu0 0.0
        %427 = vmatprep.mubr.f32.mxu0 0.0
        %v428 = vand.u32 %v242, 4294901760
        %429 = vmatmul.mubr.f32.gmra.mrb[0].mxu0 %v428
        %v430 = vpop.f32.mrb[0].mxu0
        %v431 = vadd.f32 %v328, %v430
        %v432 = vpop.f32.mrb[0].mxu0
        %v433 = vadd.f32 %v330, %v432
        %434 = vmatprep.mubr.f32.mxu0 0.0
        %v435 = vand.u32 %v245, 4294901760
        %436 = vmatmul.mubr.f32.gmra.mrb[0].mxu0 %v435
        %v437 = vpop.f32.mrb[0].mxu0
        %v438 = vadd.f32 %v339, %v437
        %v439 = vpop.f32.mrb[0].mxu0
        %v440 = vadd.f32 %v341, %v439
        %441 = vdwg.mxu0
        %v442 = vand.u32 %v230, 4294901760
        %v443 = vsub.f32 %v230, %v442
        %444 = vmatprep.subr.mxu0 %v443
        %v445 = vand.u32 %v236, 4294901760
        %v446 = vsub.f32 %v236, %v445
        %447 = vmatpush1.msra.mxu0 %v446
        %v448 = vand.u32 %v250, 4294901760
        %v449 = vsub.f32 %v250, %v448
        %450 = vmatprep.subr.mxu0 %v449
        %v451 = vand.u32 %v248, 4294901760
        %v452 = vsub.f32 %v248, %v451
        %453 = vmatpush1.msra.mxu0 %v452
        %454 = vmatprep.subr.mxu0 0.0
        %455 = vmatpush1.msra.mxu0 0.0
        %456 = vmatprep.subr.mxu0 0.0
        %457 = vmatpush1.msra.mxu0 0.0
        %458 = vmatprep.subr.mxu0 0.0
        %459 = vmatpush1.msra.mxu0 0.0
        %460 = vmatprep.subr.mxu0 0.0
        %461 = vmatpush1.msra.mxu0 0.0
        %462 = vmatprep.subr.mxu0 0.0
        %463 = vmatpush1.msra.mxu0 0.0
        %464 = vmatprep.subr.mxu0 0.0
        %465 = vmatpush1.msra.mxu0 0.0
        %466 = vmatprep.subr.mxu0 0.0
        %467 = vmatpush1.msra.mxu0 0.0
        %468 = vmatprep.subr.mxu0 0.0
        %469 = vmatpush1.msra.mxu0 0.0
        %470 = vmatprep.subr.mxu0 0.0
        %471 = vmatpush1.msra.mxu0 0.0
        %472 = vmatprep.subr.mxu0 0.0
        %473 = vmatpush1.msra.mxu0 0.0
        %474 = vmatprep.subr.mxu0 0.0
        %475 = vmatpush1.msra.mxu0 0.0
        %476 = vmatprep.subr.mxu0 0.0
        %477 = vmatpush1.msra.mxu0 0.0
        %478 = vmatprep.subr.mxu0 0.0
        %479 = vmatpush1.msra.mxu0 0.0
        %480 = vmatprep.subr.mxu0 0.0
        %481 = vmatpush1.msra.mxu0 0.0
        %482 = vmatprep.subr.mxu0 0.0
        %483 = vmatpush1.msra.mxu0 0.0
        %484 = vmatprep.subr.mxu0 0.0
        %485 = vmatpush1.msra.mxu0 0.0
        %486 = vmatprep.subr.mxu0 0.0
        %487 = vmatpush1.msra.mxu0 0.0
        %488 = vmatprep.subr.mxu0 0.0
        %489 = vmatpush1.msra.mxu0 0.0
        %490 = vmatprep.subr.mxu0 0.0
        %491 = vmatpush1.msra.mxu0 0.0
        %492 = vmatprep.subr.mxu0 0.0
        %493 = vmatpush1.msra.mxu0 0.0
        %494 = vmatprep.subr.mxu0 0.0
        %495 = vmatpush1.msra.mxu0 0.0
        %496 = vmatprep.subr.mxu0 0.0
        %497 = vmatpush1.msra.mxu0 0.0
        %498 = vmatprep.subr.mxu0 0.0
        %499 = vmatpush1.msra.mxu0 0.0
        %500 = vmatprep.subr.mxu0 0.0
        %501 = vmatpush1.msra.mxu0 0.0
        %502 = vmatprep.subr.mxu0 0.0
        %503 = vmatpush1.msra.mxu0 0.0
        %504 = vmatprep.subr.mxu0 0.0
        %505 = vmatpush1.msra.mxu0 0.0
        %506 = vmatprep.subr.mxu0 0.0
        %507 = vmatpush1.msra.mxu0 0.0
        %508 = vmatprep.subr.mxu0 0.0
        %509 = vmatpush1.msra.mxu0 0.0
        %510 = vmatprep.subr.mxu0 0.0
        %511 = vmatpush1.msra.mxu0 0.0
        %512 = vmatprep.subr.mxu0 0.0
        %513 = vmatpush1.msra.mxu0 0.0
        %514 = vmatprep.mubr.f32.mxu0 0.0
        %v515 = vand.u32 %v242, 4294901760
        %v516 = vsub.f32 %v242, %v515
        %517 = vmatmul.mubr.f32.gmra.mrb[0].mxu0 %v516
        %v518 = vpop.f32.mrb[0].mxu0
        %v519 = vadd.f32 %v431, %v518
        %v520 = vpop.f32.mrb[0].mxu0
        %v521 = vadd.f32 %v433, %v520
        %522 = vmatprep.mubr.f32.mxu0 0.0
        %v523 = vand.u32 %v245, 4294901760
        %v524 = vsub.f32 %v245, %v523
        %525 = vmatmul.mubr.f32.gmra.mrb[0].mxu0 %v524
        %v526 = vpop.f32.mrb[0].mxu0
        %v527 = vadd.f32 %v438, %v526
        %v528 = vpop.f32.mrb[0].mxu0
        %v529 = vadd.f32 %v440, %v528
        %530 = vdwg.mxu0
        %v531 = vand.u32 %v230, 4294901760
        %532 = vmatprep.subr.mxu0 %v531
        %v533 = vand.u32 %v236, 4294901760
        %534 = vmatpush1.msra.mxu0 %v533
        %v535 = vand.u32 %v250, 4294901760
        %536 = vmatprep.subr.mxu0 %v535
        %v537 = vand.u32 %v248, 4294901760
        %538 = vmatpush1.msra.mxu0 %v537
        %539 = vmatprep.subr.mxu0 0.0
        %540 = vmatpush1.msra.mxu0 0.0
        %541 = vmatprep.subr.mxu0 0.0
        %542 = vmatpush1.msra.mxu0 0.0
        %543 = vmatprep.subr.mxu0 0.0
        %544 = vmatpush1.msra.mxu0 0.0
        %545 = vmatprep.subr.mxu0 0.0
        %546 = vmatpush1.msra.mxu0 0.0
        %547 = vmatprep.subr.mxu0 0.0
        %548 = vmatpush1.msra.mxu0 0.0
        %549 = vmatprep.subr.mxu0 0.0
        %550 = vmatpush1.msra.mxu0 0.0
        %551 = vmatprep.subr.mxu0 0.0
        %552 = vmatpush1.msra.mxu0 0.0
        %553 = vmatprep.subr.mxu0 0.0
        %554 = vmatpush1.msra.mxu0 0.0
        %555 = vmatprep.subr.mxu0 0.0
        %556 = vmatpush1.msra.mxu0 0.0
        %557 = vmatprep.subr.mxu0 0.0
        %558 = vmatpush1.msra.mxu0 0.0
        %559 = vmatprep.subr.mxu0 0.0
        %560 = vmatpush1.msra.mxu0 0.0
        %561 = vmatprep.subr.mxu0 0.0
        %562 = vmatpush1.msra.mxu0 0.0
        %563 = vmatprep.subr.mxu0 0.0
        %564 = vmatpush1.msra.mxu0 0.0
        %565 = vmatprep.subr.mxu0 0.0
        %566 = vmatpush1.msra.mxu0 0.0
        %567 = vmatprep.subr.mxu0 0.0
        %568 = vmatpush1.msra.mxu0 0.0
        %569 = vmatprep.subr.mxu0 0.0
        %570 = vmatpush1.msra.mxu0 0.0
        %571 = vmatprep.subr.mxu0 0.0
        %572 = vmatpush1.msra.mxu0 0.0
        %573 = vmatprep.subr.mxu0 0.0
        %574 = vmatpush1.msra.mxu0 0.0
        %575 = vmatprep.subr.mxu0 0.0
        %576 = vmatpush1.msra.mxu0 0.0
        %577 = vmatprep.subr.mxu0 0.0
        %578 = vmatpush1.msra.mxu0 0.0
        %579 = vmatprep.subr.mxu0 0.0
        %580 = vmatpush1.msra.mxu0 0.0
        %581 = vmatprep.subr.mxu0 0.0
        %582 = vmatpush1.msra.mxu0 0.0
        %583 = vmatprep.subr.mxu0 0.0
        %584 = vmatpush1.msra.mxu0 0.0
        %585 = vmatprep.subr.mxu0 0.0
        %586 = vmatpush1.msra.mxu0 0.0
        %587 = vmatprep.subr.mxu0 0.0
        %588 = vmatpush1.msra.mxu0 0.0
        %589 = vmatprep.subr.mxu0 0.0
        %590 = vmatpush1.msra.mxu0 0.0
        %591 = vmatprep.subr.mxu0 0.0
        %592 = vmatpush1.msra.mxu0 0.0
        %593 = vmatprep.subr.mxu0 0.0
        %594 = vmatpush1.msra.mxu0 0.0
        %595 = vmatprep.subr.mxu0 0.0
        %596 = vmatpush1.msra.mxu0 0.0
        %597 = vmatprep.subr.mxu0 0.0
        %598 = vmatpush1.msra.mxu0 0.0
        %599 = vmatprep.mubr.f32.mxu0 0.0
        %v600 = vand.u32 %v242, 4294901760
        %v601 = vsub.f32 %v242, %v600
        %v602 = vand.u32 %v601, 4294901760
        %603 = vmatmul.mubr.f32.gmra.mrb[0].mxu0 %v602
        %v604 = vpop.f32.mrb[0].mxu0
        %v605 = vadd.f32 %v519, %v604
        %v606 = vpop.f32.mrb[0].mxu0
        %v607 = vadd.f32 %v521, %v606
        %608 = vmatprep.mubr.f32.mxu0 0.0
        %v609 = vand.u32 %v245, 4294901760
        %v610 = vsub.f32 %v245, %v609
        %v611 = vand.u32 %v610, 4294901760
        %612 = vmatmul.mubr.f32.gmra.mrb[0].mxu0 %v611
        %v613 = vpop.f32.mrb[0].mxu0
        %v614 = vadd.f32 %v527, %v613
        %v615 = vpop.f32.mrb[0].mxu0
        %v616 = vadd.f32 %v529, %v615
        %617 = vdwg.mxu0
        %v618 = vand.u32 %v230, 4294901760
        %v619 = vsub.f32 %v230, %v618
        %v620 = vand.u32 %v619, 4294901760
        %621 = vmatprep.subr.mxu0 %v620
        %v622 = vand.u32 %v236, 4294901760
        %v623 = vsub.f32 %v236, %v622
        %v624 = vand.u32 %v623, 4294901760
        %625 = vmatpush1.msra.mxu0 %v624
        %v626 = vand.u32 %v250, 4294901760
        %v627 = vsub.f32 %v250, %v626
        %v628 = vand.u32 %v627, 4294901760
        %629 = vmatprep.subr.mxu0 %v628
        %v630 = vand.u32 %v248, 4294901760
        %v631 = vsub.f32 %v248, %v630
        %v632 = vand.u32 %v631, 4294901760
        %633 = vmatpush1.msra.mxu0 %v632
        %634 = vmatprep.subr.mxu0 0.0
        %635 = vmatpush1.msra.mxu0 0.0
        %636 = vmatprep.subr.mxu0 0.0
        %637 = vmatpush1.msra.mxu0 0.0
        %638 = vmatprep.subr.mxu0 0.0
        %639 = vmatpush1.msra.mxu0 0.0
        %640 = vmatprep.subr.mxu0 0.0
        %641 = vmatpush1.msra.mxu0 0.0
        %642 = vmatprep.subr.mxu0 0.0
        %643 = vmatpush1.msra.mxu0 0.0
        %644 = vmatprep.subr.mxu0 0.0
        %645 = vmatpush1.msra.mxu0 0.0
        %646 = vmatprep.subr.mxu0 0.0
        %647 = vmatpush1.msra.mxu0 0.0
        %648 = vmatprep.subr.mxu0 0.0
        %649 = vmatpush1.msra.mxu0 0.0
        %650 = vmatprep.subr.mxu0 0.0
        %651 = vmatpush1.msra.mxu0 0.0
        %652 = vmatprep.subr.mxu0 0.0
        %653 = vmatpush1.msra.mxu0 0.0
        %654 = vmatprep.subr.mxu0 0.0
        %655 = vmatpush1.msra.mxu0 0.0
        %656 = vmatprep.subr.mxu0 0.0
        %657 = vmatpush1.msra.mxu0 0.0
        %658 = vmatprep.subr.mxu0 0.0
        %659 = vmatpush1.msra.mxu0 0.0
        %660 = vmatprep.subr.mxu0 0.0
        %661 = vmatpush1.msra.mxu0 0.0
        %662 = vmatprep.subr.mxu0 0.0
        %663 = vmatpush1.msra.mxu0 0.0
        %664 = vmatprep.subr.mxu0 0.0
        %665 = vmatpush1.msra.mxu0 0.0
        %666 = vmatprep.subr.mxu0 0.0
        %667 = vmatpush1.msra.mxu0 0.0
        %668 = vmatprep.subr.mxu0 0.0
        %669 = vmatpush1.msra.mxu0 0.0
        %670 = vmatprep.subr.mxu0 0.0
        %671 = vmatpush1.msra.mxu0 0.0
        %672 = vmatprep.subr.mxu0 0.0
        %673 = vmatpush1.msra.mxu0 0.0
        %674 = vmatprep.subr.mxu0 0.0
        %675 = vmatpush1.msra.mxu0 0.0
        %676 = vmatprep.subr.mxu0 0.0
        %677 = vmatpush1.msra.mxu0 0.0
        %678 = vmatprep.subr.mxu0 0.0
        %679 = vmatpush1.msra.mxu0 0.0
        %680 = vmatprep.subr.mxu0 0.0
        %681 = vmatpush1.msra.mxu0 0.0
        %682 = vmatprep.subr.mxu0 0.0
        %683 = vmatpush1.msra.mxu0 0.0
        %684 = vmatprep.subr.mxu0 0.0
        %685 = vmatpush1.msra.mxu0 0.0
        %686 = vmatprep.subr.mxu0 0.0
        %687 = vmatpush1.msra.mxu0 0.0
        %688 = vmatprep.subr.mxu0 0.0
        %689 = vmatpush1.msra.mxu0 0.0
        %690 = vmatprep.subr.mxu0 0.0
        %691 = vmatpush1.msra.mxu0 0.0
        %692 = vmatprep.subr.mxu0 0.0
        %693 = vmatpush1.msra.mxu0 0.0
        %694 = vmatprep.mubr.f32.mxu0 0.0
        %v695 = vand.u32 %v242, 4294901760
        %696 = vmatmul.mubr.f32.gmra.mrb[0].mxu0 %v695
        %v697 = vpop.f32.mrb[0].mxu0
        %v698 = vadd.f32 %v605, %v697
        %v699 = vpop.f32.mrb[0].mxu0
        %v700 = vadd.f32 %v607, %v699
        %701 = vmatprep.mubr.f32.mxu0 0.0
        %v702 = vand.u32 %v245, 4294901760
        %703 = vmatmul.mubr.f32.gmra.mrb[0].mxu0 %v702
        %v704 = vpop.f32.mrb[0].mxu0
        %v705 = vadd.f32 %v614, %v704
        %v706 = vpop.f32.mrb[0].mxu0
        %v707 = vadd.f32 %v616, %v706
        %708 = vdwg.mxu0
        %v709 = vand.u32 %v230, 4294901760
        %710 = vmatprep.subr.mxu0 %v709
        %v711 = vand.u32 %v236, 4294901760
        %712 = vmatpush1.msra.mxu0 %v711
        %v713 = vand.u32 %v250, 4294901760
        %714 = vmatprep.subr.mxu0 %v713
        %v715 = vand.u32 %v248, 4294901760
        %716 = vmatpush1.msra.mxu0 %v715
        %717 = vmatprep.subr.mxu0 0.0
        %718 = vmatpush1.msra.mxu0 0.0
        %719 = vmatprep.subr.mxu0 0.0
        %720 = vmatpush1.msra.mxu0 0.0
        %721 = vmatprep.subr.mxu0 0.0
        %722 = vmatpush1.msra.mxu0 0.0
        %723 = vmatprep.subr.mxu0 0.0
        %724 = vmatpush1.msra.mxu0 0.0
        %725 = vmatprep.subr.mxu0 0.0
        %726 = vmatpush1.msra.mxu0 0.0
        %727 = vmatprep.subr.mxu0 0.0
        %728 = vmatpush1.msra.mxu0 0.0
        %729 = vmatprep.subr.mxu0 0.0
        %730 = vmatpush1.msra.mxu0 0.0
        %731 = vmatprep.subr.mxu0 0.0
        %732 = vmatpush1.msra.mxu0 0.0
        %733 = vmatprep.subr.mxu0 0.0
        %734 = vmatpush1.msra.mxu0 0.0
        %735 = vmatprep.subr.mxu0 0.0
        %736 = vmatpush1.msra.mxu0 0.0
        %737 = vmatprep.subr.mxu0 0.0
        %738 = vmatpush1.msra.mxu0 0.0
        %739 = vmatprep.subr.mxu0 0.0
        %740 = vmatpush1.msra.mxu0 0.0
        %741 = vmatprep.subr.mxu0 0.0
        %742 = vmatpush1.msra.mxu0 0.0
        %743 = vmatprep.subr.mxu0 0.0
        %744 = vmatpush1.msra.mxu0 0.0
        %745 = vmatprep.subr.mxu0 0.0
        %746 = vmatpush1.msra.mxu0 0.0
        %747 = vmatprep.subr.mxu0 0.0
        %748 = vmatpush1.msra.mxu0 0.0
        %749 = vmatprep.subr.mxu0 0.0
        %750 = vmatpush1.msra.mxu0 0.0
        %751 = vmatprep.subr.mxu0 0.0
        %752 = vmatpush1.msra.mxu0 0.0
        %753 = vmatprep.subr.mxu0 0.0
        %754 = vmatpush1.msra.mxu0 0.0
        %755 = vmatprep.subr.mxu0 0.0
        %756 = vmatpush1.msra.mxu0 0.0
        %757 = vmatprep.subr.mxu0 0.0
        %758 = vmatpush1.msra.mxu0 0.0
        %759 = vmatprep.subr.mxu0 0.0
        %760 = vmatpush1.msra.mxu0 0.0
        %761 = vmatprep.subr.mxu0 0.0
        %762 = vmatpush1.msra.mxu0 0.0
        %763 = vmatprep.subr.mxu0 0.0
        %764 = vmatpush1.msra.mxu0 0.0
        %765 = vmatprep.subr.mxu0 0.0
        %766 = vmatpush1.msra.mxu0 0.0
        %767 = vmatprep.subr.mxu0 0.0
        %768 = vmatpush1.msra.mxu0 0.0
        %769 = vmatprep.subr.mxu0 0.0
        %770 = vmatpush1.msra.mxu0 0.0
        %771 = vmatprep.subr.mxu0 0.0
        %772 = vmatpush1.msra.mxu0 0.0
        %773 = vmatprep.subr.mxu0 0.0
        %774 = vmatpush1.msra.mxu0 0.0
        %775 = vmatprep.subr.mxu0 0.0
        %776 = vmatpush1.msra.mxu0 0.0
        %777 = vmatprep.mubr.f32.mxu0 0.0
        %v778 = vand.u32 %v242, 4294901760
        %779 = vmatmul.mubr.f32.gmra.mrb[0].mxu0 %v778
        %v780 = vpop.f32.mrb[0].mxu0
        %v781 = vadd.f32 %v698, %v780
        %v782 = vpop.f32.mrb[0].mxu0
        %v783 = vadd.f32 %v700, %v782
        %784 = vmatprep.mubr.f32.mxu0 0.0
        %v785 = vand.u32 %v245, 4294901760
        %786 = vmatmul.mubr.f32.gmra.mrb[0].mxu0 %v785
        %v787 = vpop.f32.mrb[0].mxu0
        %v788 = vadd.f32 %v705, %v787
        %v789 = vpop.f32.mrb[0].mxu0
        %v790 = vadd.f32 %v707, %v789
        %791 = vdwg.mxu0
        %v793 = vsel %vm240, %v218, 0
        %v796 = vsel %vm240, %v219, 0
        %v798 = vsel %vm247, %v216, 0
        %v800 = vsel %vm247, %v217, 0
        %v802 = vand.u32 %v215, 4294901760
        %803 = vmatprep.subr.mxu0 %v802
        %v804 = vand.u32 %v214, 4294901760
        %805 = vmatpush1.msra.mxu0 %v804
        %v806 = vand.u32 %v800, 4294901760
        %807 = vmatprep.subr.mxu0 %v806
        %v808 = vand.u32 %v798, 4294901760
        %809 = vmatpush1.msra.mxu0 %v808
        %810 = vmatprep.subr.mxu0 0.0
        %811 = vmatpush1.msra.mxu0 0.0
        %812 = vmatprep.subr.mxu0 0.0
        %813 = vmatpush1.msra.mxu0 0.0
        %814 = vmatprep.subr.mxu0 0.0
        %815 = vmatpush1.msra.mxu0 0.0
        %816 = vmatprep.subr.mxu0 0.0
        %817 = vmatpush1.msra.mxu0 0.0
        %818 = vmatprep.subr.mxu0 0.0
        %819 = vmatpush1.msra.mxu0 0.0
        %820 = vmatprep.subr.mxu0 0.0
        %821 = vmatpush1.msra.mxu0 0.0
        %822 = vmatprep.subr.mxu0 0.0
        %823 = vmatpush1.msra.mxu0 0.0
        %824 = vmatprep.subr.mxu0 0.0
        %825 = vmatpush1.msra.mxu0 0.0
        %826 = vmatprep.subr.mxu0 0.0
        %827 = vmatpush1.msra.mxu0 0.0
        %828 = vmatprep.subr.mxu0 0.0
        %829 = vmatpush1.msra.mxu0 0.0
        %830 = vmatprep.subr.mxu0 0.0
        %831 = vmatpush1.msra.mxu0 0.0
        %832 = vmatprep.subr.mxu0 0.0
        %833 = vmatpush1.msra.mxu0 0.0
        %834 = vmatprep.subr.mxu0 0.0
        %835 = vmatpush1.msra.mxu0 0.0
        %836 = vmatprep.subr.mxu0 0.0
        %837 = vmatpush1.msra.mxu0 0.0
        %838 = vmatprep.subr.mxu0 0.0
        %839 = vmatpush1.msra.mxu0 0.0
        %840 = vmatprep.subr.mxu0 0.0
        %841 = vmatpush1.msra.mxu0 0.0
        %842 = vmatprep.subr.mxu0 0.0
        %843 = vmatpush1.msra.mxu0 0.0
        %844 = vmatprep.subr.mxu0 0.0
        %845 = vmatpush1.msra.mxu0 0.0
        %846 = vmatprep.subr.mxu0 0.0
        %847 = vmatpush1.msra.mxu0 0.0
        %848 = vmatprep.subr.mxu0 0.0
        %849 = vmatpush1.msra.mxu0 0.0
        %850 = vmatprep.subr.mxu0 0.0
        %851 = vmatpush1.msra.mxu0 0.0
        %852 = vmatprep.subr.mxu0 0.0
        %853 = vmatpush1.msra.mxu0 0.0
        %854 = vmatprep.subr.mxu0 0.0
        %855 = vmatpush1.msra.mxu0 0.0
        %856 = vmatprep.subr.mxu0 0.0
        %857 = vmatpush1.msra.mxu0 0.0
        %858 = vmatprep.subr.mxu0 0.0
        %859 = vmatpush1.msra.mxu0 0.0
        %860 = vmatprep.subr.mxu0 0.0
        %861 = vmatpush1.msra.mxu0 0.0
        %862 = vmatprep.subr.mxu0 0.0
        %863 = vmatpush1.msra.mxu0 0.0
        %864 = vmatprep.subr.mxu0 0.0
        %865 = vmatpush1.msra.mxu0 0.0
        %866 = vmatprep.subr.mxu0 0.0
        %867 = vmatpush1.msra.mxu0 0.0
        %868 = vmatprep.subr.mxu0 0.0
        %869 = vmatpush1.msra.mxu0 0.0
        %870 = vmatprep.mubr.f32.mxu0 0.0
        %v871 = vand.u32 %v793, 4294901760
        %v872 = vsub.f32 %v793, %v871
        %v873 = vand.u32 %v872, 4294901760
        %v874 = vsub.f32 %v872, %v873
        %v875 = vand.u32 %v874, 4294901760
        %876 = vmatmul.mubr.f32.gmra.mrb[0].mxu0 %v875
        %v877 = vpop.f32.mrb[0].mxu0
        %v878 = vadd.f32 %v781, %v877
        %v879 = vpop.f32.mrb[0].mxu0
        %v880 = vadd.f32 %v783, %v879
        %881 = vmatprep.mubr.f32.mxu0 0.0
        %v882 = vand.u32 %v796, 4294901760
        %v883 = vsub.f32 %v796, %v882
        %v884 = vand.u32 %v883, 4294901760
        %v885 = vsub.f32 %v883, %v884
        %v886 = vand.u32 %v885, 4294901760
        %887 = vmatmul.mubr.f32.gmra.mrb[0].mxu0 %v886
        %v888 = vpop.f32.mrb[0].mxu0
        %v889 = vadd.f32 %v788, %v888
        %v890 = vpop.f32.mrb[0].mxu0
        %v891 = vadd.f32 %v790, %v890
        %892 = vdwg.mxu0
        %v893 = vand.u32 %v215, 4294901760
        %v894 = vsub.f32 %v215, %v893
        %v895 = vand.u32 %v894, 4294901760
        %v896 = vsub.f32 %v894, %v895
        %v897 = vand.u32 %v896, 4294901760
        %898 = vmatprep.subr.mxu0 %v897
        %v899 = vand.u32 %v214, 4294901760
        %v900 = vsub.f32 %v214, %v899
        %v901 = vand.u32 %v900, 4294901760
        %v902 = vsub.f32 %v900, %v901
        %v903 = vand.u32 %v902, 4294901760
        %904 = vmatpush1.msra.mxu0 %v903
        %v905 = vand.u32 %v800, 4294901760
        %v906 = vsub.f32 %v800, %v905
        %v907 = vand.u32 %v906, 4294901760
        %v908 = vsub.f32 %v906, %v907
        %v909 = vand.u32 %v908, 4294901760
        %910 = vmatprep.subr.mxu0 %v909
        %v911 = vand.u32 %v798, 4294901760
        %v912 = vsub.f32 %v798, %v911
        %v913 = vand.u32 %v912, 4294901760
        %v914 = vsub.f32 %v912, %v913
        %v915 = vand.u32 %v914, 4294901760
        %916 = vmatpush1.msra.mxu0 %v915
        %917 = vmatprep.subr.mxu0 0.0
        %918 = vmatpush1.msra.mxu0 0.0
        %919 = vmatprep.subr.mxu0 0.0
        %920 = vmatpush1.msra.mxu0 0.0
        %921 = vmatprep.subr.mxu0 0.0
        %922 = vmatpush1.msra.mxu0 0.0
        %923 = vmatprep.subr.mxu0 0.0
        %924 = vmatpush1.msra.mxu0 0.0
        %925 = vmatprep.subr.mxu0 0.0
        %926 = vmatpush1.msra.mxu0 0.0
        %927 = vmatprep.subr.mxu0 0.0
        %928 = vmatpush1.msra.mxu0 0.0
        %929 = vmatprep.subr.mxu0 0.0
        %930 = vmatpush1.msra.mxu0 0.0
        %931 = vmatprep.subr.mxu0 0.0
        %932 = vmatpush1.msra.mxu0 0.0
        %933 = vmatprep.subr.mxu0 0.0
        %934 = vmatpush1.msra.mxu0 0.0
        %935 = vmatprep.subr.mxu0 0.0
        %936 = vmatpush1.msra.mxu0 0.0
        %937 = vmatprep.subr.mxu0 0.0
        %938 = vmatpush1.msra.mxu0 0.0
        %939 = vmatprep.subr.mxu0 0.0
        %940 = vmatpush1.msra.mxu0 0.0
        %941 = vmatprep.subr.mxu0 0.0
        %942 = vmatpush1.msra.mxu0 0.0
        %943 = vmatprep.subr.mxu0 0.0
        %944 = vmatpush1.msra.mxu0 0.0
        %945 = vmatprep.subr.mxu0 0.0
        %946 = vmatpush1.msra.mxu0 0.0
        %947 = vmatprep.subr.mxu0 0.0
        %948 = vmatpush1.msra.mxu0 0.0
        %949 = vmatprep.subr.mxu0 0.0
        %950 = vmatpush1.msra.mxu0 0.0
        %951 = vmatprep.subr.mxu0 0.0
        %952 = vmatpush1.msra.mxu0 0.0
        %953 = vmatprep.subr.mxu0 0.0
        %954 = vmatpush1.msra.mxu0 0.0
        %955 = vmatprep.subr.mxu0 0.0
        %956 = vmatpush1.msra.mxu0 0.0
        %957 = vmatprep.subr.mxu0 0.0
        %958 = vmatpush1.msra.mxu0 0.0
        %959 = vmatprep.subr.mxu0 0.0
        %960 = vmatpush1.msra.mxu0 0.0
        %961 = vmatprep.subr.mxu0 0.0
        %962 = vmatpush1.msra.mxu0 0.0
        %963 = vmatprep.subr.mxu0 0.0
        %964 = vmatpush1.msra.mxu0 0.0
        %965 = vmatprep.subr.mxu0 0.0
        %966 = vmatpush1.msra.mxu0 0.0
        %967 = vmatprep.subr.mxu0 0.0
        %968 = vmatpush1.msra.mxu0 0.0
        %969 = vmatprep.subr.mxu0 0.0
        %970 = vmatpush1.msra.mxu0 0.0
        %971 = vmatprep.subr.mxu0 0.0
        %972 = vmatpush1.msra.mxu0 0.0
        %973 = vmatprep.subr.mxu0 0.0
        %974 = vmatpush1.msra.mxu0 0.0
        %975 = vmatprep.subr.mxu0 0.0
        %976 = vmatpush1.msra.mxu0 0.0
        %977 = vmatprep.mubr.f32.mxu0 0.0
        %v978 = vand.u32 %v793, 4294901760
        %979 = vmatmul.mubr.f32.gmra.mrb[0].mxu0 %v978
        %v980 = vpop.f32.mrb[0].mxu0
        %v981 = vadd.f32 %v878, %v980
        %v982 = vpop.f32.mrb[0].mxu0
        %v983 = vadd.f32 %v880, %v982
        %984 = vmatprep.mubr.f32.mxu0 0.0
        %v985 = vand.u32 %v796, 4294901760
        %986 = vmatmul.mubr.f32.gmra.mrb[0].mxu0 %v985
        %v987 = vpop.f32.mrb[0].mxu0
        %v988 = vadd.f32 %v889, %v987
        %v989 = vpop.f32.mrb[0].mxu0
        %v990 = vadd.f32 %v891, %v989
        %991 = vdwg.mxu0
        %v992 = vand.u32 %v215, 4294901760
        %v993 = vsub.f32 %v215, %v992
        %994 = vmatprep.subr.mxu0 %v993
        %v995 = vand.u32 %v214, 4294901760
        %v996 = vsub.f32 %v214, %v995
        %997 = vmatpush1.msra.mxu0 %v996
        %v998 = vand.u32 %v800, 4294901760
        %v999 = vsub.f32 %v800, %v998
        %1000 = vmatprep.subr.mxu0 %v999
        %v1001 = vand.u32 %v798, 4294901760
        %v1002 = vsub.f32 %v798, %v1001
        %1003 = vmatpush1.msra.mxu0 %v1002
        %1004 = vmatprep.subr.mxu0 0.0
        %1005 = vmatpush1.msra.mxu0 0.0
        %1006 = vmatprep.subr.mxu0 0.0
        %1007 = vmatpush1.msra.mxu0 0.0
        %1008 = vmatprep.subr.mxu0 0.0
        %1009 = vmatpush1.msra.mxu0 0.0
        %1010 = vmatprep.subr.mxu0 0.0
        %1011 = vmatpush1.msra.mxu0 0.0
        %1012 = vmatprep.subr.mxu0 0.0
        %1013 = vmatpush1.msra.mxu0 0.0
        %1014 = vmatprep.subr.mxu0 0.0
        %1015 = vmatpush1.msra.mxu0 0.0
        %1016 = vmatprep.subr.mxu0 0.0
        %1017 = vmatpush1.msra.mxu0 0.0
        %1018 = vmatprep.subr.mxu0 0.0
        %1019 = vmatpush1.msra.mxu0 0.0
        %1020 = vmatprep.subr.mxu0 0.0
        %1021 = vmatpush1.msra.mxu0 0.0
        %1022 = vmatprep.subr.mxu0 0.0
        %1023 = vmatpush1.msra.mxu0 0.0
        %1024 = vmatprep.subr.mxu0 0.0
        %1025 = vmatpush1.msra.mxu0 0.0
        %1026 = vmatprep.subr.mxu0 0.0
        %1027 = vmatpush1.msra.mxu0 0.0
        %1028 = vmatprep.subr.mxu0 0.0
        %1029 = vmatpush1.msra.mxu0 0.0
        %1030 = vmatprep.subr.mxu0 0.0
        %1031 = vmatpush1.msra.mxu0 0.0
        %1032 = vmatprep.subr.mxu0 0.0
        %1033 = vmatpush1.msra.mxu0 0.0
        %1034 = vmatprep.subr.mxu0 0.0
        %1035 = vmatpush1.msra.mxu0 0.0
        %1036 = vmatprep.subr.mxu0 0.0
        %1037 = vmatpush1.msra.mxu0 0.0
        %1038 = vmatprep.subr.mxu0 0.0
        %1039 = vmatpush1.msra.mxu0 0.0
        %1040 = vmatprep.subr.mxu0 0.0
        %1041 = vmatpush1.msra.mxu0 0.0
        %1042 = vmatprep.subr.mxu0 0.0
        %1043 = vmatpush1.msra.mxu0 0.0
        %1044 = vmatprep.subr.mxu0 0.0
        %1045 = vmatpush1.msra.mxu0 0.0
        %1046 = vmatprep.subr.mxu0 0.0
        %1047 = vmatpush1.msra.mxu0 0.0
        %1048 = vmatprep.subr.mxu0 0.0
        %1049 = vmatpush1.msra.mxu0 0.0
        %1050 = vmatprep.subr.mxu0 0.0
        %1051 = vmatpush1.msra.mxu0 0.0
        %1052 = vmatprep.subr.mxu0 0.0
        %1053 = vmatpush1.msra.mxu0 0.0
        %1054 = vmatprep.subr.mxu0 0.0
        %1055 = vmatpush1.msra.mxu0 0.0
        %1056 = vmatprep.subr.mxu0 0.0
        %1057 = vmatpush1.msra.mxu0 0.0
        %1058 = vmatprep.subr.mxu0 0.0
        %1059 = vmatpush1.msra.mxu0 0.0
        %1060 = vmatprep.subr.mxu0 0.0
        %1061 = vmatpush1.msra.mxu0 0.0
        %1062 = vmatprep.subr.mxu0 0.0
        %1063 = vmatpush1.msra.mxu0 0.0
        %1064 = vmatprep.mubr.f32.mxu0 0.0
        %v1065 = vand.u32 %v793, 4294901760
        %v1066 = vsub.f32 %v793, %v1065
        %1067 = vmatmul.mubr.f32.gmra.mrb[0].mxu0 %v1066
        %v1068 = vpop.f32.mrb[0].mxu0
        %v1069 = vadd.f32 %v981, %v1068
        %v1070 = vpop.f32.mrb[0].mxu0
        %v1071 = vadd.f32 %v983, %v1070
        %1072 = vmatprep.mubr.f32.mxu0 0.0
        %v1073 = vand.u32 %v796, 4294901760
        %v1074 = vsub.f32 %v796, %v1073
        %1075 = vmatmul.mubr.f32.gmra.mrb[0].mxu0 %v1074
        %v1076 = vpop.f32.mrb[0].mxu0
        %v1077 = vadd.f32 %v988, %v1076
        %v1078 = vpop.f32.mrb[0].mxu0
        %v1079 = vadd.f32 %v990, %v1078
        %1080 = vdwg.mxu0
        %v1081 = vand.u32 %v215, 4294901760
        %1082 = vmatprep.subr.mxu0 %v1081
        %v1083 = vand.u32 %v214, 4294901760
        %1084 = vmatpush1.msra.mxu0 %v1083
        %v1085 = vand.u32 %v800, 4294901760
        %1086 = vmatprep.subr.mxu0 %v1085
        %v1087 = vand.u32 %v798, 4294901760
        %1088 = vmatpush1.msra.mxu0 %v1087
        %1089 = vmatprep.subr.mxu0 0.0
        %1090 = vmatpush1.msra.mxu0 0.0
        %1091 = vmatprep.subr.mxu0 0.0
        %1092 = vmatpush1.msra.mxu0 0.0
        %1093 = vmatprep.subr.mxu0 0.0
        %1094 = vmatpush1.msra.mxu0 0.0
        %1095 = vmatprep.subr.mxu0 0.0
        %1096 = vmatpush1.msra.mxu0 0.0
        %1097 = vmatprep.subr.mxu0 0.0
        %1098 = vmatpush1.msra.mxu0 0.0
        %1099 = vmatprep.subr.mxu0 0.0
        %1100 = vmatpush1.msra.mxu0 0.0
        %1101 = vmatprep.subr.mxu0 0.0
        %1102 = vmatpush1.msra.mxu0 0.0
        %1103 = vmatprep.subr.mxu0 0.0
        %1104 = vmatpush1.msra.mxu0 0.0
        %1105 = vmatprep.subr.mxu0 0.0
        %1106 = vmatpush1.msra.mxu0 0.0
        %1107 = vmatprep.subr.mxu0 0.0
        %1108 = vmatpush1.msra.mxu0 0.0
        %1109 = vmatprep.subr.mxu0 0.0
        %1110 = vmatpush1.msra.mxu0 0.0
        %1111 = vmatprep.subr.mxu0 0.0
        %1112 = vmatpush1.msra.mxu0 0.0
        %1113 = vmatprep.subr.mxu0 0.0
        %1114 = vmatpush1.msra.mxu0 0.0
        %1115 = vmatprep.subr.mxu0 0.0
        %1116 = vmatpush1.msra.mxu0 0.0
        %1117 = vmatprep.subr.mxu0 0.0
        %1118 = vmatpush1.msra.mxu0 0.0
        %1119 = vmatprep.subr.mxu0 0.0
        %1120 = vmatpush1.msra.mxu0 0.0
        %1121 = vmatprep.subr.mxu0 0.0
        %1122 = vmatpush1.msra.mxu0 0.0
        %1123 = vmatprep.subr.mxu0 0.0
        %1124 = vmatpush1.msra.mxu0 0.0
        %1125 = vmatprep.subr.mxu0 0.0
        %1126 = vmatpush1.msra.mxu0 0.0
        %1127 = vmatprep.subr.mxu0 0.0
        %1128 = vmatpush1.msra.mxu0 0.0
        %1129 = vmatprep.subr.mxu0 0.0
        %1130 = vmatpush1.msra.mxu0 0.0
        %1131 = vmatprep.subr.mxu0 0.0
        %1132 = vmatpush1.msra.mxu0 0.0
        %1133 = vmatprep.subr.mxu0 0.0
        %1134 = vmatpush1.msra.mxu0 0.0
        %1135 = vmatprep.subr.mxu0 0.0
        %1136 = vmatpush1.msra.mxu0 0.0
        %1137 = vmatprep.subr.mxu0 0.0
        %1138 = vmatpush1.msra.mxu0 0.0
        %1139 = vmatprep.subr.mxu0 0.0
        %1140 = vmatpush1.msra.mxu0 0.0
        %1141 = vmatprep.subr.mxu0 0.0
        %1142 = vmatpush1.msra.mxu0 0.0
        %1143 = vmatprep.subr.mxu0 0.0
        %1144 = vmatpush1.msra.mxu0 0.0
        %1145 = vmatprep.subr.mxu0 0.0
        %1146 = vmatpush1.msra.mxu0 0.0
        %1147 = vmatprep.subr.mxu0 0.0
        %1148 = vmatpush1.msra.mxu0 0.0
        %1149 = vmatprep.mubr.f32.mxu0 0.0
        %v1150 = vand.u32 %v793, 4294901760
        %v1151 = vsub.f32 %v793, %v1150
        %v1152 = vand.u32 %v1151, 4294901760
        %1153 = vmatmul.mubr.f32.gmra.mrb[0].mxu0 %v1152
        %v1154 = vpop.f32.mrb[0].mxu0
        %v1155 = vadd.f32 %v1069, %v1154
        %v1156 = vpop.f32.mrb[0].mxu0
        %v1157 = vadd.f32 %v1071, %v1156
        %1158 = vmatprep.mubr.f32.mxu0 0.0
        %v1159 = vand.u32 %v796, 4294901760
        %v1160 = vsub.f32 %v796, %v1159
        %v1161 = vand.u32 %v1160, 4294901760
        %1162 = vmatmul.mubr.f32.gmra.mrb[0].mxu0 %v1161
        %v1163 = vpop.f32.mrb[0].mxu0
        %v1164 = vadd.f32 %v1077, %v1163
        %v1165 = vpop.f32.mrb[0].mxu0
        %v1166 = vadd.f32 %v1079, %v1165
        %1167 = vdwg.mxu0
        %v1168 = vand.u32 %v215, 4294901760
        %v1169 = vsub.f32 %v215, %v1168
        %v1170 = vand.u32 %v1169, 4294901760
        %1171 = vmatprep.subr.mxu0 %v1170
        %v1172 = vand.u32 %v214, 4294901760
        %v1173 = vsub.f32 %v214, %v1172
        %v1174 = vand.u32 %v1173, 4294901760
        %1175 = vmatpush1.msra.mxu0 %v1174
        %v1176 = vand.u32 %v800, 4294901760
        %v1177 = vsub.f32 %v800, %v1176
        %v1178 = vand.u32 %v1177, 4294901760
        %1179 = vmatprep.subr.mxu0 %v1178
        %v1180 = vand.u32 %v798, 4294901760
        %v1181 = vsub.f32 %v798, %v1180
        %v1182 = vand.u32 %v1181, 4294901760
        %1183 = vmatpush1.msra.mxu0 %v1182
        %1184 = vmatprep.subr.mxu0 0.0
        %1185 = vmatpush1.msra.mxu0 0.0
        %1186 = vmatprep.subr.mxu0 0.0
        %1187 = vmatpush1.msra.mxu0 0.0
        %1188 = vmatprep.subr.mxu0 0.0
        %1189 = vmatpush1.msra.mxu0 0.0
        %1190 = vmatprep.subr.mxu0 0.0
        %1191 = vmatpush1.msra.mxu0 0.0
        %1192 = vmatprep.subr.mxu0 0.0
        %1193 = vmatpush1.msra.mxu0 0.0
        %1194 = vmatprep.subr.mxu0 0.0
        %1195 = vmatpush1.msra.mxu0 0.0
        %1196 = vmatprep.subr.mxu0 0.0
        %1197 = vmatpush1.msra.mxu0 0.0
        %1198 = vmatprep.subr.mxu0 0.0
        %1199 = vmatpush1.msra.mxu0 0.0
        %1200 = vmatprep.subr.mxu0 0.0
        %1201 = vmatpush1.msra.mxu0 0.0
        %1202 = vmatprep.subr.mxu0 0.0
        %1203 = vmatpush1.msra.mxu0 0.0
        %1204 = vmatprep.subr.mxu0 0.0
        %1205 = vmatpush1.msra.mxu0 0.0
        %1206 = vmatprep.subr.mxu0 0.0
        %1207 = vmatpush1.msra.mxu0 0.0
        %1208 = vmatprep.subr.mxu0 0.0
        %1209 = vmatpush1.msra.mxu0 0.0
        %1210 = vmatprep.subr.mxu0 0.0
        %1211 = vmatpush1.msra.mxu0 0.0
        %1212 = vmatprep.subr.mxu0 0.0
        %1213 = vmatpush1.msra.mxu0 0.0
        %1214 = vmatprep.subr.mxu0 0.0
        %1215 = vmatpush1.msra.mxu0 0.0
        %1216 = vmatprep.subr.mxu0 0.0
        %1217 = vmatpush1.msra.mxu0 0.0
        %1218 = vmatprep.subr.mxu0 0.0
        %1219 = vmatpush1.msra.mxu0 0.0
        %1220 = vmatprep.subr.mxu0 0.0
        %1221 = vmatpush1.msra.mxu0 0.0
        %1222 = vmatprep.subr.mxu0 0.0
        %1223 = vmatpush1.msra.mxu0 0.0
        %1224 = vmatprep.subr.mxu0 0.0
        %1225 = vmatpush1.msra.mxu0 0.0
        %1226 = vmatprep.subr.mxu0 0.0
        %1227 = vmatpush1.msra.mxu0 0.0
        %1228 = vmatprep.subr.mxu0 0.0
        %1229 = vmatpush1.msra.mxu0 0.0
        %1230 = vmatprep.subr.mxu0 0.0
        %1231 = vmatpush1.msra.mxu0 0.0
        %1232 = vmatprep.subr.mxu0 0.0
        %1233 = vmatpush1.msra.mxu0 0.0
        %1234 = vmatprep.subr.mxu0 0.0
        %1235 = vmatpush1.msra.mxu0 0.0
        %1236 = vmatprep.subr.mxu0 0.0
        %1237 = vmatpush1.msra.mxu0 0.0
        %1238 = vmatprep.subr.mxu0 0.0
        %1239 = vmatpush1.msra.mxu0 0.0
        %1240 = vmatprep.subr.mxu0 0.0
        %1241 = vmatpush1.msra.mxu0 0.0
        %1242 = vmatprep.subr.mxu0 0.0
        %1243 = vmatpush1.msra.mxu0 0.0
        %1244 = vmatprep.mubr.f32.mxu0 0.0
        %v1245 = vand.u32 %v793, 4294901760
        %1246 = vmatmul.mubr.f32.gmra.mrb[0].mxu0 %v1245
        %v1247 = vpop.f32.mrb[0].mxu0
        %v1248 = vadd.f32 %v1155, %v1247
        %v1249 = vpop.f32.mrb[0].mxu0
        %v1250 = vadd.f32 %v1157, %v1249
        %1251 = vmatprep.mubr.f32.mxu0 0.0
        %v1252 = vand.u32 %v796, 4294901760
        %1253 = vmatmul.mubr.f32.gmra.mrb[0].mxu0 %v1252
        %v1254 = vpop.f32.mrb[0].mxu0
        %v1255 = vadd.f32 %v1164, %v1254
        %v1256 = vpop.f32.mrb[0].mxu0
        %v1257 = vadd.f32 %v1166, %v1256
        %1258 = vdwg.mxu0
        %v1259 = vand.u32 %v215, 4294901760
        %1260 = vmatprep.subr.mxu0 %v1259
        %v1261 = vand.u32 %v214, 4294901760
        %1262 = vmatpush1.msra.mxu0 %v1261
        %v1263 = vand.u32 %v800, 4294901760
        %1264 = vmatprep.subr.mxu0 %v1263
        %v1265 = vand.u32 %v798, 4294901760
        %1266 = vmatpush1.msra.mxu0 %v1265
        %1267 = vmatprep.subr.mxu0 0.0
        %1268 = vmatpush1.msra.mxu0 0.0
        %1269 = vmatprep.subr.mxu0 0.0
        %1270 = vmatpush1.msra.mxu0 0.0
        %1271 = vmatprep.subr.mxu0 0.0
        %1272 = vmatpush1.msra.mxu0 0.0
        %1273 = vmatprep.subr.mxu0 0.0
        %1274 = vmatpush1.msra.mxu0 0.0
        %1275 = vmatprep.subr.mxu0 0.0
        %1276 = vmatpush1.msra.mxu0 0.0
        %1277 = vmatprep.subr.mxu0 0.0
        %1278 = vmatpush1.msra.mxu0 0.0
        %1279 = vmatprep.subr.mxu0 0.0
        %1280 = vmatpush1.msra.mxu0 0.0
        %1281 = vmatprep.subr.mxu0 0.0
        %1282 = vmatpush1.msra.mxu0 0.0
        %1283 = vmatprep.subr.mxu0 0.0
        %1284 = vmatpush1.msra.mxu0 0.0
        %1285 = vmatprep.subr.mxu0 0.0
        %1286 = vmatpush1.msra.mxu0 0.0
        %1287 = vmatprep.subr.mxu0 0.0
        %1288 = vmatpush1.msra.mxu0 0.0
        %1289 = vmatprep.subr.mxu0 0.0
        %1290 = vmatpush1.msra.mxu0 0.0
        %1291 = vmatprep.subr.mxu0 0.0
        %1292 = vmatpush1.msra.mxu0 0.0
        %1293 = vmatprep.subr.mxu0 0.0
        %1294 = vmatpush1.msra.mxu0 0.0
        %1295 = vmatprep.subr.mxu0 0.0
        %1296 = vmatpush1.msra.mxu0 0.0
        %1297 = vmatprep.subr.mxu0 0.0
        %1298 = vmatpush1.msra.mxu0 0.0
        %1299 = vmatprep.subr.mxu0 0.0
        %1300 = vmatpush1.msra.mxu0 0.0
        %1301 = vmatprep.subr.mxu0 0.0
        %1302 = vmatpush1.msra.mxu0 0.0
        %1303 = vmatprep.subr.mxu0 0.0
        %1304 = vmatpush1.msra.mxu0 0.0
        %1305 = vmatprep.subr.mxu0 0.0
        %1306 = vmatpush1.msra.mxu0 0.0
        %1307 = vmatprep.subr.mxu0 0.0
        %1308 = vmatpush1.msra.mxu0 0.0
        %1309 = vmatprep.subr.mxu0 0.0
        %1310 = vmatpush1.msra.mxu0 0.0
        %1311 = vmatprep.subr.mxu0 0.0
        %1312 = vmatpush1.msra.mxu0 0.0
        %1313 = vmatprep.subr.mxu0 0.0
        %1314 = vmatpush1.msra.mxu0 0.0
        %1315 = vmatprep.subr.mxu0 0.0
        %1316 = vmatpush1.msra.mxu0 0.0
        %1317 = vmatprep.subr.mxu0 0.0
        %1318 = vmatpush1.msra.mxu0 0.0
        %1319 = vmatprep.subr.mxu0 0.0
        %1320 = vmatpush1.msra.mxu0 0.0
        %1321 = vmatprep.subr.mxu0 0.0
        %1322 = vmatpush1.msra.mxu0 0.0
        %1323 = vmatprep.subr.mxu0 0.0
        %1324 = vmatpush1.msra.mxu0 0.0
        %1325 = vmatprep.subr.mxu0 0.0
        %1326 = vmatpush1.msra.mxu0 0.0
        %1327 = vmatprep.mubr.f32.mxu0 0.0
        %v1328 = vand.u32 %v793, 4294901760
        %1329 = vmatmul.mubr.f32.gmra.mrb[0].mxu0 %v1328
        %v1330 = vpop.f32.mrb[0].mxu0
        %v1331 = vadd.f32 %v1248, %v1330
        %v1332 = vpop.f32.mrb[0].mxu0
        %v1333 = vadd.f32 %v1250, %v1332
        %1334 = vmatprep.mubr.f32.mxu0 0.0
        %v1335 = vand.u32 %v796, 4294901760
        %1336 = vmatmul.mubr.f32.gmra.mrb[0].mxu0 %v1335
        %v1337 = vpop.f32.mrb[0].mxu0
        %v1338 = vadd.f32 %v1255, %v1337
        %v1339 = vpop.f32.mrb[0].mxu0
        %v1340 = vadd.f32 %v1257, %v1339
        %1341 = vdwg.mxu0
        %s1342 = scalar_lea.vmem [#allocation3], 32
        %v1343 = vld [vmem:[%s1342] sm:$0xff]
        %v1344 = vld [vmem:[%s1342 + $0x8] sm:$0x3]
        %1345 = vrot.lane.b32.xlu0 %v214, 126
        %v1346 = vpop.permute.xlu0 %1345
        %1347 = vrot.lane.b32.xlu0 %v215, 126
        %v1348 = vpop.permute.xlu0 %1347
        %1349 = vrot.lane.b32.xlu0 %v216, 126
        %v1350 = vpop.permute.xlu0 %1349
        %1351 = vrot.lane.b32.xlu0 %v217, 126
        %v1352 = vpop.permute.xlu0 %1351
        %vm1353 = vcmask 1031168
        %v1354 = vsel %vm1353, %v1346, %v1348
        %v1355 = vsel %vm1353, %v1350, %v1352
        %v1359 = vsel %vm240, %v1343, 0
        %v1362 = vsel %vm240, %v1344, 0
        %v1364 = vsel %vm247, %v1355, 0
        %v1366 = vsel %vm247, %v1352, 0
        %v1368 = vand.u32 %v1348, 4294901760
        %1369 = vmatprep.subr.mxu0 %v1368
        %v1370 = vand.u32 %v1354, 4294901760
        %1371 = vmatpush1.msra.mxu0 %v1370
        %v1372 = vand.u32 %v1366, 4294901760
        %1373 = vmatprep.subr.mxu0 %v1372
        %v1374 = vand.u32 %v1364, 4294901760
        %1375 = vmatpush1.msra.mxu0 %v1374
        %1376 = vmatprep.subr.mxu0 0.0
        %1377 = vmatpush1.msra.mxu0 0.0
        %1378 = vmatprep.subr.mxu0 0.0
        %1379 = vmatpush1.msra.mxu0 0.0
        %1380 = vmatprep.subr.mxu0 0.0
        %1381 = vmatpush1.msra.mxu0 0.0
        %1382 = vmatprep.subr.mxu0 0.0
        %1383 = vmatpush1.msra.mxu0 0.0
        %1384 = vmatprep.subr.mxu0 0.0
        %1385 = vmatpush1.msra.mxu0 0.0
        %1386 = vmatprep.subr.mxu0 0.0
        %1387 = vmatpush1.msra.mxu0 0.0
        %1388 = vmatprep.subr.mxu0 0.0
        %1389 = vmatpush1.msra.mxu0 0.0
        %1390 = vmatprep.subr.mxu0 0.0
        %1391 = vmatpush1.msra.mxu0 0.0
        %1392 = vmatprep.subr.mxu0 0.0
        %1393 = vmatpush1.msra.mxu0 0.0
        %1394 = vmatprep.subr.mxu0 0.0
        %1395 = vmatpush1.msra.mxu0 0.0
        %1396 = vmatprep.subr.mxu0 0.0
        %1397 = vmatpush1.msra.mxu0 0.0
        %1398 = vmatprep.subr.mxu0 0.0
        %1399 = vmatpush1.msra.mxu0 0.0
        %1400 = vmatprep.subr.mxu0 0.0
        %1401 = vmatpush1.msra.mxu0 0.0
        %1402 = vmatprep.subr.mxu0 0.0
        %1403 = vmatpush1.msra.mxu0 0.0
        %1404 = vmatprep.subr.mxu0 0.0
        %1405 = vmatpush1.msra.mxu0 0.0
        %1406 = vmatprep.subr.mxu0 0.0
        %1407 = vmatpush1.msra.mxu0 0.0
        %1408 = vmatprep.subr.mxu0 0.0
        %1409 = vmatpush1.msra.mxu0 0.0
        %1410 = vmatprep.subr.mxu0 0.0
        %1411 = vmatpush1.msra.mxu0 0.0
        %1412 = vmatprep.subr.mxu0 0.0
        %1413 = vmatpush1.msra.mxu0 0.0
        %1414 = vmatprep.subr.mxu0 0.0
        %1415 = vmatpush1.msra.mxu0 0.0
        %1416 = vmatprep.subr.mxu0 0.0
        %1417 = vmatpush1.msra.mxu0 0.0
        %1418 = vmatprep.subr.mxu0 0.0
        %1419 = vmatpush1.msra.mxu0 0.0
        %1420 = vmatprep.subr.mxu0 0.0
        %1421 = vmatpush1.msra.mxu0 0.0
        %1422 = vmatprep.subr.mxu0 0.0
        %1423 = vmatpush1.msra.mxu0 0.0
        %1424 = vmatprep.subr.mxu0 0.0
        %1425 = vmatpush1.msra.mxu0 0.0
        %1426 = vmatprep.subr.mxu0 0.0
        %1427 = vmatpush1.msra.mxu0 0.0
        %1428 = vmatprep.subr.mxu0 0.0
        %1429 = vmatpush1.msra.mxu0 0.0
        %1430 = vmatprep.subr.mxu0 0.0
        %1431 = vmatpush1.msra.mxu0 0.0
        %1432 = vmatprep.subr.mxu0 0.0
        %1433 = vmatpush1.msra.mxu0 0.0
        %1434 = vmatprep.subr.mxu0 0.0
        %1435 = vmatpush1.msra.mxu0 0.0
        %1436 = vmatprep.mubr.f32.mxu0 0.0
        %v1437 = vand.u32 %v1359, 4294901760
        %v1438 = vsub.f32 %v1359, %v1437
        %v1439 = vand.u32 %v1438, 4294901760
        %v1440 = vsub.f32 %v1438, %v1439
        %v1441 = vand.u32 %v1440, 4294901760
        %1442 = vmatmul.mubr.f32.gmra.mrb[0].mxu0 %v1441
        %v1443 = vpop.f32.mrb[0].mxu0
        %v1444 = vadd.f32 0.0, %v1443
        %v1445 = vpop.f32.mrb[0].mxu0
        %v1446 = vadd.f32 0.0, %v1445
        %1447 = vmatprep.mubr.f32.mxu0 0.0
        %v1448 = vand.u32 %v1362, 4294901760
        %v1449 = vsub.f32 %v1362, %v1448
        %v1450 = vand.u32 %v1449, 4294901760
        %v1451 = vsub.f32 %v1449, %v1450
        %v1452 = vand.u32 %v1451, 4294901760
        %1453 = vmatmul.mubr.f32.gmra.mrb[0].mxu0 %v1452
        %v1454 = vpop.f32.mrb[0].mxu0
        %v1455 = vadd.f32 0.0, %v1454
        %v1456 = vpop.f32.mrb[0].mxu0
        %v1457 = vadd.f32 0.0, %v1456
        %1458 = vdwg.mxu0
        %v1459 = vand.u32 %v1348, 4294901760
        %v1460 = vsub.f32 %v1348, %v1459
        %v1461 = vand.u32 %v1460, 4294901760
        %v1462 = vsub.f32 %v1460, %v1461
        %v1463 = vand.u32 %v1462, 4294901760
        %1464 = vmatprep.subr.mxu0 %v1463
        %v1465 = vand.u32 %v1354, 4294901760
        %v1466 = vsub.f32 %v1354, %v1465
        %v1467 = vand.u32 %v1466, 4294901760
        %v1468 = vsub.f32 %v1466, %v1467
        %v1469 = vand.u32 %v1468, 4294901760
        %1470 = vmatpush1.msra.mxu0 %v1469
        %v1471 = vand.u32 %v1366, 4294901760
        %v1472 = vsub.f32 %v1366, %v1471
        %v1473 = vand.u32 %v1472, 4294901760
        %v1474 = vsub.f32 %v1472, %v1473
        %v1475 = vand.u32 %v1474, 4294901760
        %1476 = vmatprep.subr.mxu0 %v1475
        %v1477 = vand.u32 %v1364, 4294901760
        %v1478 = vsub.f32 %v1364, %v1477
        %v1479 = vand.u32 %v1478, 4294901760
        %v1480 = vsub.f32 %v1478, %v1479
        %v1481 = vand.u32 %v1480, 4294901760
        %1482 = vmatpush1.msra.mxu0 %v1481
        %1483 = vmatprep.subr.mxu0 0.0
        %1484 = vmatpush1.msra.mxu0 0.0
        %1485 = vmatprep.subr.mxu0 0.0
        %1486 = vmatpush1.msra.mxu0 0.0
        %1487 = vmatprep.subr.mxu0 0.0
        %1488 = vmatpush1.msra.mxu0 0.0
        %1489 = vmatprep.subr.mxu0 0.0
        %1490 = vmatpush1.msra.mxu0 0.0
        %1491 = vmatprep.subr.mxu0 0.0
        %1492 = vmatpush1.msra.mxu0 0.0
        %1493 = vmatprep.subr.mxu0 0.0
        %1494 = vmatpush1.msra.mxu0 0.0
        %1495 = vmatprep.subr.mxu0 0.0
        %1496 = vmatpush1.msra.mxu0 0.0
        %1497 = vmatprep.subr.mxu0 0.0
        %1498 = vmatpush1.msra.mxu0 0.0
        %1499 = vmatprep.subr.mxu0 0.0
        %1500 = vmatpush1.msra.mxu0 0.0
        %1501 = vmatprep.subr.mxu0 0.0
        %1502 = vmatpush1.msra.mxu0 0.0
        %1503 = vmatprep.subr.mxu0 0.0
        %1504 = vmatpush1.msra.mxu0 0.0
        %1505 = vmatprep.subr.mxu0 0.0
        %1506 = vmatpush1.msra.mxu0 0.0
        %1507 = vmatprep.subr.mxu0 0.0
        %1508 = vmatpush1.msra.mxu0 0.0
        %1509 = vmatprep.subr.mxu0 0.0
        %1510 = vmatpush1.msra.mxu0 0.0
        %1511 = vmatprep.subr.mxu0 0.0
        %1512 = vmatpush1.msra.mxu0 0.0
        %1513 = vmatprep.subr.mxu0 0.0
        %1514 = vmatpush1.msra.mxu0 0.0
        %1515 = vmatprep.subr.mxu0 0.0
        %1516 = vmatpush1.msra.mxu0 0.0
        %1517 = vmatprep.subr.mxu0 0.0
        %1518 = vmatpush1.msra.mxu0 0.0
        %1519 = vmatprep.subr.mxu0 0.0
        %1520 = vmatpush1.msra.mxu0 0.0
        %1521 = vmatprep.subr.mxu0 0.0
        %1522 = vmatpush1.msra.mxu0 0.0
        %1523 = vmatprep.subr.mxu0 0.0
        %1524 = vmatpush1.msra.mxu0 0.0
        %1525 = vmatprep.subr.mxu0 0.0
        %1526 = vmatpush1.msra.mxu0 0.0
        %1527 = vmatprep.subr.mxu0 0.0
        %1528 = vmatpush1.msra.mxu0 0.0
        %1529 = vmatprep.subr.mxu0 0.0
        %1530 = vmatpush1.msra.mxu0 0.0
        %1531 = vmatprep.subr.mxu0 0.0
        %1532 = vmatpush1.msra.mxu0 0.0
        %1533 = vmatprep.subr.mxu0 0.0
        %1534 = vmatpush1.msra.mxu0 0.0
        %1535 = vmatprep.subr.mxu0 0.0
        %1536 = vmatpush1.msra.mxu0 0.0
        %1537 = vmatprep.subr.mxu0 0.0
        %1538 = vmatpush1.msra.mxu0 0.0
        %1539 = vmatprep.subr.mxu0 0.0
        %1540 = vmatpush1.msra.mxu0 0.0
        %1541 = vmatprep.subr.mxu0 0.0
        %1542 = vmatpush1.msra.mxu0 0.0
        %1543 = vmatprep.mubr.f32.mxu0 0.0
        %v1544 = vand.u32 %v1359, 4294901760
        %1545 = vmatmul.mubr.f32.gmra.mrb[0].mxu0 %v1544
        %v1546 = vpop.f32.mrb[0].mxu0
        %v1547 = vadd.f32 %v1444, %v1546
        %v1548 = vpop.f32.mrb[0].mxu0
        %v1549 = vadd.f32 %v1446, %v1548
        %1550 = vmatprep.mubr.f32.mxu0 0.0
        %v1551 = vand.u32 %v1362, 4294901760
        %1552 = vmatmul.mubr.f32.gmra.mrb[0].mxu0 %v1551
        %v1553 = vpop.f32.mrb[0].mxu0
        %v1554 = vadd.f32 %v1455, %v1553
        %v1555 = vpop.f32.mrb[0].mxu0
        %v1556 = vadd.f32 %v1457, %v1555
        %1557 = vdwg.mxu0
        %v1558 = vand.u32 %v1348, 4294901760
        %v1559 = vsub.f32 %v1348, %v1558
        %1560 = vmatprep.subr.mxu0 %v1559
        %v1561 = vand.u32 %v1354, 4294901760
        %v1562 = vsub.f32 %v1354, %v1561
        %1563 = vmatpush1.msra.mxu0 %v1562
        %v1564 = vand.u32 %v1366, 4294901760
        %v1565 = vsub.f32 %v1366, %v1564
        %1566 = vmatprep.subr.mxu0 %v1565
        %v1567 = vand.u32 %v1364, 4294901760
        %v1568 = vsub.f32 %v1364, %v1567
        %1569 = vmatpush1.msra.mxu0 %v1568
        %1570 = vmatprep.subr.mxu0 0.0
        %1571 = vmatpush1.msra.mxu0 0.0
        %1572 = vmatprep.subr.mxu0 0.0
        %1573 = vmatpush1.msra.mxu0 0.0
        %1574 = vmatprep.subr.mxu0 0.0
        %1575 = vmatpush1.msra.mxu0 0.0
        %1576 = vmatprep.subr.mxu0 0.0
        %1577 = vmatpush1.msra.mxu0 0.0
        %1578 = vmatprep.subr.mxu0 0.0
        %1579 = vmatpush1.msra.mxu0 0.0
        %1580 = vmatprep.subr.mxu0 0.0
        %1581 = vmatpush1.msra.mxu0 0.0
        %1582 = vmatprep.subr.mxu0 0.0
        %1583 = vmatpush1.msra.mxu0 0.0
        %1584 = vmatprep.subr.mxu0 0.0
        %1585 = vmatpush1.msra.mxu0 0.0
        %1586 = vmatprep.subr.mxu0 0.0
        %1587 = vmatpush1.msra.mxu0 0.0
        %1588 = vmatprep.subr.mxu0 0.0
        %1589 = vmatpush1.msra.mxu0 0.0
        %1590 = vmatprep.subr.mxu0 0.0
        %1591 = vmatpush1.msra.mxu0 0.0
        %1592 = vmatprep.subr.mxu0 0.0
        %1593 = vmatpush1.msra.mxu0 0.0
        %1594 = vmatprep.subr.mxu0 0.0
        %1595 = vmatpush1.msra.mxu0 0.0
        %1596 = vmatprep.subr.mxu0 0.0
        %1597 = vmatpush1.msra.mxu0 0.0
        %1598 = vmatprep.subr.mxu0 0.0
        %1599 = vmatpush1.msra.mxu0 0.0
        %1600 = vmatprep.subr.mxu0 0.0
        %1601 = vmatpush1.msra.mxu0 0.0
        %1602 = vmatprep.subr.mxu0 0.0
        %1603 = vmatpush1.msra.mxu0 0.0
        %1604 = vmatprep.subr.mxu0 0.0
        %1605 = vmatpush1.msra.mxu0 0.0
        %1606 = vmatprep.subr.mxu0 0.0
        %1607 = vmatpush1.msra.mxu0 0.0
        %1608 = vmatprep.subr.mxu0 0.0
        %1609 = vmatpush1.msra.mxu0 0.0
        %1610 = vmatprep.subr.mxu0 0.0
        %1611 = vmatpush1.msra.mxu0 0.0
        %1612 = vmatprep.subr.mxu0 0.0
        %1613 = vmatpush1.msra.mxu0 0.0
        %1614 = vmatprep.subr.mxu0 0.0
        %1615 = vmatpush1.msra.mxu0 0.0
        %1616 = vmatprep.subr.mxu0 0.0
        %1617 = vmatpush1.msra.mxu0 0.0
        %1618 = vmatprep.subr.mxu0 0.0
        %1619 = vmatpush1.msra.mxu0 0.0
        %1620 = vmatprep.subr.mxu0 0.0
        %1621 = vmatpush1.msra.mxu0 0.0
        %1622 = vmatprep.subr.mxu0 0.0
        %1623 = vmatpush1.msra.mxu0 0.0
        %1624 = vmatprep.subr.mxu0 0.0
        %1625 = vmatpush1.msra.mxu0 0.0
        %1626 = vmatprep.subr.mxu0 0.0
        %1627 = vmatpush1.msra.mxu0 0.0
        %1628 = vmatprep.subr.mxu0 0.0
        %1629 = vmatpush1.msra.mxu0 0.0
        %1630 = vmatprep.mubr.f32.mxu0 0.0
        %v1631 = vand.u32 %v1359, 4294901760
        %v1632 = vsub.f32 %v1359, %v1631
        %1633 = vmatmul.mubr.f32.gmra.mrb[0].mxu0 %v1632
        %v1634 = vpop.f32.mrb[0].mxu0
        %v1635 = vadd.f32 %v1547, %v1634
        %v1636 = vpop.f32.mrb[0].mxu0
        %v1637 = vadd.f32 %v1549, %v1636
        %1638 = vmatprep.mubr.f32.mxu0 0.0
        %v1639 = vand.u32 %v1362, 4294901760
        %v1640 = vsub.f32 %v1362, %v1639
        %1641 = vmatmul.mubr.f32.gmra.mrb[0].mxu0 %v1640
        %v1642 = vpop.f32.mrb[0].mxu0
        %v1643 = vadd.f32 %v1554, %v1642
        %v1644 = vpop.f32.mrb[0].mxu0
        %v1645 = vadd.f32 %v1556, %v1644
        %1646 = vdwg.mxu0
        %v1647 = vand.u32 %v1348, 4294901760
        %1648 = vmatprep.subr.mxu0 %v1647
        %v1649 = vand.u32 %v1354, 4294901760
        %1650 = vmatpush1.msra.mxu0 %v1649
        %v1651 = vand.u32 %v1366, 4294901760
        %1652 = vmatprep.subr.mxu0 %v1651
        %v1653 = vand.u32 %v1364, 4294901760
        %1654 = vmatpush1.msra.mxu0 %v1653
        %1655 = vmatprep.subr.mxu0 0.0
        %1656 = vmatpush1.msra.mxu0 0.0
        %1657 = vmatprep.subr.mxu0 0.0
        %1658 = vmatpush1.msra.mxu0 0.0
        %1659 = vmatprep.subr.mxu0 0.0
        %1660 = vmatpush1.msra.mxu0 0.0
        %1661 = vmatprep.subr.mxu0 0.0
        %1662 = vmatpush1.msra.mxu0 0.0
        %1663 = vmatprep.subr.mxu0 0.0
        %1664 = vmatpush1.msra.mxu0 0.0
        %1665 = vmatprep.subr.mxu0 0.0
        %1666 = vmatpush1.msra.mxu0 0.0
        %1667 = vmatprep.subr.mxu0 0.0
        %1668 = vmatpush1.msra.mxu0 0.0
        %1669 = vmatprep.subr.mxu0 0.0
        %1670 = vmatpush1.msra.mxu0 0.0
        %1671 = vmatprep.subr.mxu0 0.0
        %1672 = vmatpush1.msra.mxu0 0.0
        %1673 = vmatprep.subr.mxu0 0.0
        %1674 = vmatpush1.msra.mxu0 0.0
        %1675 = vmatprep.subr.mxu0 0.0
        %1676 = vmatpush1.msra.mxu0 0.0
        %1677 = vmatprep.subr.mxu0 0.0
        %1678 = vmatpush1.msra.mxu0 0.0
        %1679 = vmatprep.subr.mxu0 0.0
        %1680 = vmatpush1.msra.mxu0 0.0
        %1681 = vmatprep.subr.mxu0 0.0
        %1682 = vmatpush1.msra.mxu0 0.0
        %1683 = vmatprep.subr.mxu0 0.0
        %1684 = vmatpush1.msra.mxu0 0.0
        %1685 = vmatprep.subr.mxu0 0.0
        %1686 = vmatpush1.msra.mxu0 0.0
        %1687 = vmatprep.subr.mxu0 0.0
        %1688 = vmatpush1.msra.mxu0 0.0
        %1689 = vmatprep.subr.mxu0 0.0
        %1690 = vmatpush1.msra.mxu0 0.0
        %1691 = vmatprep.subr.mxu0 0.0
        %1692 = vmatpush1.msra.mxu0 0.0
        %1693 = vmatprep.subr.mxu0 0.0
        %1694 = vmatpush1.msra.mxu0 0.0
        %1695 = vmatprep.subr.mxu0 0.0
        %1696 = vmatpush1.msra.mxu0 0.0
        %1697 = vmatprep.subr.mxu0 0.0
        %1698 = vmatpush1.msra.mxu0 0.0
        %1699 = vmatprep.subr.mxu0 0.0
        %1700 = vmatpush1.msra.mxu0 0.0
        %1701 = vmatprep.subr.mxu0 0.0
        %1702 = vmatpush1.msra.mxu0 0.0
        %1703 = vmatprep.subr.mxu0 0.0
        %1704 = vmatpush1.msra.mxu0 0.0
        %1705 = vmatprep.subr.mxu0 0.0
        %1706 = vmatpush1.msra.mxu0 0.0
        %1707 = vmatprep.subr.mxu0 0.0
        %1708 = vmatpush1.msra.mxu0 0.0
        %1709 = vmatprep.subr.mxu0 0.0
        %1710 = vmatpush1.msra.mxu0 0.0
        %1711 = vmatprep.subr.mxu0 0.0
        %1712 = vmatpush1.msra.mxu0 0.0
        %1713 = vmatprep.subr.mxu0 0.0
        %1714 = vmatpush1.msra.mxu0 0.0
        %1715 = vmatprep.mubr.f32.mxu0 0.0
        %v1716 = vand.u32 %v1359, 4294901760
        %v1717 = vsub.f32 %v1359, %v1716
        %v1718 = vand.u32 %v1717, 4294901760
        %1719 = vmatmul.mubr.f32.gmra.mrb[0].mxu0 %v1718
        %v1720 = vpop.f32.mrb[0].mxu0
        %v1721 = vadd.f32 %v1635, %v1720
        %v1722 = vpop.f32.mrb[0].mxu0
        %v1723 = vadd.f32 %v1637, %v1722
        %1724 = vmatprep.mubr.f32.mxu0 0.0
        %v1725 = vand.u32 %v1362, 4294901760
        %v1726 = vsub.f32 %v1362, %v1725
        %v1727 = vand.u32 %v1726, 4294901760
        %1728 = vmatmul.mubr.f32.gmra.mrb[0].mxu0 %v1727
        %v1729 = vpop.f32.mrb[0].mxu0
        %v1730 = vadd.f32 %v1643, %v1729
        %v1731 = vpop.f32.mrb[0].mxu0
        %v1732 = vadd.f32 %v1645, %v1731
        %1733 = vdwg.mxu0
        %v1734 = vand.u32 %v1348, 4294901760
        %v1735 = vsub.f32 %v1348, %v1734
        %v1736 = vand.u32 %v1735, 4294901760
        %1737 = vmatprep.subr.mxu0 %v1736
        %v1738 = vand.u32 %v1354, 4294901760
        %v1739 = vsub.f32 %v1354, %v1738
        %v1740 = vand.u32 %v1739, 4294901760
        %1741 = vmatpush1.msra.mxu0 %v1740
        %v1742 = vand.u32 %v1366, 4294901760
        %v1743 = vsub.f32 %v1366, %v1742
        %v1744 = vand.u32 %v1743, 4294901760
        %1745 = vmatprep.subr.mxu0 %v1744
        %v1746 = vand.u32 %v1364, 4294901760
        %v1747 = vsub.f32 %v1364, %v1746
        %v1748 = vand.u32 %v1747, 4294901760
        %1749 = vmatpush1.msra.mxu0 %v1748
        %1750 = vmatprep.subr.mxu0 0.0
        %1751 = vmatpush1.msra.mxu0 0.0
        %1752 = vmatprep.subr.mxu0 0.0
        %1753 = vmatpush1.msra.mxu0 0.0
        %1754 = vmatprep.subr.mxu0 0.0
        %1755 = vmatpush1.msra.mxu0 0.0
        %1756 = vmatprep.subr.mxu0 0.0
        %1757 = vmatpush1.msra.mxu0 0.0
        %1758 = vmatprep.subr.mxu0 0.0
        %1759 = vmatpush1.msra.mxu0 0.0
        %1760 = vmatprep.subr.mxu0 0.0
        %1761 = vmatpush1.msra.mxu0 0.0
        %1762 = vmatprep.subr.mxu0 0.0
        %1763 = vmatpush1.msra.mxu0 0.0
        %1764 = vmatprep.subr.mxu0 0.0
        %1765 = vmatpush1.msra.mxu0 0.0
        %1766 = vmatprep.subr.mxu0 0.0
        %1767 = vmatpush1.msra.mxu0 0.0
        %1768 = vmatprep.subr.mxu0 0.0
        %1769 = vmatpush1.msra.mxu0 0.0
        %1770 = vmatprep.subr.mxu0 0.0
        %1771 = vmatpush1.msra.mxu0 0.0
        %1772 = vmatprep.subr.mxu0 0.0
        %1773 = vmatpush1.msra.mxu0 0.0
        %1774 = vmatprep.subr.mxu0 0.0
        %1775 = vmatpush1.msra.mxu0 0.0
        %1776 = vmatprep.subr.mxu0 0.0
        %1777 = vmatpush1.msra.mxu0 0.0
        %1778 = vmatprep.subr.mxu0 0.0
        %1779 = vmatpush1.msra.mxu0 0.0
        %1780 = vmatprep.subr.mxu0 0.0
        %1781 = vmatpush1.msra.mxu0 0.0
        %1782 = vmatprep.subr.mxu0 0.0
        %1783 = vmatpush1.msra.mxu0 0.0
        %1784 = vmatprep.subr.mxu0 0.0
        %1785 = vmatpush1.msra.mxu0 0.0
        %1786 = vmatprep.subr.mxu0 0.0
        %1787 = vmatpush1.msra.mxu0 0.0
        %1788 = vmatprep.subr.mxu0 0.0
        %1789 = vmatpush1.msra.mxu0 0.0
        %1790 = vmatprep.subr.mxu0 0.0
        %1791 = vmatpush1.msra.mxu0 0.0
        %1792 = vmatprep.subr.mxu0 0.0
        %1793 = vmatpush1.msra.mxu0 0.0
        %1794 = vmatprep.subr.mxu0 0.0
        %1795 = vmatpush1.msra.mxu0 0.0
        %1796 = vmatprep.subr.mxu0 0.0
        %1797 = vmatpush1.msra.mxu0 0.0
        %1798 = vmatprep.subr.mxu0 0.0
        %1799 = vmatpush1.msra.mxu0 0.0
        %1800 = vmatprep.subr.mxu0 0.0
        %1801 = vmatpush1.msra.mxu0 0.0
        %1802 = vmatprep.subr.mxu0 0.0
        %1803 = vmatpush1.msra.mxu0 0.0
        %1804 = vmatprep.subr.mxu0 0.0
        %1805 = vmatpush1.msra.mxu0 0.0
        %1806 = vmatprep.subr.mxu0 0.0
        %1807 = vmatpush1.msra.mxu0 0.0
        %1808 = vmatprep.subr.mxu0 0.0
        %1809 = vmatpush1.msra.mxu0 0.0
        %1810 = vmatprep.mubr.f32.mxu0 0.0
        %v1811 = vand.u32 %v1359, 4294901760
        %1812 = vmatmul.mubr.f32.gmra.mrb[0].mxu0 %v1811
        %v1813 = vpop.f32.mrb[0].mxu0
        %v1814 = vadd.f32 %v1721, %v1813
        %v1815 = vpop.f32.mrb[0].mxu0
        %v1816 = vadd.f32 %v1723, %v1815
        %1817 = vmatprep.mubr.f32.mxu0 0.0
        %v1818 = vand.u32 %v1362, 4294901760
        %1819 = vmatmul.mubr.f32.gmra.mrb[0].mxu0 %v1818
        %v1820 = vpop.f32.mrb[0].mxu0
        %v1821 = vadd.f32 %v1730, %v1820
        %v1822 = vpop.f32.mrb[0].mxu0
        %v1823 = vadd.f32 %v1732, %v1822
        %1824 = vdwg.mxu0
        %v1825 = vand.u32 %v1348, 4294901760
        %1826 = vmatprep.subr.mxu0 %v1825
        %v1827 = vand.u32 %v1354, 4294901760
        %1828 = vmatpush1.msra.mxu0 %v1827
        %v1829 = vand.u32 %v1366, 4294901760
        %1830 = vmatprep.subr.mxu0 %v1829
        %v1831 = vand.u32 %v1364, 4294901760
        %1832 = vmatpush1.msra.mxu0 %v1831
        %1833 = vmatprep.subr.mxu0 0.0
        %1834 = vmatpush1.msra.mxu0 0.0
        %1835 = vmatprep.subr.mxu0 0.0
        %1836 = vmatpush1.msra.mxu0 0.0
        %1837 = vmatprep.subr.mxu0 0.0
        %1838 = vmatpush1.msra.mxu0 0.0
        %1839 = vmatprep.subr.mxu0 0.0
        %1840 = vmatpush1.msra.mxu0 0.0
        %1841 = vmatprep.subr.mxu0 0.0
        %1842 = vmatpush1.msra.mxu0 0.0
        %1843 = vmatprep.subr.mxu0 0.0
        %1844 = vmatpush1.msra.mxu0 0.0
        %1845 = vmatprep.subr.mxu0 0.0
        %1846 = vmatpush1.msra.mxu0 0.0
        %1847 = vmatprep.subr.mxu0 0.0
        %1848 = vmatpush1.msra.mxu0 0.0
        %1849 = vmatprep.subr.mxu0 0.0
        %1850 = vmatpush1.msra.mxu0 0.0
        %1851 = vmatprep.subr.mxu0 0.0
        %1852 = vmatpush1.msra.mxu0 0.0
        %1853 = vmatprep.subr.mxu0 0.0
        %1854 = vmatpush1.msra.mxu0 0.0
        %1855 = vmatprep.subr.mxu0 0.0
        %1856 = vmatpush1.msra.mxu0 0.0
        %1857 = vmatprep.subr.mxu0 0.0
        %1858 = vmatpush1.msra.mxu0 0.0
        %1859 = vmatprep.subr.mxu0 0.0
        %1860 = vmatpush1.msra.mxu0 0.0
        %1861 = vmatprep.subr.mxu0 0.0
        %1862 = vmatpush1.msra.mxu0 0.0
        %1863 = vmatprep.subr.mxu0 0.0
        %1864 = vmatpush1.msra.mxu0 0.0
        %1865 = vmatprep.subr.mxu0 0.0
        %1866 = vmatpush1.msra.mxu0 0.0
        %1867 = vmatprep.subr.mxu0 0.0
        %1868 = vmatpush1.msra.mxu0 0.0
        %1869 = vmatprep.subr.mxu0 0.0
        %1870 = vmatpush1.msra.mxu0 0.0
        %1871 = vmatprep.subr.mxu0 0.0
        %1872 = vmatpush1.msra.mxu0 0.0
        %1873 = vmatprep.subr.mxu0 0.0
        %1874 = vmatpush1.msra.mxu0 0.0
        %1875 = vmatprep.subr.mxu0 0.0
        %1876 = vmatpush1.msra.mxu0 0.0
        %1877 = vmatprep.subr.mxu0 0.0
        %1878 = vmatpush1.msra.mxu0 0.0
        %1879 = vmatprep.subr.mxu0 0.0
        %1880 = vmatpush1.msra.mxu0 0.0
        %1881 = vmatprep.subr.mxu0 0.0
        %1882 = vmatpush1.msra.mxu0 0.0
        %1883 = vmatprep.subr.mxu0 0.0
        %1884 = vmatpush1.msra.mxu0 0.0
        %1885 = vmatprep.subr.mxu0 0.0
        %1886 = vmatpush1.msra.mxu0 0.0
        %1887 = vmatprep.subr.mxu0 0.0
        %1888 = vmatpush1.msra.mxu0 0.0
        %1889 = vmatprep.subr.mxu0 0.0
        %1890 = vmatpush1.msra.mxu0 0.0
        %1891 = vmatprep.subr.mxu0 0.0
        %1892 = vmatpush1.msra.mxu0 0.0
        %1893 = vmatprep.mubr.f32.mxu0 0.0
        %v1894 = vand.u32 %v1359, 4294901760
        %1895 = vmatmul.mubr.f32.gmra.mrb[0].mxu0 %v1894
        %v1896 = vpop.f32.mrb[0].mxu0
        %v1897 = vadd.f32 %v1814, %v1896
        %v1898 = vpop.f32.mrb[0].mxu0
        %v1899 = vadd.f32 %v1816, %v1898
        %1900 = vmatprep.mubr.f32.mxu0 0.0
        %v1901 = vand.u32 %v1362, 4294901760
        %1902 = vmatmul.mubr.f32.gmra.mrb[0].mxu0 %v1901
        %v1903 = vpop.f32.mrb[0].mxu0
        %v1904 = vadd.f32 %v1821, %v1903
        %v1905 = vpop.f32.mrb[0].mxu0
        %v1906 = vadd.f32 %v1823, %v1905
        %1907 = vdwg.mxu0
        %v1908 = vadd.f32 %v1331, %v1897
        %v1909 = vadd.f32 %v1333, %v1899
        %v1910 = vadd.f32 %v1338, %v1904
        %v1911 = vadd.f32 %v1340, %v1906
        %s1912 = scalar_lea.vmem [#allocation3], 48
        %v1913 = vld [vmem:[%s1912] sm:$0xff]
        %v1914 = vld [vmem:[%s1912 + $0x8] sm:$0x3]
        %1915 = vrot.lane.b32.xlu0 %v214, 112
        %v1916 = vpop.permute.xlu0 %1915
        %1917 = vrot.lane.b32.xlu0 %v215, 112
        %v1918 = vpop.permute.xlu0 %1917
        %1919 = vrot.lane.b32.xlu0 %v216, 112
        %v1920 = vpop.permute.xlu0 %1919
        %1921 = vrot.lane.b32.xlu0 %v217, 112
        %v1922 = vpop.permute.xlu0 %1921
        %vm1923 = vcmask 916480
        %v1924 = vsel %vm1923, %v1916, %v1918
        %v1925 = vsel %vm1923, %v1920, %v1922
        %v1929 = vsel %vm240, %v1913, 0
        %v1932 = vsel %vm240, %v1914, 0
        %v1934 = vsel %vm247, %v1925, 0
        %v1936 = vsel %vm247, %v1922, 0
        %v1938 = vand.u32 %v1918, 4294901760
        %1939 = vmatprep.subr.mxu0 %v1938
        %v1940 = vand.u32 %v1924, 4294901760
        %1941 = vmatpush1.msra.mxu0 %v1940
        %v1942 = vand.u32 %v1936, 4294901760
        %1943 = vmatprep.subr.mxu0 %v1942
        %v1944 = vand.u32 %v1934, 4294901760
        %1945 = vmatpush1.msra.mxu0 %v1944
        %1946 = vmatprep.subr.mxu0 0.0
        %1947 = vmatpush1.msra.mxu0 0.0
        %1948 = vmatprep.subr.mxu0 0.0
        %1949 = vmatpush1.msra.mxu0 0.0
        %1950 = vmatprep.subr.mxu0 0.0
        %1951 = vmatpush1.msra.mxu0 0.0
        %1952 = vmatprep.subr.mxu0 0.0
        %1953 = vmatpush1.msra.mxu0 0.0
        %1954 = vmatprep.subr.mxu0 0.0
        %1955 = vmatpush1.msra.mxu0 0.0
        %1956 = vmatprep.subr.mxu0 0.0
        %1957 = vmatpush1.msra.mxu0 0.0
        %1958 = vmatprep.subr.mxu0 0.0
        %1959 = vmatpush1.msra.mxu0 0.0
        %1960 = vmatprep.subr.mxu0 0.0
        %1961 = vmatpush1.msra.mxu0 0.0
        %1962 = vmatprep.subr.mxu0 0.0
        %1963 = vmatpush1.msra.mxu0 0.0
        %1964 = vmatprep.subr.mxu0 0.0
        %1965 = vmatpush1.msra.mxu0 0.0
        %1966 = vmatprep.subr.mxu0 0.0
        %1967 = vmatpush1.msra.mxu0 0.0
        %1968 = vmatprep.subr.mxu0 0.0
        %1969 = vmatpush1.msra.mxu0 0.0
        %1970 = vmatprep.subr.mxu0 0.0
        %1971 = vmatpush1.msra.mxu0 0.0
        %1972 = vmatprep.subr.mxu0 0.0
        %1973 = vmatpush1.msra.mxu0 0.0
        %1974 = vmatprep.subr.mxu0 0.0
        %1975 = vmatpush1.msra.mxu0 0.0
        %1976 = vmatprep.subr.mxu0 0.0
        %1977 = vmatpush1.msra.mxu0 0.0
        %1978 = vmatprep.subr.mxu0 0.0
        %1979 = vmatpush1.msra.mxu0 0.0
        %1980 = vmatprep.subr.mxu0 0.0
        %1981 = vmatpush1.msra.mxu0 0.0
        %1982 = vmatprep.subr.mxu0 0.0
        %1983 = vmatpush1.msra.mxu0 0.0
        %1984 = vmatprep.subr.mxu0 0.0
        %1985 = vmatpush1.msra.mxu0 0.0
        %1986 = vmatprep.subr.mxu0 0.0
        %1987 = vmatpush1.msra.mxu0 0.0
        %1988 = vmatprep.subr.mxu0 0.0
        %1989 = vmatpush1.msra.mxu0 0.0
        %1990 = vmatprep.subr.mxu0 0.0
        %1991 = vmatpush1.msra.mxu0 0.0
        %1992 = vmatprep.subr.mxu0 0.0
        %1993 = vmatpush1.msra.mxu0 0.0
        %1994 = vmatprep.subr.mxu0 0.0
        %1995 = vmatpush1.msra.mxu0 0.0
        %1996 = vmatprep.subr.mxu0 0.0
        %1997 = vmatpush1.msra.mxu0 0.0
        %1998 = vmatprep.subr.mxu0 0.0
        %1999 = vmatpush1.msra.mxu0 0.0
        %2000 = vmatprep.subr.mxu0 0.0
        %2001 = vmatpush1.msra.mxu0 0.0
        %2002 = vmatprep.subr.mxu0 0.0
        %2003 = vmatpush1.msra.mxu0 0.0
        %2004 = vmatprep.subr.mxu0 0.0
        %2005 = vmatpush1.msra.mxu0 0.0
        %2006 = vmatprep.mubr.f32.mxu0 0.0
        %v2007 = vand.u32 %v1929, 4294901760
        %v2008 = vsub.f32 %v1929, %v2007
        %v2009 = vand.u32 %v2008, 4294901760
        %v2010 = vsub.f32 %v2008, %v2009
        %v2011 = vand.u32 %v2010, 4294901760
        %2012 = vmatmul.mubr.f32.gmra.mrb[0].mxu0 %v2011
        %v2013 = vpop.f32.mrb[0].mxu0
        %v2014 = vadd.f32 0.0, %v2013
        %v2015 = vpop.f32.mrb[0].mxu0
        %v2016 = vadd.f32 0.0, %v2015
        %2017 = vmatprep.mubr.f32.mxu0 0.0
        %v2018 = vand.u32 %v1932, 4294901760
        %v2019 = vsub.f32 %v1932, %v2018
        %v2020 = vand.u32 %v2019, 4294901760
        %v2021 = vsub.f32 %v2019, %v2020
        %v2022 = vand.u32 %v2021, 4294901760
        %2023 = vmatmul.mubr.f32.gmra.mrb[0].mxu0 %v2022
        %v2024 = vpop.f32.mrb[0].mxu0
        %v2025 = vadd.f32 0.0, %v2024
        %v2026 = vpop.f32.mrb[0].mxu0
        %v2027 = vadd.f32 0.0, %v2026
        %2028 = vdwg.mxu0
        %v2029 = vand.u32 %v1918, 4294901760
        %v2030 = vsub.f32 %v1918, %v2029
        %v2031 = vand.u32 %v2030, 4294901760
        %v2032 = vsub.f32 %v2030, %v2031
        %v2033 = vand.u32 %v2032, 4294901760
        %2034 = vmatprep.subr.mxu0 %v2033
        %v2035 = vand.u32 %v1924, 4294901760
        %v2036 = vsub.f32 %v1924, %v2035
        %v2037 = vand.u32 %v2036, 4294901760
        %v2038 = vsub.f32 %v2036, %v2037
        %v2039 = vand.u32 %v2038, 4294901760
        %2040 = vmatpush1.msra.mxu0 %v2039
        %v2041 = vand.u32 %v1936, 4294901760
        %v2042 = vsub.f32 %v1936, %v2041
        %v2043 = vand.u32 %v2042, 4294901760
        %v2044 = vsub.f32 %v2042, %v2043
        %v2045 = vand.u32 %v2044, 4294901760
        %2046 = vmatprep.subr.mxu0 %v2045
        %v2047 = vand.u32 %v1934, 4294901760
        %v2048 = vsub.f32 %v1934, %v2047
        %v2049 = vand.u32 %v2048, 4294901760
        %v2050 = vsub.f32 %v2048, %v2049
        %v2051 = vand.u32 %v2050, 4294901760
        %2052 = vmatpush1.msra.mxu0 %v2051
        %2053 = vmatprep.subr.mxu0 0.0
        %2054 = vmatpush1.msra.mxu0 0.0
        %2055 = vmatprep.subr.mxu0 0.0
        %2056 = vmatpush1.msra.mxu0 0.0
        %2057 = vmatprep.subr.mxu0 0.0
        %2058 = vmatpush1.msra.mxu0 0.0
        %2059 = vmatprep.subr.mxu0 0.0
        %2060 = vmatpush1.msra.mxu0 0.0
        %2061 = vmatprep.subr.mxu0 0.0
        %2062 = vmatpush1.msra.mxu0 0.0
        %2063 = vmatprep.subr.mxu0 0.0
        %2064 = vmatpush1.msra.mxu0 0.0
        %2065 = vmatprep.subr.mxu0 0.0
        %2066 = vmatpush1.msra.mxu0 0.0
        %2067 = vmatprep.subr.mxu0 0.0
        %2068 = vmatpush1.msra.mxu0 0.0
        %2069 = vmatprep.subr.mxu0 0.0
        %2070 = vmatpush1.msra.mxu0 0.0
        %2071 = vmatprep.subr.mxu0 0.0
        %2072 = vmatpush1.msra.mxu0 0.0
        %2073 = vmatprep.subr.mxu0 0.0
        %2074 = vmatpush1.msra.mxu0 0.0
        %2075 = vmatprep.subr.mxu0 0.0
        %2076 = vmatpush1.msra.mxu0 0.0
        %2077 = vmatprep.subr.mxu0 0.0
        %2078 = vmatpush1.msra.mxu0 0.0
        %2079 = vmatprep.subr.mxu0 0.0
        %2080 = vmatpush1.msra.mxu0 0.0
        %2081 = vmatprep.subr.mxu0 0.0
        %2082 = vmatpush1.msra.mxu0 0.0
        %2083 = vmatprep.subr.mxu0 0.0
        %2084 = vmatpush1.msra.mxu0 0.0
        %2085 = vmatprep.subr.mxu0 0.0
        %2086 = vmatpush1.msra.mxu0 0.0
        %2087 = vmatprep.subr.mxu0 0.0
        %2088 = vmatpush1.msra.mxu0 0.0
        %2089 = vmatprep.subr.mxu0 0.0
        %2090 = vmatpush1.msra.mxu0 0.0
        %2091 = vmatprep.subr.mxu0 0.0
        %2092 = vmatpush1.msra.mxu0 0.0
        %2093 = vmatprep.subr.mxu0 0.0
        %2094 = vmatpush1.msra.mxu0 0.0
        %2095 = vmatprep.subr.mxu0 0.0
        %2096 = vmatpush1.msra.mxu0 0.0
        %2097 = vmatprep.subr.mxu0 0.0
        %2098 = vmatpush1.msra.mxu0 0.0
        %2099 = vmatprep.subr.mxu0 0.0
        %2100 = vmatpush1.msra.mxu0 0.0
        %2101 = vmatprep.subr.mxu0 0.0
        %2102 = vmatpush1.msra.mxu0 0.0
        %2103 = vmatprep.subr.mxu0 0.0
        %2104 = vmatpush1.msra.mxu0 0.0
        %2105 = vmatprep.subr.mxu0 0.0
        %2106 = vmatpush1.msra.mxu0 0.0
        %2107 = vmatprep.subr.mxu0 0.0
        %2108 = vmatpush1.msra.mxu0 0.0
        %2109 = vmatprep.subr.mxu0 0.0
        %2110 = vmatpush1.msra.mxu0 0.0
        %2111 = vmatprep.subr.mxu0 0.0
        %2112 = vmatpush1.msra.mxu0 0.0
        %2113 = vmatprep.mubr.f32.mxu0 0.0
        %v2114 = vand.u32 %v1929, 4294901760
        %2115 = vmatmul.mubr.f32.gmra.mrb[0].mxu0 %v2114
        %v2116 = vpop.f32.mrb[0].mxu0
        %v2117 = vadd.f32 %v2014, %v2116
        %v2118 = vpop.f32.mrb[0].mxu0
        %v2119 = vadd.f32 %v2016, %v2118
        %2120 = vmatprep.mubr.f32.mxu0 0.0
        %v2121 = vand.u32 %v1932, 4294901760
        %2122 = vmatmul.mubr.f32.gmra.mrb[0].mxu0 %v2121
        %v2123 = vpop.f32.mrb[0].mxu0
        %v2124 = vadd.f32 %v2025, %v2123
        %v2125 = vpop.f32.mrb[0].mxu0
        %v2126 = vadd.f32 %v2027, %v2125
        %2127 = vdwg.mxu0
        %v2128 = vand.u32 %v1918, 4294901760
        %v2129 = vsub.f32 %v1918, %v2128
        %2130 = vmatprep.subr.mxu0 %v2129
        %v2131 = vand.u32 %v1924, 4294901760
        %v2132 = vsub.f32 %v1924, %v2131
        %2133 = vmatpush1.msra.mxu0 %v2132
        %v2134 = vand.u32 %v1936, 4294901760
        %v2135 = vsub.f32 %v1936, %v2134
        %2136 = vmatprep.subr.mxu0 %v2135
        %v2137 = vand.u32 %v1934, 4294901760
        %v2138 = vsub.f32 %v1934, %v2137
        %2139 = vmatpush1.msra.mxu0 %v2138
        %2140 = vmatprep.subr.mxu0 0.0
        %2141 = vmatpush1.msra.mxu0 0.0
        %2142 = vmatprep.subr.mxu0 0.0
        %2143 = vmatpush1.msra.mxu0 0.0
        %2144 = vmatprep.subr.mxu0 0.0
        %2145 = vmatpush1.msra.mxu0 0.0
        %2146 = vmatprep.subr.mxu0 0.0
        %2147 = vmatpush1.msra.mxu0 0.0
        %2148 = vmatprep.subr.mxu0 0.0
        %2149 = vmatpush1.msra.mxu0 0.0
        %2150 = vmatprep.subr.mxu0 0.0
        %2151 = vmatpush1.msra.mxu0 0.0
        %2152 = vmatprep.subr.mxu0 0.0
        %2153 = vmatpush1.msra.mxu0 0.0
        %2154 = vmatprep.subr.mxu0 0.0
        %2155 = vmatpush1.msra.mxu0 0.0
        %2156 = vmatprep.subr.mxu0 0.0
        %2157 = vmatpush1.msra.mxu0 0.0
        %2158 = vmatprep.subr.mxu0 0.0
        %2159 = vmatpush1.msra.mxu0 0.0
        %2160 = vmatprep.subr.mxu0 0.0
        %2161 = vmatpush1.msra.mxu0 0.0
        %2162 = vmatprep.subr.mxu0 0.0
        %2163 = vmatpush1.msra.mxu0 0.0
        %2164 = vmatprep.subr.mxu0 0.0
        %2165 = vmatpush1.msra.mxu0 0.0
        %2166 = vmatprep.subr.mxu0 0.0
        %2167 = vmatpush1.msra.mxu0 0.0
        %2168 = vmatprep.subr.mxu0 0.0
        %2169 = vmatpush1.msra.mxu0 0.0
        %2170 = vmatprep.subr.mxu0 0.0
        %2171 = vmatpush1.msra.mxu0 0.0
        %2172 = vmatprep.subr.mxu0 0.0
        %2173 = vmatpush1.msra.mxu0 0.0
        %2174 = vmatprep.subr.mxu0 0.0
        %2175 = vmatpush1.msra.mxu0 0.0
        %2176 = vmatprep.subr.mxu0 0.0
        %2177 = vmatpush1.msra.mxu0 0.0
        %2178 = vmatprep.subr.mxu0 0.0
        %2179 = vmatpush1.msra.mxu0 0.0
        %2180 = vmatprep.subr.mxu0 0.0
        %2181 = vmatpush1.msra.mxu0 0.0
        %2182 = vmatprep.subr.mxu0 0.0
        %2183 = vmatpush1.msra.mxu0 0.0
        %2184 = vmatprep.subr.mxu0 0.0
        %2185 = vmatpush1.msra.mxu0 0.0
        %2186 = vmatprep.subr.mxu0 0.0
        %2187 = vmatpush1.msra.mxu0 0.0
        %2188 = vmatprep.subr.mxu0 0.0
        %2189 = vmatpush1.msra.mxu0 0.0
        %2190 = vmatprep.subr.mxu0 0.0
        %2191 = vmatpush1.msra.mxu0 0.0
        %2192 = vmatprep.subr.mxu0 0.0
        %2193 = vmatpush1.msra.mxu0 0.0
        %2194 = vmatprep.subr.mxu0 0.0
        %2195 = vmatpush1.msra.mxu0 0.0
        %2196 = vmatprep.subr.mxu0 0.0
        %2197 = vmatpush1.msra.mxu0 0.0
        %2198 = vmatprep.subr.mxu0 0.0
        %2199 = vmatpush1.msra.mxu0 0.0
        %2200 = vmatprep.mubr.f32.mxu0 0.0
        %v2201 = vand.u32 %v1929, 4294901760
        %v2202 = vsub.f32 %v1929, %v2201
        %2203 = vmatmul.mubr.f32.gmra.mrb[0].mxu0 %v2202
        %v2204 = vpop.f32.mrb[0].mxu0
        %v2205 = vadd.f32 %v2117, %v2204
        %v2206 = vpop.f32.mrb[0].mxu0
        %v2207 = vadd.f32 %v2119, %v2206
        %2208 = vmatprep.mubr.f32.mxu0 0.0
        %v2209 = vand.u32 %v1932, 4294901760
        %v2210 = vsub.f32 %v1932, %v2209
        %2211 = vmatmul.mubr.f32.gmra.mrb[0].mxu0 %v2210
        %v2212 = vpop.f32.mrb[0].mxu0
        %v2213 = vadd.f32 %v2124, %v2212
        %v2214 = vpop.f32.mrb[0].mxu0
        %v2215 = vadd.f32 %v2126, %v2214
        %2216 = vdwg.mxu0
        %v2217 = vand.u32 %v1918, 4294901760
        %2218 = vmatprep.subr.mxu0 %v2217
        %v2219 = vand.u32 %v1924, 4294901760
        %2220 = vmatpush1.msra.mxu0 %v2219
        %v2221 = vand.u32 %v1936, 4294901760
        %2222 = vmatprep.subr.mxu0 %v2221
        %v2223 = vand.u32 %v1934, 4294901760
        %2224 = vmatpush1.msra.mxu0 %v2223
        %2225 = vmatprep.subr.mxu0 0.0
        %2226 = vmatpush1.msra.mxu0 0.0
        %2227 = vmatprep.subr.mxu0 0.0
        %2228 = vmatpush1.msra.mxu0 0.0
        %2229 = vmatprep.subr.mxu0 0.0
        %2230 = vmatpush1.msra.mxu0 0.0
        %2231 = vmatprep.subr.mxu0 0.0
        %2232 = vmatpush1.msra.mxu0 0.0
        %2233 = vmatprep.subr.mxu0 0.0
        %2234 = vmatpush1.msra.mxu0 0.0
        %2235 = vmatprep.subr.mxu0 0.0
        %2236 = vmatpush1.msra.mxu0 0.0
        %2237 = vmatprep.subr.mxu0 0.0
        %2238 = vmatpush1.msra.mxu0 0.0
        %2239 = vmatprep.subr.mxu0 0.0
        %2240 = vmatpush1.msra.mxu0 0.0
        %2241 = vmatprep.subr.mxu0 0.0
        %2242 = vmatpush1.msra.mxu0 0.0
        %2243 = vmatprep.subr.mxu0 0.0
        %2244 = vmatpush1.msra.mxu0 0.0
        %2245 = vmatprep.subr.mxu0 0.0
        %2246 = vmatpush1.msra.mxu0 0.0
        %2247 = vmatprep.subr.mxu0 0.0
        %2248 = vmatpush1.msra.mxu0 0.0
        %2249 = vmatprep.subr.mxu0 0.0
        %2250 = vmatpush1.msra.mxu0 0.0
        %2251 = vmatprep.subr.mxu0 0.0
        %2252 = vmatpush1.msra.mxu0 0.0
        %2253 = vmatprep.subr.mxu0 0.0
        %2254 = vmatpush1.msra.mxu0 0.0
        %2255 = vmatprep.subr.mxu0 0.0
        %2256 = vmatpush1.msra.mxu0 0.0
        %2257 = vmatprep.subr.mxu0 0.0
        %2258 = vmatpush1.msra.mxu0 0.0
        %2259 = vmatprep.subr.mxu0 0.0
        %2260 = vmatpush1.msra.mxu0 0.0
        %2261 = vmatprep.subr.mxu0 0.0
        %2262 = vmatpush1.msra.mxu0 0.0
        %2263 = vmatprep.subr.mxu0 0.0
        %2264 = vmatpush1.msra.mxu0 0.0
        %2265 = vmatprep.subr.mxu0 0.0
        %2266 = vmatpush1.msra.mxu0 0.0
        %2267 = vmatprep.subr.mxu0 0.0
        %2268 = vmatpush1.msra.mxu0 0.0
        %2269 = vmatprep.subr.mxu0 0.0
        %2270 = vmatpush1.msra.mxu0 0.0
        %2271 = vmatprep.subr.mxu0 0.0
        %2272 = vmatpush1.msra.mxu0 0.0
        %2273 = vmatprep.subr.mxu0 0.0
        %2274 = vmatpush1.msra.mxu0 0.0
        %2275 = vmatprep.subr.mxu0 0.0
        %2276 = vmatpush1.msra.mxu0 0.0
        %2277 = vmatprep.subr.mxu0 0.0
        %2278 = vmatpush1.msra.mxu0 0.0
        %2279 = vmatprep.subr.mxu0 0.0
        %2280 = vmatpush1.msra.mxu0 0.0
        %2281 = vmatprep.subr.mxu0 0.0
        %2282 = vmatpush1.msra.mxu0 0.0
        %2283 = vmatprep.subr.mxu0 0.0
        %2284 = vmatpush1.msra.mxu0 0.0
        %2285 = vmatprep.mubr.f32.mxu0 0.0
        %v2286 = vand.u32 %v1929, 4294901760
        %v2287 = vsub.f32 %v1929, %v2286
        %v2288 = vand.u32 %v2287, 4294901760
        %2289 = vmatmul.mubr.f32.gmra.mrb[0].mxu0 %v2288
        %v2290 = vpop.f32.mrb[0].mxu0
        %v2291 = vadd.f32 %v2205, %v2290
        %v2292 = vpop.f32.mrb[0].mxu0
        %v2293 = vadd.f32 %v2207, %v2292
        %2294 = vmatprep.mubr.f32.mxu0 0.0
        %v2295 = vand.u32 %v1932, 4294901760
        %v2296 = vsub.f32 %v1932, %v2295
        %v2297 = vand.u32 %v2296, 4294901760
        %2298 = vmatmul.mubr.f32.gmra.mrb[0].mxu0 %v2297
        %v2299 = vpop.f32.mrb[0].mxu0
        %v2300 = vadd.f32 %v2213, %v2299
        %v2301 = vpop.f32.mrb[0].mxu0
        %v2302 = vadd.f32 %v2215, %v2301
        %2303 = vdwg.mxu0
        %v2304 = vand.u32 %v1918, 4294901760
        %v2305 = vsub.f32 %v1918, %v2304
        %v2306 = vand.u32 %v2305, 4294901760
        %2307 = vmatprep.subr.mxu0 %v2306
        %v2308 = vand.u32 %v1924, 4294901760
        %v2309 = vsub.f32 %v1924, %v2308
        %v2310 = vand.u32 %v2309, 4294901760
        %2311 = vmatpush1.msra.mxu0 %v2310
        %v2312 = vand.u32 %v1936, 4294901760
        %v2313 = vsub.f32 %v1936, %v2312
        %v2314 = vand.u32 %v2313, 4294901760
        %2315 = vmatprep.subr.mxu0 %v2314
        %v2316 = vand.u32 %v1934, 4294901760
        %v2317 = vsub.f32 %v1934, %v2316
        %v2318 = vand.u32 %v2317, 4294901760
        %2319 = vmatpush1.msra.mxu0 %v2318
        %2320 = vmatprep.subr.mxu0 0.0
        %2321 = vmatpush1.msra.mxu0 0.0
        %2322 = vmatprep.subr.mxu0 0.0
        %2323 = vmatpush1.msra.mxu0 0.0
        %2324 = vmatprep.subr.mxu0 0.0
        %2325 = vmatpush1.msra.mxu0 0.0
        %2326 = vmatprep.subr.mxu0 0.0
        %2327 = vmatpush1.msra.mxu0 0.0
        %2328 = vmatprep.subr.mxu0 0.0
        %2329 = vmatpush1.msra.mxu0 0.0
        %2330 = vmatprep.subr.mxu0 0.0
        %2331 = vmatpush1.msra.mxu0 0.0
        %2332 = vmatprep.subr.mxu0 0.0
        %2333 = vmatpush1.msra.mxu0 0.0
        %2334 = vmatprep.subr.mxu0 0.0
        %2335 = vmatpush1.msra.mxu0 0.0
        %2336 = vmatprep.subr.mxu0 0.0
        %2337 = vmatpush1.msra.mxu0 0.0
        %2338 = vmatprep.subr.mxu0 0.0
        %2339 = vmatpush1.msra.mxu0 0.0
        %2340 = vmatprep.subr.mxu0 0.0
        %2341 = vmatpush1.msra.mxu0 0.0
        %2342 = vmatprep.subr.mxu0 0.0
        %2343 = vmatpush1.msra.mxu0 0.0
        %2344 = vmatprep.subr.mxu0 0.0
        %2345 = vmatpush1.msra.mxu0 0.0
        %2346 = vmatprep.subr.mxu0 0.0
        %2347 = vmatpush1.msra.mxu0 0.0
        %2348 = vmatprep.subr.mxu0 0.0
        %2349 = vmatpush1.msra.mxu0 0.0
        %2350 = vmatprep.subr.mxu0 0.0
        %2351 = vmatpush1.msra.mxu0 0.0
        %2352 = vmatprep.subr.mxu0 0.0
        %2353 = vmatpush1.msra.mxu0 0.0
        %2354 = vmatprep.subr.mxu0 0.0
        %2355 = vmatpush1.msra.mxu0 0.0
        %2356 = vmatprep.subr.mxu0 0.0
        %2357 = vmatpush1.msra.mxu0 0.0
        %2358 = vmatprep.subr.mxu0 0.0
        %2359 = vmatpush1.msra.mxu0 0.0
        %2360 = vmatprep.subr.mxu0 0.0
        %2361 = vmatpush1.msra.mxu0 0.0
        %2362 = vmatprep.subr.mxu0 0.0
        %2363 = vmatpush1.msra.mxu0 0.0
        %2364 = vmatprep.subr.mxu0 0.0
        %2365 = vmatpush1.msra.mxu0 0.0
        %2366 = vmatprep.subr.mxu0 0.0
        %2367 = vmatpush1.msra.mxu0 0.0
        %2368 = vmatprep.subr.mxu0 0.0
        %2369 = vmatpush1.msra.mxu0 0.0
        %2370 = vmatprep.subr.mxu0 0.0
        %2371 = vmatpush1.msra.mxu0 0.0
        %2372 = vmatprep.subr.mxu0 0.0
        %2373 = vmatpush1.msra.mxu0 0.0
        %2374 = vmatprep.subr.mxu0 0.0
        %2375 = vmatpush1.msra.mxu0 0.0
        %2376 = vmatprep.subr.mxu0 0.0
        %2377 = vmatpush1.msra.mxu0 0.0
        %2378 = vmatprep.subr.mxu0 0.0
        %2379 = vmatpush1.msra.mxu0 0.0
        %2380 = vmatprep.mubr.f32.mxu0 0.0
        %v2381 = vand.u32 %v1929, 4294901760
        %2382 = vmatmul.mubr.f32.gmra.mrb[0].mxu0 %v2381
        %v2383 = vpop.f32.mrb[0].mxu0
        %v2384 = vadd.f32 %v2291, %v2383
        %v2385 = vpop.f32.mrb[0].mxu0
        %v2386 = vadd.f32 %v2293, %v2385
        %2387 = vmatprep.mubr.f32.mxu0 0.0
        %v2388 = vand.u32 %v1932, 4294901760
        %2389 = vmatmul.mubr.f32.gmra.mrb[0].mxu0 %v2388
        %v2390 = vpop.f32.mrb[0].mxu0
        %v2391 = vadd.f32 %v2300, %v2390
        %v2392 = vpop.f32.mrb[0].mxu0
        %v2393 = vadd.f32 %v2302, %v2392
        %2394 = vdwg.mxu0
        %v2395 = vand.u32 %v1918, 4294901760
        %2396 = vmatprep.subr.mxu0 %v2395
        %v2397 = vand.u32 %v1924, 4294901760
        %2398 = vmatpush1.msra.mxu0 %v2397
        %v2399 = vand.u32 %v1936, 4294901760
        %2400 = vmatprep.subr.mxu0 %v2399
        %v2401 = vand.u32 %v1934, 4294901760
        %2402 = vmatpush1.msra.mxu0 %v2401
        %2403 = vmatprep.subr.mxu0 0.0
        %2404 = vmatpush1.msra.mxu0 0.0
        %2405 = vmatprep.subr.mxu0 0.0
        %2406 = vmatpush1.msra.mxu0 0.0
        %2407 = vmatprep.subr.mxu0 0.0
        %2408 = vmatpush1.msra.mxu0 0.0
        %2409 = vmatprep.subr.mxu0 0.0
        %2410 = vmatpush1.msra.mxu0 0.0
        %2411 = vmatprep.subr.mxu0 0.0
        %2412 = vmatpush1.msra.mxu0 0.0
        %2413 = vmatprep.subr.mxu0 0.0
        %2414 = vmatpush1.msra.mxu0 0.0
        %2415 = vmatprep.subr.mxu0 0.0
        %2416 = vmatpush1.msra.mxu0 0.0
        %2417 = vmatprep.subr.mxu0 0.0
        %2418 = vmatpush1.msra.mxu0 0.0
        %2419 = vmatprep.subr.mxu0 0.0
        %2420 = vmatpush1.msra.mxu0 0.0
        %2421 = vmatprep.subr.mxu0 0.0
        %2422 = vmatpush1.msra.mxu0 0.0
        %2423 = vmatprep.subr.mxu0 0.0
        %2424 = vmatpush1.msra.mxu0 0.0
        %2425 = vmatprep.subr.mxu0 0.0
        %2426 = vmatpush1.msra.mxu0 0.0
        %2427 = vmatprep.subr.mxu0 0.0
        %2428 = vmatpush1.msra.mxu0 0.0
        %2429 = vmatprep.subr.mxu0 0.0
        %2430 = vmatpush1.msra.mxu0 0.0
        %2431 = vmatprep.subr.mxu0 0.0
        %2432 = vmatpush1.msra.mxu0 0.0
        %2433 = vmatprep.subr.mxu0 0.0
        %2434 = vmatpush1.msra.mxu0 0.0
        %2435 = vmatprep.subr.mxu0 0.0
        %2436 = vmatpush1.msra.mxu0 0.0
        %2437 = vmatprep.subr.mxu0 0.0
        %2438 = vmatpush1.msra.mxu0 0.0
        %2439 = vmatprep.subr.mxu0 0.0
        %2440 = vmatpush1.msra.mxu0 0.0
        %2441 = vmatprep.subr.mxu0 0.0
        %2442 = vmatpush1.msra.mxu0 0.0
        %2443 = vmatprep.subr.mxu0 0.0
        %2444 = vmatpush1.msra.mxu0 0.0
        %2445 = vmatprep.subr.mxu0 0.0
        %2446 = vmatpush1.msra.mxu0 0.0
        %2447 = vmatprep.subr.mxu0 0.0
        %2448 = vmatpush1.msra.mxu0 0.0
        %2449 = vmatprep.subr.mxu0 0.0
        %2450 = vmatpush1.msra.mxu0 0.0
        %2451 = vmatprep.subr.mxu0 0.0
        %2452 = vmatpush1.msra.mxu0 0.0
        %2453 = vmatprep.subr.mxu0 0.0
        %2454 = vmatpush1.msra.mxu0 0.0
        %2455 = vmatprep.subr.mxu0 0.0
        %2456 = vmatpush1.msra.mxu0 0.0
        %2457 = vmatprep.subr.mxu0 0.0
        %2458 = vmatpush1.msra.mxu0 0.0
        %2459 = vmatprep.subr.mxu0 0.0
        %2460 = vmatpush1.msra.mxu0 0.0
        %2461 = vmatprep.subr.mxu0 0.0
        %2462 = vmatpush1.msra.mxu0 0.0
        %2463 = vmatprep.mubr.f32.mxu0 0.0
        %v2464 = vand.u32 %v1929, 4294901760
        %2465 = vmatmul.mubr.f32.gmra.mrb[0].mxu0 %v2464
        %v2466 = vpop.f32.mrb[0].mxu0
        %v2467 = vadd.f32 %v2384, %v2466
        %v2468 = vpop.f32.mrb[0].mxu0
        %v2469 = vadd.f32 %v2386, %v2468
        %2470 = vmatprep.mubr.f32.mxu0 0.0
        %v2471 = vand.u32 %v1932, 4294901760
        %2472 = vmatmul.mubr.f32.gmra.mrb[0].mxu0 %v2471
        %v2473 = vpop.f32.mrb[0].mxu0
        %v2474 = vadd.f32 %v2391, %v2473
        %v2475 = vpop.f32.mrb[0].mxu0
        %v2476 = vadd.f32 %v2393, %v2475
        %2477 = vdwg.mxu0
        %v2478 = vadd.f32 %v1908, %v2467
        %v2479 = vadd.f32 %v1909, %v2469
        %v2480 = vadd.f32 %v1910, %v2474
        %v2481 = vadd.f32 %v1911, %v2476
        %s2482 = scalar_lea.vmem [#allocation3], 64
        %v2483 = vld [vmem:[%s2482] sm:$0xff]
        %v2484 = vld [vmem:[%s2482 + $0x8] sm:$0x3]
        %2485 = vrot.lane.b32.xlu0 %v214, 111
        %v2486 = vpop.permute.xlu0 %2485
        %2487 = vrot.lane.b32.xlu0 %v215, 111
        %v2488 = vpop.permute.xlu0 %2487
        %2489 = vrot.lane.b32.xlu0 %v216, 111
        %v2490 = vpop.permute.xlu0 %2489
        %2491 = vrot.lane.b32.xlu0 %v217, 111
        %v2492 = vpop.permute.xlu0 %2491
        %vm2493 = vcmask 908288
        %v2494 = vsel %vm2493, %v2486, %v2488
        %v2495 = vsel %vm2493, %v2490, %v2492
        %v2499 = vsel %vm240, %v2483, 0
        %v2502 = vsel %vm240, %v2484, 0
        %v2504 = vsel %vm247, %v2495, 0
        %v2506 = vsel %vm247, %v2492, 0
        %v2508 = vand.u32 %v2488, 4294901760
        %2509 = vmatprep.subr.mxu0 %v2508
        %v2510 = vand.u32 %v2494, 4294901760
        %2511 = vmatpush1.msra.mxu0 %v2510
        %v2512 = vand.u32 %v2506, 4294901760
        %2513 = vmatprep.subr.mxu0 %v2512
        %v2514 = vand.u32 %v2504, 4294901760
        %2515 = vmatpush1.msra.mxu0 %v2514
        %2516 = vmatprep.subr.mxu0 0.0
        %2517 = vmatpush1.msra.mxu0 0.0
        %2518 = vmatprep.subr.mxu0 0.0
        %2519 = vmatpush1.msra.mxu0 0.0
        %2520 = vmatprep.subr.mxu0 0.0
        %2521 = vmatpush1.msra.mxu0 0.0
        %2522 = vmatprep.subr.mxu0 0.0
        %2523 = vmatpush1.msra.mxu0 0.0
        %2524 = vmatprep.subr.mxu0 0.0
        %2525 = vmatpush1.msra.mxu0 0.0
        %2526 = vmatprep.subr.mxu0 0.0
        %2527 = vmatpush1.msra.mxu0 0.0
        %2528 = vmatprep.subr.mxu0 0.0
        %2529 = vmatpush1.msra.mxu0 0.0
        %2530 = vmatprep.subr.mxu0 0.0
        %2531 = vmatpush1.msra.mxu0 0.0
        %2532 = vmatprep.subr.mxu0 0.0
        %2533 = vmatpush1.msra.mxu0 0.0
        %2534 = vmatprep.subr.mxu0 0.0
        %2535 = vmatpush1.msra.mxu0 0.0
        %2536 = vmatprep.subr.mxu0 0.0
        %2537 = vmatpush1.msra.mxu0 0.0
        %2538 = vmatprep.subr.mxu0 0.0
        %2539 = vmatpush1.msra.mxu0 0.0
        %2540 = vmatprep.subr.mxu0 0.0
        %2541 = vmatpush1.msra.mxu0 0.0
        %2542 = vmatprep.subr.mxu0 0.0
        %2543 = vmatpush1.msra.mxu0 0.0
        %2544 = vmatprep.subr.mxu0 0.0
        %2545 = vmatpush1.msra.mxu0 0.0
        %2546 = vmatprep.subr.mxu0 0.0
        %2547 = vmatpush1.msra.mxu0 0.0
        %2548 = vmatprep.subr.mxu0 0.0
        %2549 = vmatpush1.msra.mxu0 0.0
        %2550 = vmatprep.subr.mxu0 0.0
        %2551 = vmatpush1.msra.mxu0 0.0
        %2552 = vmatprep.subr.mxu0 0.0
        %2553 = vmatpush1.msra.mxu0 0.0
        %2554 = vmatprep.subr.mxu0 0.0
        %2555 = vmatpush1.msra.mxu0 0.0
        %2556 = vmatprep.subr.mxu0 0.0
        %2557 = vmatpush1.msra.mxu0 0.0
        %2558 = vmatprep.subr.mxu0 0.0
        %2559 = vmatpush1.msra.mxu0 0.0
        %2560 = vmatprep.subr.mxu0 0.0
        %2561 = vmatpush1.msra.mxu0 0.0
        %2562 = vmatprep.subr.mxu0 0.0
        %2563 = vmatpush1.msra.mxu0 0.0
        %2564 = vmatprep.subr.mxu0 0.0
        %2565 = vmatpush1.msra.mxu0 0.0
        %2566 = vmatprep.subr.mxu0 0.0
        %2567 = vmatpush1.msra.mxu0 0.0
        %2568 = vmatprep.subr.mxu0 0.0
        %2569 = vmatpush1.msra.mxu0 0.0
        %2570 = vmatprep.subr.mxu0 0.0
        %2571 = vmatpush1.msra.mxu0 0.0
        %2572 = vmatprep.subr.mxu0 0.0
        %2573 = vmatpush1.msra.mxu0 0.0
        %2574 = vmatprep.subr.mxu0 0.0
        %2575 = vmatpush1.msra.mxu0 0.0
        %2576 = vmatprep.mubr.f32.mxu0 0.0
        %v2577 = vand.u32 %v2499, 4294901760
        %v2578 = vsub.f32 %v2499, %v2577
        %v2579 = vand.u32 %v2578, 4294901760
        %v2580 = vsub.f32 %v2578, %v2579
        %v2581 = vand.u32 %v2580, 4294901760
        %2582 = vmatmul.mubr.f32.gmra.mrb[0].mxu0 %v2581
        %v2583 = vpop.f32.mrb[0].mxu0
        %v2584 = vadd.f32 0.0, %v2583
        %v2585 = vpop.f32.mrb[0].mxu0
        %v2586 = vadd.f32 0.0, %v2585
        %2587 = vmatprep.mubr.f32.mxu0 0.0
        %v2588 = vand.u32 %v2502, 4294901760
        %v2589 = vsub.f32 %v2502, %v2588
        %v2590 = vand.u32 %v2589, 4294901760
        %v2591 = vsub.f32 %v2589, %v2590
        %v2592 = vand.u32 %v2591, 4294901760
        %2593 = vmatmul.mubr.f32.gmra.mrb[0].mxu0 %v2592
        %v2594 = vpop.f32.mrb[0].mxu0
        %v2595 = vadd.f32 0.0, %v2594
        %v2596 = vpop.f32.mrb[0].mxu0
        %v2597 = vadd.f32 0.0, %v2596
        %2598 = vdwg.mxu0
        %v2599 = vand.u32 %v2488, 4294901760
        %v2600 = vsub.f32 %v2488, %v2599
        %v2601 = vand.u32 %v2600, 4294901760
        %v2602 = vsub.f32 %v2600, %v2601
        %v2603 = vand.u32 %v2602, 4294901760
        %2604 = vmatprep.subr.mxu0 %v2603
        %v2605 = vand.u32 %v2494, 4294901760
        %v2606 = vsub.f32 %v2494, %v2605
        %v2607 = vand.u32 %v2606, 4294901760
        %v2608 = vsub.f32 %v2606, %v2607
        %v2609 = vand.u32 %v2608, 4294901760
        %2610 = vmatpush1.msra.mxu0 %v2609
        %v2611 = vand.u32 %v2506, 4294901760
        %v2612 = vsub.f32 %v2506, %v2611
        %v2613 = vand.u32 %v2612, 4294901760
        %v2614 = vsub.f32 %v2612, %v2613
        %v2615 = vand.u32 %v2614, 4294901760
        %2616 = vmatprep.subr.mxu0 %v2615
        %v2617 = vand.u32 %v2504, 4294901760
        %v2618 = vsub.f32 %v2504, %v2617
        %v2619 = vand.u32 %v2618, 4294901760
        %v2620 = vsub.f32 %v2618, %v2619
        %v2621 = vand.u32 %v2620, 4294901760
        %2622 = vmatpush1.msra.mxu0 %v2621
        %2623 = vmatprep.subr.mxu0 0.0
        %2624 = vmatpush1.msra.mxu0 0.0
        %2625 = vmatprep.subr.mxu0 0.0
        %2626 = vmatpush1.msra.mxu0 0.0
        %2627 = vmatprep.subr.mxu0 0.0
        %2628 = vmatpush1.msra.mxu0 0.0
        %2629 = vmatprep.subr.mxu0 0.0
        %2630 = vmatpush1.msra.mxu0 0.0
        %2631 = vmatprep.subr.mxu0 0.0
        %2632 = vmatpush1.msra.mxu0 0.0
        %2633 = vmatprep.subr.mxu0 0.0
        %2634 = vmatpush1.msra.mxu0 0.0
        %2635 = vmatprep.subr.mxu0 0.0
        %2636 = vmatpush1.msra.mxu0 0.0
        %2637 = vmatprep.subr.mxu0 0.0
        %2638 = vmatpush1.msra.mxu0 0.0
        %2639 = vmatprep.subr.mxu0 0.0
        %2640 = vmatpush1.msra.mxu0 0.0
        %2641 = vmatprep.subr.mxu0 0.0
        %2642 = vmatpush1.msra.mxu0 0.0
        %2643 = vmatprep.subr.mxu0 0.0
        %2644 = vmatpush1.msra.mxu0 0.0
        %2645 = vmatprep.subr.mxu0 0.0
        %2646 = vmatpush1.msra.mxu0 0.0
        %2647 = vmatprep.subr.mxu0 0.0
        %2648 = vmatpush1.msra.mxu0 0.0
        %2649 = vmatprep.subr.mxu0 0.0
        %2650 = vmatpush1.msra.mxu0 0.0
        %2651 = vmatprep.subr.mxu0 0.0
        %2652 = vmatpush1.msra.mxu0 0.0
        %2653 = vmatprep.subr.mxu0 0.0
        %2654 = vmatpush1.msra.mxu0 0.0
        %2655 = vmatprep.subr.mxu0 0.0
        %2656 = vmatpush1.msra.mxu0 0.0
        %2657 = vmatprep.subr.mxu0 0.0
        %2658 = vmatpush1.msra.mxu0 0.0
        %2659 = vmatprep.subr.mxu0 0.0
        %2660 = vmatpush1.msra.mxu0 0.0
        %2661 = vmatprep.subr.mxu0 0.0
        %2662 = vmatpush1.msra.mxu0 0.0
        %2663 = vmatprep.subr.mxu0 0.0
        %2664 = vmatpush1.msra.mxu0 0.0
        %2665 = vmatprep.subr.mxu0 0.0
        %2666 = vmatpush1.msra.mxu0 0.0
        %2667 = vmatprep.subr.mxu0 0.0
        %2668 = vmatpush1.msra.mxu0 0.0
        %2669 = vmatprep.subr.mxu0 0.0
        %2670 = vmatpush1.msra.mxu0 0.0
        %2671 = vmatprep.subr.mxu0 0.0
        %2672 = vmatpush1.msra.mxu0 0.0
        %2673 = vmatprep.subr.mxu0 0.0
        %2674 = vmatpush1.msra.mxu0 0.0
        %2675 = vmatprep.subr.mxu0 0.0
        %2676 = vmatpush1.msra.mxu0 0.0
        %2677 = vmatprep.subr.mxu0 0.0
        %2678 = vmatpush1.msra.mxu0 0.0
        %2679 = vmatprep.subr.mxu0 0.0
        %2680 = vmatpush1.msra.mxu0 0.0
        %2681 = vmatprep.subr.mxu0 0.0
        %2682 = vmatpush1.msra.mxu0 0.0
        %2683 = vmatprep.mubr.f32.mxu0 0.0
        %v2684 = vand.u32 %v2499, 4294901760
        %2685 = vmatmul.mubr.f32.gmra.mrb[0].mxu0 %v2684
        %v2686 = vpop.f32.mrb[0].mxu0
        %v2687 = vadd.f32 %v2584, %v2686
        %v2688 = vpop.f32.mrb[0].mxu0
        %v2689 = vadd.f32 %v2586, %v2688
        %2690 = vmatprep.mubr.f32.mxu0 0.0
        %v2691 = vand.u32 %v2502, 4294901760
        %2692 = vmatmul.mubr.f32.gmra.mrb[0].mxu0 %v2691
        %v2693 = vpop.f32.mrb[0].mxu0
        %v2694 = vadd.f32 %v2595, %v2693
        %v2695 = vpop.f32.mrb[0].mxu0
        %v2696 = vadd.f32 %v2597, %v2695
        %2697 = vdwg.mxu0
        %v2698 = vand.u32 %v2488, 4294901760
        %v2699 = vsub.f32 %v2488, %v2698
        %2700 = vmatprep.subr.mxu0 %v2699
        %v2701 = vand.u32 %v2494, 4294901760
        %v2702 = vsub.f32 %v2494, %v2701
        %2703 = vmatpush1.msra.mxu0 %v2702
        %v2704 = vand.u32 %v2506, 4294901760
        %v2705 = vsub.f32 %v2506, %v2704
        %2706 = vmatprep.subr.mxu0 %v2705
        %v2707 = vand.u32 %v2504, 4294901760
        %v2708 = vsub.f32 %v2504, %v2707
        %2709 = vmatpush1.msra.mxu0 %v2708
        %2710 = vmatprep.subr.mxu0 0.0
        %2711 = vmatpush1.msra.mxu0 0.0
        %2712 = vmatprep.subr.mxu0 0.0
        %2713 = vmatpush1.msra.mxu0 0.0
        %2714 = vmatprep.subr.mxu0 0.0
        %2715 = vmatpush1.msra.mxu0 0.0
        %2716 = vmatprep.subr.mxu0 0.0
        %2717 = vmatpush1.msra.mxu0 0.0
        %2718 = vmatprep.subr.mxu0 0.0
        %2719 = vmatpush1.msra.mxu0 0.0
        %2720 = vmatprep.subr.mxu0 0.0
        %2721 = vmatpush1.msra.mxu0 0.0
        %2722 = vmatprep.subr.mxu0 0.0
        %2723 = vmatpush1.msra.mxu0 0.0
        %2724 = vmatprep.subr.mxu0 0.0
        %2725 = vmatpush1.msra.mxu0 0.0
        %2726 = vmatprep.subr.mxu0 0.0
        %2727 = vmatpush1.msra.mxu0 0.0
        %2728 = vmatprep.subr.mxu0 0.0
        %2729 = vmatpush1.msra.mxu0 0.0
        %2730 = vmatprep.subr.mxu0 0.0
        %2731 = vmatpush1.msra.mxu0 0.0
        %2732 = vmatprep.subr.mxu0 0.0
        %2733 = vmatpush1.msra.mxu0 0.0
        %2734 = vmatprep.subr.mxu0 0.0
        %2735 = vmatpush1.msra.mxu0 0.0
        %2736 = vmatprep.subr.mxu0 0.0
        %2737 = vmatpush1.msra.mxu0 0.0
        %2738 = vmatprep.subr.mxu0 0.0
        %2739 = vmatpush1.msra.mxu0 0.0
        %2740 = vmatprep.subr.mxu0 0.0
        %2741 = vmatpush1.msra.mxu0 0.0
        %2742 = vmatprep.subr.mxu0 0.0
        %2743 = vmatpush1.msra.mxu0 0.0
        %2744 = vmatprep.subr.mxu0 0.0
        %2745 = vmatpush1.msra.mxu0 0.0
        %2746 = vmatprep.subr.mxu0 0.0
        %2747 = vmatpush1.msra.mxu0 0.0
        %2748 = vmatprep.subr.mxu0 0.0
        %2749 = vmatpush1.msra.mxu0 0.0
        %2750 = vmatprep.subr.mxu0 0.0
        %2751 = vmatpush1.msra.mxu0 0.0
        %2752 = vmatprep.subr.mxu0 0.0
        %2753 = vmatpush1.msra.mxu0 0.0
        %2754 = vmatprep.subr.mxu0 0.0
        %2755 = vmatpush1.msra.mxu0 0.0
        %2756 = vmatprep.subr.mxu0 0.0
        %2757 = vmatpush1.msra.mxu0 0.0
        %2758 = vmatprep.subr.mxu0 0.0
        %2759 = vmatpush1.msra.mxu0 0.0
        %2760 = vmatprep.subr.mxu0 0.0
        %2761 = vmatpush1.msra.mxu0 0.0
        %2762 = vmatprep.subr.mxu0 0.0
        %2763 = vmatpush1.msra.mxu0 0.0
        %2764 = vmatprep.subr.mxu0 0.0
        %2765 = vmatpush1.msra.mxu0 0.0
        %2766 = vmatprep.subr.mxu0 0.0
        %2767 = vmatpush1.msra.mxu0 0.0
        %2768 = vmatprep.subr.mxu0 0.0
        %2769 = vmatpush1.msra.mxu0 0.0
        %2770 = vmatprep.mubr.f32.mxu0 0.0
        %v2771 = vand.u32 %v2499, 4294901760
        %v2772 = vsub.f32 %v2499, %v2771
        %2773 = vmatmul.mubr.f32.gmra.mrb[0].mxu0 %v2772
        %v2774 = vpop.f32.mrb[0].mxu0
        %v2775 = vadd.f32 %v2687, %v2774
        %v2776 = vpop.f32.mrb[0].mxu0
        %v2777 = vadd.f32 %v2689, %v2776
        %2778 = vmatprep.mubr.f32.mxu0 0.0
        %v2779 = vand.u32 %v2502, 4294901760
        %v2780 = vsub.f32 %v2502, %v2779
        %2781 = vmatmul.mubr.f32.gmra.mrb[0].mxu0 %v2780
        %v2782 = vpop.f32.mrb[0].mxu0
        %v2783 = vadd.f32 %v2694, %v2782
        %v2784 = vpop.f32.mrb[0].mxu0
        %v2785 = vadd.f32 %v2696, %v2784
        %2786 = vdwg.mxu0
        %v2787 = vand.u32 %v2488, 4294901760
        %2788 = vmatprep.subr.mxu0 %v2787
        %v2789 = vand.u32 %v2494, 4294901760
        %2790 = vmatpush1.msra.mxu0 %v2789
        %v2791 = vand.u32 %v2506, 4294901760
        %2792 = vmatprep.subr.mxu0 %v2791
        %v2793 = vand.u32 %v2504, 4294901760
        %2794 = vmatpush1.msra.mxu0 %v2793
        %2795 = vmatprep.subr.mxu0 0.0
        %2796 = vmatpush1.msra.mxu0 0.0
        %2797 = vmatprep.subr.mxu0 0.0
        %2798 = vmatpush1.msra.mxu0 0.0
        %2799 = vmatprep.subr.mxu0 0.0
        %2800 = vmatpush1.msra.mxu0 0.0
        %2801 = vmatprep.subr.mxu0 0.0
        %2802 = vmatpush1.msra.mxu0 0.0
        %2803 = vmatprep.subr.mxu0 0.0
        %2804 = vmatpush1.msra.mxu0 0.0
        %2805 = vmatprep.subr.mxu0 0.0
        %2806 = vmatpush1.msra.mxu0 0.0
        %2807 = vmatprep.subr.mxu0 0.0
        %2808 = vmatpush1.msra.mxu0 0.0
        %2809 = vmatprep.subr.mxu0 0.0
        %2810 = vmatpush1.msra.mxu0 0.0
        %2811 = vmatprep.subr.mxu0 0.0
        %2812 = vmatpush1.msra.mxu0 0.0
        %2813 = vmatprep.subr.mxu0 0.0
        %2814 = vmatpush1.msra.mxu0 0.0
        %2815 = vmatprep.subr.mxu0 0.0
        %2816 = vmatpush1.msra.mxu0 0.0
        %2817 = vmatprep.subr.mxu0 0.0
        %2818 = vmatpush1.msra.mxu0 0.0
        %2819 = vmatprep.subr.mxu0 0.0
        %2820 = vmatpush1.msra.mxu0 0.0
        %2821 = vmatprep.subr.mxu0 0.0
        %2822 = vmatpush1.msra.mxu0 0.0
        %2823 = vmatprep.subr.mxu0 0.0
        %2824 = vmatpush1.msra.mxu0 0.0
        %2825 = vmatprep.subr.mxu0 0.0
        %2826 = vmatpush1.msra.mxu0 0.0
        %2827 = vmatprep.subr.mxu0 0.0
        %2828 = vmatpush1.msra.mxu0 0.0
        %2829 = vmatprep.subr.mxu0 0.0
        %2830 = vmatpush1.msra.mxu0 0.0
        %2831 = vmatprep.subr.mxu0 0.0
        %2832 = vmatpush1.msra.mxu0 0.0
        %2833 = vmatprep.subr.mxu0 0.0
        %2834 = vmatpush1.msra.mxu0 0.0
        %2835 = vmatprep.subr.mxu0 0.0
        %2836 = vmatpush1.msra.mxu0 0.0
        %2837 = vmatprep.subr.mxu0 0.0
        %2838 = vmatpush1.msra.mxu0 0.0
        %2839 = vmatprep.subr.mxu0 0.0
        %2840 = vmatpush1.msra.mxu0 0.0
        %2841 = vmatprep.subr.mxu0 0.0
        %2842 = vmatpush1.msra.mxu0 0.0
        %2843 = vmatprep.subr.mxu0 0.0
        %2844 = vmatpush1.msra.mxu0 0.0
        %2845 = vmatprep.subr.mxu0 0.0
        %2846 = vmatpush1.msra.mxu0 0.0
        %2847 = vmatprep.subr.mxu0 0.0
        %2848 = vmatpush1.msra.mxu0 0.0
        %2849 = vmatprep.subr.mxu0 0.0
        %2850 = vmatpush1.msra.mxu0 0.0
        %2851 = vmatprep.subr.mxu0 0.0
        %2852 = vmatpush1.msra.mxu0 0.0
        %2853 = vmatprep.subr.mxu0 0.0
        %2854 = vmatpush1.msra.mxu0 0.0
        %2855 = vmatprep.mubr.f32.mxu0 0.0
        %v2856 = vand.u32 %v2499, 4294901760
        %v2857 = vsub.f32 %v2499, %v2856
        %v2858 = vand.u32 %v2857, 4294901760
        %2859 = vmatmul.mubr.f32.gmra.mrb[0].mxu0 %v2858
        %v2860 = vpop.f32.mrb[0].mxu0
        %v2861 = vadd.f32 %v2775, %v2860
        %v2862 = vpop.f32.mrb[0].mxu0
        %v2863 = vadd.f32 %v2777, %v2862
        %2864 = vmatprep.mubr.f32.mxu0 0.0
        %v2865 = vand.u32 %v2502, 4294901760
        %v2866 = vsub.f32 %v2502, %v2865
        %v2867 = vand.u32 %v2866, 4294901760
        %2868 = vmatmul.mubr.f32.gmra.mrb[0].mxu0 %v2867
        %v2869 = vpop.f32.mrb[0].mxu0
        %v2870 = vadd.f32 %v2783, %v2869
        %v2871 = vpop.f32.mrb[0].mxu0
        %v2872 = vadd.f32 %v2785, %v2871
        %2873 = vdwg.mxu0
        %v2874 = vand.u32 %v2488, 4294901760
        %v2875 = vsub.f32 %v2488, %v2874
        %v2876 = vand.u32 %v2875, 4294901760
        %2877 = vmatprep.subr.mxu0 %v2876
        %v2878 = vand.u32 %v2494, 4294901760
        %v2879 = vsub.f32 %v2494, %v2878
        %v2880 = vand.u32 %v2879, 4294901760
        %2881 = vmatpush1.msra.mxu0 %v2880
        %v2882 = vand.u32 %v2506, 4294901760
        %v2883 = vsub.f32 %v2506, %v2882
        %v2884 = vand.u32 %v2883, 4294901760
        %2885 = vmatprep.subr.mxu0 %v2884
        %v2886 = vand.u32 %v2504, 4294901760
        %v2887 = vsub.f32 %v2504, %v2886
        %v2888 = vand.u32 %v2887, 4294901760
        %2889 = vmatpush1.msra.mxu0 %v2888
        %2890 = vmatprep.subr.mxu0 0.0
        %2891 = vmatpush1.msra.mxu0 0.0
        %2892 = vmatprep.subr.mxu0 0.0
        %2893 = vmatpush1.msra.mxu0 0.0
        %2894 = vmatprep.subr.mxu0 0.0
        %2895 = vmatpush1.msra.mxu0 0.0
        %2896 = vmatprep.subr.mxu0 0.0
        %2897 = vmatpush1.msra.mxu0 0.0
        %2898 = vmatprep.subr.mxu0 0.0
        %2899 = vmatpush1.msra.mxu0 0.0
        %2900 = vmatprep.subr.mxu0 0.0
        %2901 = vmatpush1.msra.mxu0 0.0
        %2902 = vmatprep.subr.mxu0 0.0
        %2903 = vmatpush1.msra.mxu0 0.0
        %2904 = vmatprep.subr.mxu0 0.0
        %2905 = vmatpush1.msra.mxu0 0.0
        %2906 = vmatprep.subr.mxu0 0.0
        %2907 = vmatpush1.msra.mxu0 0.0
        %2908 = vmatprep.subr.mxu0 0.0
        %2909 = vmatpush1.msra.mxu0 0.0
        %2910 = vmatprep.subr.mxu0 0.0
        %2911 = vmatpush1.msra.mxu0 0.0
        %2912 = vmatprep.subr.mxu0 0.0
        %2913 = vmatpush1.msra.mxu0 0.0
        %2914 = vmatprep.subr.mxu0 0.0
        %2915 = vmatpush1.msra.mxu0 0.0
        %2916 = vmatprep.subr.mxu0 0.0
        %2917 = vmatpush1.msra.mxu0 0.0
        %2918 = vmatprep.subr.mxu0 0.0
        %2919 = vmatpush1.msra.mxu0 0.0
        %2920 = vmatprep.subr.mxu0 0.0
        %2921 = vmatpush1.msra.mxu0 0.0
        %2922 = vmatprep.subr.mxu0 0.0
        %2923 = vmatpush1.msra.mxu0 0.0
        %2924 = vmatprep.subr.mxu0 0.0
        %2925 = vmatpush1.msra.mxu0 0.0
        %2926 = vmatprep.subr.mxu0 0.0
        %2927 = vmatpush1.msra.mxu0 0.0
        %2928 = vmatprep.subr.mxu0 0.0
        %2929 = vmatpush1.msra.mxu0 0.0
        %2930 = vmatprep.subr.mxu0 0.0
        %2931 = vmatpush1.msra.mxu0 0.0
        %2932 = vmatprep.subr.mxu0 0.0
        %2933 = vmatpush1.msra.mxu0 0.0
        %2934 = vmatprep.subr.mxu0 0.0
        %2935 = vmatpush1.msra.mxu0 0.0
        %2936 = vmatprep.subr.mxu0 0.0
        %2937 = vmatpush1.msra.mxu0 0.0
        %2938 = vmatprep.subr.mxu0 0.0
        %2939 = vmatpush1.msra.mxu0 0.0
        %2940 = vmatprep.subr.mxu0 0.0
        %2941 = vmatpush1.msra.mxu0 0.0
        %2942 = vmatprep.subr.mxu0 0.0
        %2943 = vmatpush1.msra.mxu0 0.0
        %2944 = vmatprep.subr.mxu0 0.0
        %2945 = vmatpush1.msra.mxu0 0.0
        %2946 = vmatprep.subr.mxu0 0.0
        %2947 = vmatpush1.msra.mxu0 0.0
        %2948 = vmatprep.subr.mxu0 0.0
        %2949 = vmatpush1.msra.mxu0 0.0
        %2950 = vmatprep.mubr.f32.mxu0 0.0
        %v2951 = vand.u32 %v2499, 4294901760
        %2952 = vmatmul.mubr.f32.gmra.mrb[0].mxu0 %v2951
        %v2953 = vpop.f32.mrb[0].mxu0
        %v2954 = vadd.f32 %v2861, %v2953
        %v2955 = vpop.f32.mrb[0].mxu0
        %v2956 = vadd.f32 %v2863, %v2955
        %2957 = vmatprep.mubr.f32.mxu0 0.0
        %v2958 = vand.u32 %v2502, 4294901760
        %2959 = vmatmul.mubr.f32.gmra.mrb[0].mxu0 %v2958
        %v2960 = vpop.f32.mrb[0].mxu0
        %v2961 = vadd.f32 %v2870, %v2960
        %v2962 = vpop.f32.mrb[0].mxu0
        %v2963 = vadd.f32 %v2872, %v2962
        %2964 = vdwg.mxu0
        %v2965 = vand.u32 %v2488, 4294901760
        %2966 = vmatprep.subr.mxu0 %v2965
        %v2967 = vand.u32 %v2494, 4294901760
        %2968 = vmatpush1.msra.mxu0 %v2967
        %v2969 = vand.u32 %v2506, 4294901760
        %2970 = vmatprep.subr.mxu0 %v2969
        %v2971 = vand.u32 %v2504, 4294901760
        %2972 = vmatpush1.msra.mxu0 %v2971
        %2973 = vmatprep.subr.mxu0 0.0
        %2974 = vmatpush1.msra.mxu0 0.0
        %2975 = vmatprep.subr.mxu0 0.0
        %2976 = vmatpush1.msra.mxu0 0.0
        %2977 = vmatprep.subr.mxu0 0.0
        %2978 = vmatpush1.msra.mxu0 0.0
        %2979 = vmatprep.subr.mxu0 0.0
        %2980 = vmatpush1.msra.mxu0 0.0
        %2981 = vmatprep.subr.mxu0 0.0
        %2982 = vmatpush1.msra.mxu0 0.0
        %2983 = vmatprep.subr.mxu0 0.0
        %2984 = vmatpush1.msra.mxu0 0.0
        %2985 = vmatprep.subr.mxu0 0.0
        %2986 = vmatpush1.msra.mxu0 0.0
        %2987 = vmatprep.subr.mxu0 0.0
        %2988 = vmatpush1.msra.mxu0 0.0
        %2989 = vmatprep.subr.mxu0 0.0
        %2990 = vmatpush1.msra.mxu0 0.0
        %2991 = vmatprep.subr.mxu0 0.0
        %2992 = vmatpush1.msra.mxu0 0.0
        %2993 = vmatprep.subr.mxu0 0.0
        %2994 = vmatpush1.msra.mxu0 0.0
        %2995 = vmatprep.subr.mxu0 0.0
        %2996 = vmatpush1.msra.mxu0 0.0
        %2997 = vmatprep.subr.mxu0 0.0
        %2998 = vmatpush1.msra.mxu0 0.0
        %2999 = vmatprep.subr.mxu0 0.0
        %3000 = vmatpush1.msra.mxu0 0.0
        %3001 = vmatprep.subr.mxu0 0.0
        %3002 = vmatpush1.msra.mxu0 0.0
        %3003 = vmatprep.subr.mxu0 0.0
        %3004 = vmatpush1.msra.mxu0 0.0
        %3005 = vmatprep.subr.mxu0 0.0
        %3006 = vmatpush1.msra.mxu0 0.0
        %3007 = vmatprep.subr.mxu0 0.0
        %3008 = vmatpush1.msra.mxu0 0.0
        %3009 = vmatprep.subr.mxu0 0.0
        %3010 = vmatpush1.msra.mxu0 0.0
        %3011 = vmatprep.subr.mxu0 0.0
        %3012 = vmatpush1.msra.mxu0 0.0
        %3013 = vmatprep.subr.mxu0 0.0
        %3014 = vmatpush1.msra.mxu0 0.0
        %3015 = vmatprep.subr.mxu0 0.0
        %3016 = vmatpush1.msra.mxu0 0.0
        %3017 = vmatprep.subr.mxu0 0.0
        %3018 = vmatpush1.msra.mxu0 0.0
        %3019 = vmatprep.subr.mxu0 0.0
        %3020 = vmatpush1.msra.mxu0 0.0
        %3021 = vmatprep.subr.mxu0 0.0
        %3022 = vmatpush1.msra.mxu0 0.0
        %3023 = vmatprep.subr.mxu0 0.0
        %3024 = vmatpush1.msra.mxu0 0.0
        %3025 = vmatprep.subr.mxu0 0.0
        %3026 = vmatpush1.msra.mxu0 0.0
        %3027 = vmatprep.subr.mxu0 0.0
        %3028 = vmatpush1.msra.mxu0 0.0
        %3029 = vmatprep.subr.mxu0 0.0
        %3030 = vmatpush1.msra.mxu0 0.0
        %3031 = vmatprep.subr.mxu0 0.0
        %3032 = vmatpush1.msra.mxu0 0.0
        %3033 = vmatprep.mubr.f32.mxu0 0.0
        %v3034 = vand.u32 %v2499, 4294901760
        %3035 = vmatmul.mubr.f32.gmra.mrb[0].mxu0 %v3034
        %v3036 = vpop.f32.mrb[0].mxu0
        %v3037 = vadd.f32 %v2954, %v3036
        %v3038 = vpop.f32.mrb[0].mxu0
        %v3039 = vadd.f32 %v2956, %v3038
        %3040 = vmatprep.mubr.f32.mxu0 0.0
        %v3041 = vand.u32 %v2502, 4294901760
        %3042 = vmatmul.mubr.f32.gmra.mrb[0].mxu0 %v3041
        %v3043 = vpop.f32.mrb[0].mxu0
        %v3044 = vadd.f32 %v2961, %v3043
        %v3045 = vpop.f32.mrb[0].mxu0
        %v3046 = vadd.f32 %v2963, %v3045
        %3047 = vdwg.mxu0
        %v3048 = vadd.f32 %v2478, %v3037
        %v3049 = vadd.f32 %v2479, %v3039
        %v3050 = vadd.f32 %v2480, %v3044
        %v3051 = vadd.f32 %v2481, %v3046
        %s3052 = scalar_lea.vmem [#allocation3], 80
        %v3053 = vld [vmem:[%s3052] sm:$0xff]
        %v3054 = vld [vmem:[%s3052 + $0x8] sm:$0x3]
        %3055 = vrot.lane.b32.xlu0 %v214, 110
        %v3056 = vpop.permute.xlu0 %3055
        %3057 = vrot.lane.b32.xlu0 %v215, 110
        %v3058 = vpop.permute.xlu0 %3057
        %3059 = vrot.lane.b32.xlu0 %v216, 110
        %v3060 = vpop.permute.xlu0 %3059
        %3061 = vrot.lane.b32.xlu0 %v217, 110
        %v3062 = vpop.permute.xlu0 %3061
        %vm3063 = vcmask 900096
        %v3064 = vsel %vm3063, %v3056, %v3058
        %v3065 = vsel %vm3063, %v3060, %v3062
        %v3069 = vsel %vm240, %v3053, 0
        %v3072 = vsel %vm240, %v3054, 0
        %v3074 = vsel %vm247, %v3065, 0
        %v3076 = vsel %vm247, %v3062, 0
        %v3078 = vand.u32 %v3058, 4294901760
        %3079 = vmatprep.subr.mxu0 %v3078
        %v3080 = vand.u32 %v3064, 4294901760
        %3081 = vmatpush1.msra.mxu0 %v3080
        %v3082 = vand.u32 %v3076, 4294901760
        %3083 = vmatprep.subr.mxu0 %v3082
        %v3084 = vand.u32 %v3074, 4294901760
        %3085 = vmatpush1.msra.mxu0 %v3084
        %3086 = vmatprep.subr.mxu0 0.0
        %3087 = vmatpush1.msra.mxu0 0.0
        %3088 = vmatprep.subr.mxu0 0.0
        %3089 = vmatpush1.msra.mxu0 0.0
        %3090 = vmatprep.subr.mxu0 0.0
        %3091 = vmatpush1.msra.mxu0 0.0
        %3092 = vmatprep.subr.mxu0 0.0
        %3093 = vmatpush1.msra.mxu0 0.0
        %3094 = vmatprep.subr.mxu0 0.0
        %3095 = vmatpush1.msra.mxu0 0.0
        %3096 = vmatprep.subr.mxu0 0.0
        %3097 = vmatpush1.msra.mxu0 0.0
        %3098 = vmatprep.subr.mxu0 0.0
        %3099 = vmatpush1.msra.mxu0 0.0
        %3100 = vmatprep.subr.mxu0 0.0
        %3101 = vmatpush1.msra.mxu0 0.0
        %3102 = vmatprep.subr.mxu0 0.0
        %3103 = vmatpush1.msra.mxu0 0.0
        %3104 = vmatprep.subr.mxu0 0.0
        %3105 = vmatpush1.msra.mxu0 0.0
        %3106 = vmatprep.subr.mxu0 0.0
        %3107 = vmatpush1.msra.mxu0 0.0
        %3108 = vmatprep.subr.mxu0 0.0
        %3109 = vmatpush1.msra.mxu0 0.0
        %3110 = vmatprep.subr.mxu0 0.0
        %3111 = vmatpush1.msra.mxu0 0.0
        %3112 = vmatprep.subr.mxu0 0.0
        %3113 = vmatpush1.msra.mxu0 0.0
        %3114 = vmatprep.subr.mxu0 0.0
        %3115 = vmatpush1.msra.mxu0 0.0
        %3116 = vmatprep.subr.mxu0 0.0
        %3117 = vmatpush1.msra.mxu0 0.0
        %3118 = vmatprep.subr.mxu0 0.0
        %3119 = vmatpush1.msra.mxu0 0.0
        %3120 = vmatprep.subr.mxu0 0.0
        %3121 = vmatpush1.msra.mxu0 0.0
        %3122 = vmatprep.subr.mxu0 0.0
        %3123 = vmatpush1.msra.mxu0 0.0
        %3124 = vmatprep.subr.mxu0 0.0
        %3125 = vmatpush1.msra.mxu0 0.0
        %3126 = vmatprep.subr.mxu0 0.0
        %3127 = vmatpush1.msra.mxu0 0.0
        %3128 = vmatprep.subr.mxu0 0.0
        %3129 = vmatpush1.msra.mxu0 0.0
        %3130 = vmatprep.subr.mxu0 0.0
        %3131 = vmatpush1.msra.mxu0 0.0
        %3132 = vmatprep.subr.mxu0 0.0
        %3133 = vmatpush1.msra.mxu0 0.0
        %3134 = vmatprep.subr.mxu0 0.0
        %3135 = vmatpush1.msra.mxu0 0.0
        %3136 = vmatprep.subr.mxu0 0.0
        %3137 = vmatpush1.msra.mxu0 0.0
        %3138 = vmatprep.subr.mxu0 0.0
        %3139 = vmatpush1.msra.mxu0 0.0
        %3140 = vmatprep.subr.mxu0 0.0
        %3141 = vmatpush1.msra.mxu0 0.0
        %3142 = vmatprep.subr.mxu0 0.0
        %3143 = vmatpush1.msra.mxu0 0.0
        %3144 = vmatprep.subr.mxu0 0.0
        %3145 = vmatpush1.msra.mxu0 0.0
        %3146 = vmatprep.mubr.f32.mxu0 0.0
        %v3147 = vand.u32 %v3069, 4294901760
        %v3148 = vsub.f32 %v3069, %v3147
        %v3149 = vand.u32 %v3148, 4294901760
        %v3150 = vsub.f32 %v3148, %v3149
        %v3151 = vand.u32 %v3150, 4294901760
        %3152 = vmatmul.mubr.f32.gmra.mrb[0].mxu0 %v3151
        %v3153 = vpop.f32.mrb[0].mxu0
        %v3154 = vadd.f32 0.0, %v3153
        %v3155 = vpop.f32.mrb[0].mxu0
        %v3156 = vadd.f32 0.0, %v3155
        %3157 = vmatprep.mubr.f32.mxu0 0.0
        %v3158 = vand.u32 %v3072, 4294901760
        %v3159 = vsub.f32 %v3072, %v3158
        %v3160 = vand.u32 %v3159, 4294901760
        %v3161 = vsub.f32 %v3159, %v3160
        %v3162 = vand.u32 %v3161, 4294901760
        %3163 = vmatmul.mubr.f32.gmra.mrb[0].mxu0 %v3162
        %v3164 = vpop.f32.mrb[0].mxu0
        %v3165 = vadd.f32 0.0, %v3164
        %v3166 = vpop.f32.mrb[0].mxu0
        %v3167 = vadd.f32 0.0, %v3166
        %3168 = vdwg.mxu0
        %v3169 = vand.u32 %v3058, 4294901760
        %v3170 = vsub.f32 %v3058, %v3169
        %v3171 = vand.u32 %v3170, 4294901760
        %v3172 = vsub.f32 %v3170, %v3171
        %v3173 = vand.u32 %v3172, 4294901760
        %3174 = vmatprep.subr.mxu0 %v3173
        %v3175 = vand.u32 %v3064, 4294901760
        %v3176 = vsub.f32 %v3064, %v3175
        %v3177 = vand.u32 %v3176, 4294901760
        %v3178 = vsub.f32 %v3176, %v3177
        %v3179 = vand.u32 %v3178, 4294901760
        %3180 = vmatpush1.msra.mxu0 %v3179
        %v3181 = vand.u32 %v3076, 4294901760
        %v3182 = vsub.f32 %v3076, %v3181
        %v3183 = vand.u32 %v3182, 4294901760
        %v3184 = vsub.f32 %v3182, %v3183
        %v3185 = vand.u32 %v3184, 4294901760
        %3186 = vmatprep.subr.mxu0 %v3185
        %v3187 = vand.u32 %v3074, 4294901760
        %v3188 = vsub.f32 %v3074, %v3187
        %v3189 = vand.u32 %v3188, 4294901760
        %v3190 = vsub.f32 %v3188, %v3189
        %v3191 = vand.u32 %v3190, 4294901760
        %3192 = vmatpush1.msra.mxu0 %v3191
        %3193 = vmatprep.subr.mxu0 0.0
        %3194 = vmatpush1.msra.mxu0 0.0
        %3195 = vmatprep.subr.mxu0 0.0
        %3196 = vmatpush1.msra.mxu0 0.0
        %3197 = vmatprep.subr.mxu0 0.0
        %3198 = vmatpush1.msra.mxu0 0.0
        %3199 = vmatprep.subr.mxu0 0.0
        %3200 = vmatpush1.msra.mxu0 0.0
        %3201 = vmatprep.subr.mxu0 0.0
        %3202 = vmatpush1.msra.mxu0 0.0
        %3203 = vmatprep.subr.mxu0 0.0
        %3204 = vmatpush1.msra.mxu0 0.0
        %3205 = vmatprep.subr.mxu0 0.0
        %3206 = vmatpush1.msra.mxu0 0.0
        %3207 = vmatprep.subr.mxu0 0.0
        %3208 = vmatpush1.msra.mxu0 0.0
        %3209 = vmatprep.subr.mxu0 0.0
        %3210 = vmatpush1.msra.mxu0 0.0
        %3211 = vmatprep.subr.mxu0 0.0
        %3212 = vmatpush1.msra.mxu0 0.0
        %3213 = vmatprep.subr.mxu0 0.0
        %3214 = vmatpush1.msra.mxu0 0.0
        %3215 = vmatprep.subr.mxu0 0.0
        %3216 = vmatpush1.msra.mxu0 0.0
        %3217 = vmatprep.subr.mxu0 0.0
        %3218 = vmatpush1.msra.mxu0 0.0
        %3219 = vmatprep.subr.mxu0 0.0
        %3220 = vmatpush1.msra.mxu0 0.0
        %3221 = vmatprep.subr.mxu0 0.0
        %3222 = vmatpush1.msra.mxu0 0.0
        %3223 = vmatprep.subr.mxu0 0.0
        %3224 = vmatpush1.msra.mxu0 0.0
        %3225 = vmatprep.subr.mxu0 0.0
        %3226 = vmatpush1.msra.mxu0 0.0
        %3227 = vmatprep.subr.mxu0 0.0
        %3228 = vmatpush1.msra.mxu0 0.0
        %3229 = vmatprep.subr.mxu0 0.0
        %3230 = vmatpush1.msra.mxu0 0.0
        %3231 = vmatprep.subr.mxu0 0.0
        %3232 = vmatpush1.msra.mxu0 0.0
        %3233 = vmatprep.subr.mxu0 0.0
        %3234 = vmatpush1.msra.mxu0 0.0
        %3235 = vmatprep.subr.mxu0 0.0
        %3236 = vmatpush1.msra.mxu0 0.0
        %3237 = vmatprep.subr.mxu0 0.0
        %3238 = vmatpush1.msra.mxu0 0.0
        %3239 = vmatprep.subr.mxu0 0.0
        %3240 = vmatpush1.msra.mxu0 0.0
        %3241 = vmatprep.subr.mxu0 0.0
        %3242 = vmatpush1.msra.mxu0 0.0
        %3243 = vmatprep.subr.mxu0 0.0
        %3244 = vmatpush1.msra.mxu0 0.0
        %3245 = vmatprep.subr.mxu0 0.0
        %3246 = vmatpush1.msra.mxu0 0.0
        %3247 = vmatprep.subr.mxu0 0.0
        %3248 = vmatpush1.msra.mxu0 0.0
        %3249 = vmatprep.subr.mxu0 0.0
        %3250 = vmatpush1.msra.mxu0 0.0
        %3251 = vmatprep.subr.mxu0 0.0
        %3252 = vmatpush1.msra.mxu0 0.0
        %3253 = vmatprep.mubr.f32.mxu0 0.0
        %v3254 = vand.u32 %v3069, 4294901760
        %3255 = vmatmul.mubr.f32.gmra.mrb[0].mxu0 %v3254
        %v3256 = vpop.f32.mrb[0].mxu0
        %v3257 = vadd.f32 %v3154, %v3256
        %v3258 = vpop.f32.mrb[0].mxu0
        %v3259 = vadd.f32 %v3156, %v3258
        %3260 = vmatprep.mubr.f32.mxu0 0.0
        %v3261 = vand.u32 %v3072, 4294901760
        %3262 = vmatmul.mubr.f32.gmra.mrb[0].mxu0 %v3261
        %v3263 = vpop.f32.mrb[0].mxu0
        %v3264 = vadd.f32 %v3165, %v3263
        %v3265 = vpop.f32.mrb[0].mxu0
        %v3266 = vadd.f32 %v3167, %v3265
        %3267 = vdwg.mxu0
        %v3268 = vand.u32 %v3058, 4294901760
        %v3269 = vsub.f32 %v3058, %v3268
        %3270 = vmatprep.subr.mxu0 %v3269
        %v3271 = vand.u32 %v3064, 4294901760
        %v3272 = vsub.f32 %v3064, %v3271
        %3273 = vmatpush1.msra.mxu0 %v3272
        %v3274 = vand.u32 %v3076, 4294901760
        %v3275 = vsub.f32 %v3076, %v3274
        %3276 = vmatprep.subr.mxu0 %v3275
        %v3277 = vand.u32 %v3074, 4294901760
        %v3278 = vsub.f32 %v3074, %v3277
        %3279 = vmatpush1.msra.mxu0 %v3278
        %3280 = vmatprep.subr.mxu0 0.0
        %3281 = vmatpush1.msra.mxu0 0.0
        %3282 = vmatprep.subr.mxu0 0.0
        %3283 = vmatpush1.msra.mxu0 0.0
        %3284 = vmatprep.subr.mxu0 0.0
        %3285 = vmatpush1.msra.mxu0 0.0
        %3286 = vmatprep.subr.mxu0 0.0
        %3287 = vmatpush1.msra.mxu0 0.0
        %3288 = vmatprep.subr.mxu0 0.0
        %3289 = vmatpush1.msra.mxu0 0.0
        %3290 = vmatprep.subr.mxu0 0.0
        %3291 = vmatpush1.msra.mxu0 0.0
        %3292 = vmatprep.subr.mxu0 0.0
        %3293 = vmatpush1.msra.mxu0 0.0
        %3294 = vmatprep.subr.mxu0 0.0
        %3295 = vmatpush1.msra.mxu0 0.0
        %3296 = vmatprep.subr.mxu0 0.0
        %3297 = vmatpush1.msra.mxu0 0.0
        %3298 = vmatprep.subr.mxu0 0.0
        %3299 = vmatpush1.msra.mxu0 0.0
        %3300 = vmatprep.subr.mxu0 0.0
        %3301 = vmatpush1.msra.mxu0 0.0
        %3302 = vmatprep.subr.mxu0 0.0
        %3303 = vmatpush1.msra.mxu0 0.0
        %3304 = vmatprep.subr.mxu0 0.0
        %3305 = vmatpush1.msra.mxu0 0.0
        %3306 = vmatprep.subr.mxu0 0.0
        %3307 = vmatpush1.msra.mxu0 0.0
        %3308 = vmatprep.subr.mxu0 0.0
        %3309 = vmatpush1.msra.mxu0 0.0
        %3310 = vmatprep.subr.mxu0 0.0
        %3311 = vmatpush1.msra.mxu0 0.0
        %3312 = vmatprep.subr.mxu0 0.0
        %3313 = vmatpush1.msra.mxu0 0.0
        %3314 = vmatprep.subr.mxu0 0.0
        %3315 = vmatpush1.msra.mxu0 0.0
        %3316 = vmatprep.subr.mxu0 0.0
        %3317 = vmatpush1.msra.mxu0 0.0
        %3318 = vmatprep.subr.mxu0 0.0
        %3319 = vmatpush1.msra.mxu0 0.0
        %3320 = vmatprep.subr.mxu0 0.0
        %3321 = vmatpush1.msra.mxu0 0.0
        %3322 = vmatprep.subr.mxu0 0.0
        %3323 = vmatpush1.msra.mxu0 0.0
        %3324 = vmatprep.subr.mxu0 0.0
        %3325 = vmatpush1.msra.mxu0 0.0
        %3326 = vmatprep.subr.mxu0 0.0
        %3327 = vmatpush1.msra.mxu0 0.0
        %3328 = vmatprep.subr.mxu0 0.0
        %3329 = vmatpush1.msra.mxu0 0.0
        %3330 = vmatprep.subr.mxu0 0.0
        %3331 = vmatpush1.msra.mxu0 0.0
        %3332 = vmatprep.subr.mxu0 0.0
        %3333 = vmatpush1.msra.mxu0 0.0
        %3334 = vmatprep.subr.mxu0 0.0
        %3335 = vmatpush1.msra.mxu0 0.0
        %3336 = vmatprep.subr.mxu0 0.0
        %3337 = vmatpush1.msra.mxu0 0.0
        %3338 = vmatprep.subr.mxu0 0.0
        %3339 = vmatpush1.msra.mxu0 0.0
        %3340 = vmatprep.mubr.f32.mxu0 0.0
        %v3341 = vand.u32 %v3069, 4294901760
        %v3342 = vsub.f32 %v3069, %v3341
        %3343 = vmatmul.mubr.f32.gmra.mrb[0].mxu0 %v3342
        %v3344 = vpop.f32.mrb[0].mxu0
        %v3345 = vadd.f32 %v3257, %v3344
        %v3346 = vpop.f32.mrb[0].mxu0
        %v3347 = vadd.f32 %v3259, %v3346
        %3348 = vmatprep.mubr.f32.mxu0 0.0
        %v3349 = vand.u32 %v3072, 4294901760
        %v3350 = vsub.f32 %v3072, %v3349
        %3351 = vmatmul.mubr.f32.gmra.mrb[0].mxu0 %v3350
        %v3352 = vpop.f32.mrb[0].mxu0
        %v3353 = vadd.f32 %v3264, %v3352
        %v3354 = vpop.f32.mrb[0].mxu0
        %v3355 = vadd.f32 %v3266, %v3354
        %3356 = vdwg.mxu0
        %v3357 = vand.u32 %v3058, 4294901760
        %3358 = vmatprep.subr.mxu0 %v3357
        %v3359 = vand.u32 %v3064, 4294901760
        %3360 = vmatpush1.msra.mxu0 %v3359
        %v3361 = vand.u32 %v3076, 4294901760
        %3362 = vmatprep.subr.mxu0 %v3361
        %v3363 = vand.u32 %v3074, 4294901760
        %3364 = vmatpush1.msra.mxu0 %v3363
        %3365 = vmatprep.subr.mxu0 0.0
        %3366 = vmatpush1.msra.mxu0 0.0
        %3367 = vmatprep.subr.mxu0 0.0
        %3368 = vmatpush1.msra.mxu0 0.0
        %3369 = vmatprep.subr.mxu0 0.0
        %3370 = vmatpush1.msra.mxu0 0.0
        %3371 = vmatprep.subr.mxu0 0.0
        %3372 = vmatpush1.msra.mxu0 0.0
        %3373 = vmatprep.subr.mxu0 0.0
        %3374 = vmatpush1.msra.mxu0 0.0
        %3375 = vmatprep.subr.mxu0 0.0
        %3376 = vmatpush1.msra.mxu0 0.0
        %3377 = vmatprep.subr.mxu0 0.0
        %3378 = vmatpush1.msra.mxu0 0.0
        %3379 = vmatprep.subr.mxu0 0.0
        %3380 = vmatpush1.msra.mxu0 0.0
        %3381 = vmatprep.subr.mxu0 0.0
        %3382 = vmatpush1.msra.mxu0 0.0
        %3383 = vmatprep.subr.mxu0 0.0
        %3384 = vmatpush1.msra.mxu0 0.0
        %3385 = vmatprep.subr.mxu0 0.0
        %3386 = vmatpush1.msra.mxu0 0.0
        %3387 = vmatprep.subr.mxu0 0.0
        %3388 = vmatpush1.msra.mxu0 0.0
        %3389 = vmatprep.subr.mxu0 0.0
        %3390 = vmatpush1.msra.mxu0 0.0
        %3391 = vmatprep.subr.mxu0 0.0
        %3392 = vmatpush1.msra.mxu0 0.0
        %3393 = vmatprep.subr.mxu0 0.0
        %3394 = vmatpush1.msra.mxu0 0.0
        %3395 = vmatprep.subr.mxu0 0.0
        %3396 = vmatpush1.msra.mxu0 0.0
        %3397 = vmatprep.subr.mxu0 0.0
        %3398 = vmatpush1.msra.mxu0 0.0
        %3399 = vmatprep.subr.mxu0 0.0
        %3400 = vmatpush1.msra.mxu0 0.0
        %3401 = vmatprep.subr.mxu0 0.0
        %3402 = vmatpush1.msra.mxu0 0.0
        %3403 = vmatprep.subr.mxu0 0.0
        %3404 = vmatpush1.msra.mxu0 0.0
        %3405 = vmatprep.subr.mxu0 0.0
        %3406 = vmatpush1.msra.mxu0 0.0
        %3407 = vmatprep.subr.mxu0 0.0
        %3408 = vmatpush1.msra.mxu0 0.0
        %3409 = vmatprep.subr.mxu0 0.0
        %3410 = vmatpush1.msra.mxu0 0.0
        %3411 = vmatprep.subr.mxu0 0.0
        %3412 = vmatpush1.msra.mxu0 0.0
        %3413 = vmatprep.subr.mxu0 0.0
        %3414 = vmatpush1.msra.mxu0 0.0
        %3415 = vmatprep.subr.mxu0 0.0
        %3416 = vmatpush1.msra.mxu0 0.0
        %3417 = vmatprep.subr.mxu0 0.0
        %3418 = vmatpush1.msra.mxu0 0.0
        %3419 = vmatprep.subr.mxu0 0.0
        %3420 = vmatpush1.msra.mxu0 0.0
        %3421 = vmatprep.subr.mxu0 0.0
        %3422 = vmatpush1.msra.mxu0 0.0
        %3423 = vmatprep.subr.mxu0 0.0
        %3424 = vmatpush1.msra.mxu0 0.0
        %3425 = vmatprep.mubr.f32.mxu0 0.0
        %v3426 = vand.u32 %v3069, 4294901760
        %v3427 = vsub.f32 %v3069, %v3426
        %v3428 = vand.u32 %v3427, 4294901760
        %3429 = vmatmul.mubr.f32.gmra.mrb[0].mxu0 %v3428
        %v3430 = vpop.f32.mrb[0].mxu0
        %v3431 = vadd.f32 %v3345, %v3430
        %v3432 = vpop.f32.mrb[0].mxu0
        %v3433 = vadd.f32 %v3347, %v3432
        %3434 = vmatprep.mubr.f32.mxu0 0.0
        %v3435 = vand.u32 %v3072, 4294901760
        %v3436 = vsub.f32 %v3072, %v3435
        %v3437 = vand.u32 %v3436, 4294901760
        %3438 = vmatmul.mubr.f32.gmra.mrb[0].mxu0 %v3437
        %v3439 = vpop.f32.mrb[0].mxu0
        %v3440 = vadd.f32 %v3353, %v3439
        %v3441 = vpop.f32.mrb[0].mxu0
        %v3442 = vadd.f32 %v3355, %v3441
        %3443 = vdwg.mxu0
        %v3444 = vand.u32 %v3058, 4294901760
        %v3445 = vsub.f32 %v3058, %v3444
        %v3446 = vand.u32 %v3445, 4294901760
        %3447 = vmatprep.subr.mxu0 %v3446
        %v3448 = vand.u32 %v3064, 4294901760
        %v3449 = vsub.f32 %v3064, %v3448
        %v3450 = vand.u32 %v3449, 4294901760
        %3451 = vmatpush1.msra.mxu0 %v3450
        %v3452 = vand.u32 %v3076, 4294901760
        %v3453 = vsub.f32 %v3076, %v3452
        %v3454 = vand.u32 %v3453, 4294901760
        %3455 = vmatprep.subr.mxu0 %v3454
        %v3456 = vand.u32 %v3074, 4294901760
        %v3457 = vsub.f32 %v3074, %v3456
        %v3458 = vand.u32 %v3457, 4294901760
        %3459 = vmatpush1.msra.mxu0 %v3458
        %3460 = vmatprep.subr.mxu0 0.0
        %3461 = vmatpush1.msra.mxu0 0.0
        %3462 = vmatprep.subr.mxu0 0.0
        %3463 = vmatpush1.msra.mxu0 0.0
        %3464 = vmatprep.subr.mxu0 0.0
        %3465 = vmatpush1.msra.mxu0 0.0
        %3466 = vmatprep.subr.mxu0 0.0
        %3467 = vmatpush1.msra.mxu0 0.0
        %3468 = vmatprep.subr.mxu0 0.0
        %3469 = vmatpush1.msra.mxu0 0.0
        %3470 = vmatprep.subr.mxu0 0.0
        %3471 = vmatpush1.msra.mxu0 0.0
        %3472 = vmatprep.subr.mxu0 0.0
        %3473 = vmatpush1.msra.mxu0 0.0
        %3474 = vmatprep.subr.mxu0 0.0
        %3475 = vmatpush1.msra.mxu0 0.0
        %3476 = vmatprep.subr.mxu0 0.0
        %3477 = vmatpush1.msra.mxu0 0.0
        %3478 = vmatprep.subr.mxu0 0.0
        %3479 = vmatpush1.msra.mxu0 0.0
        %3480 = vmatprep.subr.mxu0 0.0
        %3481 = vmatpush1.msra.mxu0 0.0
        %3482 = vmatprep.subr.mxu0 0.0
        %3483 = vmatpush1.msra.mxu0 0.0
        %3484 = vmatprep.subr.mxu0 0.0
        %3485 = vmatpush1.msra.mxu0 0.0
        %3486 = vmatprep.subr.mxu0 0.0
        %3487 = vmatpush1.msra.mxu0 0.0
        %3488 = vmatprep.subr.mxu0 0.0
        %3489 = vmatpush1.msra.mxu0 0.0
        %3490 = vmatprep.subr.mxu0 0.0
        %3491 = vmatpush1.msra.mxu0 0.0
        %3492 = vmatprep.subr.mxu0 0.0
        %3493 = vmatpush1.msra.mxu0 0.0
        %3494 = vmatprep.subr.mxu0 0.0
        %3495 = vmatpush1.msra.mxu0 0.0
        %3496 = vmatprep.subr.mxu0 0.0
        %3497 = vmatpush1.msra.mxu0 0.0
        %3498 = vmatprep.subr.mxu0 0.0
        %3499 = vmatpush1.msra.mxu0 0.0
        %3500 = vmatprep.subr.mxu0 0.0
        %3501 = vmatpush1.msra.mxu0 0.0
        %3502 = vmatprep.subr.mxu0 0.0
        %3503 = vmatpush1.msra.mxu0 0.0
        %3504 = vmatprep.subr.mxu0 0.0
        %3505 = vmatpush1.msra.mxu0 0.0
        %3506 = vmatprep.subr.mxu0 0.0
        %3507 = vmatpush1.msra.mxu0 0.0
        %3508 = vmatprep.subr.mxu0 0.0
        %3509 = vmatpush1.msra.mxu0 0.0
        %3510 = vmatprep.subr.mxu0 0.0
        %3511 = vmatpush1.msra.mxu0 0.0
        %3512 = vmatprep.subr.mxu0 0.0
        %3513 = vmatpush1.msra.mxu0 0.0
        %3514 = vmatprep.subr.mxu0 0.0
        %3515 = vmatpush1.msra.mxu0 0.0
        %3516 = vmatprep.subr.mxu0 0.0
        %3517 = vmatpush1.msra.mxu0 0.0
        %3518 = vmatprep.subr.mxu0 0.0
        %3519 = vmatpush1.msra.mxu0 0.0
        %3520 = vmatprep.mubr.f32.mxu0 0.0
        %v3521 = vand.u32 %v3069, 4294901760
        %3522 = vmatmul.mubr.f32.gmra.mrb[0].mxu0 %v3521
        %v3523 = vpop.f32.mrb[0].mxu0
        %v3524 = vadd.f32 %v3431, %v3523
        %v3525 = vpop.f32.mrb[0].mxu0
        %v3526 = vadd.f32 %v3433, %v3525
        %3527 = vmatprep.mubr.f32.mxu0 0.0
        %v3528 = vand.u32 %v3072, 4294901760
        %3529 = vmatmul.mubr.f32.gmra.mrb[0].mxu0 %v3528
        %v3530 = vpop.f32.mrb[0].mxu0
        %v3531 = vadd.f32 %v3440, %v3530
        %v3532 = vpop.f32.mrb[0].mxu0
        %v3533 = vadd.f32 %v3442, %v3532
        %3534 = vdwg.mxu0
        %v3535 = vand.u32 %v3058, 4294901760
        %3536 = vmatprep.subr.mxu0 %v3535
        %v3537 = vand.u32 %v3064, 4294901760
        %3538 = vmatpush1.msra.mxu0 %v3537
        %v3539 = vand.u32 %v3076, 4294901760
        %3540 = vmatprep.subr.mxu0 %v3539
        %v3541 = vand.u32 %v3074, 4294901760
        %3542 = vmatpush1.msra.mxu0 %v3541
        %3543 = vmatprep.subr.mxu0 0.0
        %3544 = vmatpush1.msra.mxu0 0.0
        %3545 = vmatprep.subr.mxu0 0.0
        %3546 = vmatpush1.msra.mxu0 0.0
        %3547 = vmatprep.subr.mxu0 0.0
        %3548 = vmatpush1.msra.mxu0 0.0
        %3549 = vmatprep.subr.mxu0 0.0
        %3550 = vmatpush1.msra.mxu0 0.0
        %3551 = vmatprep.subr.mxu0 0.0
        %3552 = vmatpush1.msra.mxu0 0.0
        %3553 = vmatprep.subr.mxu0 0.0
        %3554 = vmatpush1.msra.mxu0 0.0
        %3555 = vmatprep.subr.mxu0 0.0
        %3556 = vmatpush1.msra.mxu0 0.0
        %3557 = vmatprep.subr.mxu0 0.0
        %3558 = vmatpush1.msra.mxu0 0.0
        %3559 = vmatprep.subr.mxu0 0.0
        %3560 = vmatpush1.msra.mxu0 0.0
        %3561 = vmatprep.subr.mxu0 0.0
        %3562 = vmatpush1.msra.mxu0 0.0
        %3563 = vmatprep.subr.mxu0 0.0
        %3564 = vmatpush1.msra.mxu0 0.0
        %3565 = vmatprep.subr.mxu0 0.0
        %3566 = vmatpush1.msra.mxu0 0.0
        %3567 = vmatprep.subr.mxu0 0.0
        %3568 = vmatpush1.msra.mxu0 0.0
        %3569 = vmatprep.subr.mxu0 0.0
        %3570 = vmatpush1.msra.mxu0 0.0
        %3571 = vmatprep.subr.mxu0 0.0
        %3572 = vmatpush1.msra.mxu0 0.0
        %3573 = vmatprep.subr.mxu0 0.0
        %3574 = vmatpush1.msra.mxu0 0.0
        %3575 = vmatprep.subr.mxu0 0.0
        %3576 = vmatpush1.msra.mxu0 0.0
        %3577 = vmatprep.subr.mxu0 0.0
        %3578 = vmatpush1.msra.mxu0 0.0
        %3579 = vmatprep.subr.mxu0 0.0
        %3580 = vmatpush1.msra.mxu0 0.0
        %3581 = vmatprep.subr.mxu0 0.0
        %3582 = vmatpush1.msra.mxu0 0.0
        %3583 = vmatprep.subr.mxu0 0.0
        %3584 = vmatpush1.msra.mxu0 0.0
        %3585 = vmatprep.subr.mxu0 0.0
        %3586 = vmatpush1.msra.mxu0 0.0
        %3587 = vmatprep.subr.mxu0 0.0
        %3588 = vmatpush1.msra.mxu0 0.0
        %3589 = vmatprep.subr.mxu0 0.0
        %3590 = vmatpush1.msra.mxu0 0.0
        %3591 = vmatprep.subr.mxu0 0.0
        %3592 = vmatpush1.msra.mxu0 0.0
        %3593 = vmatprep.subr.mxu0 0.0
        %3594 = vmatpush1.msra.mxu0 0.0
        %3595 = vmatprep.subr.mxu0 0.0
        %3596 = vmatpush1.msra.mxu0 0.0
        %3597 = vmatprep.subr.mxu0 0.0
        %3598 = vmatpush1.msra.mxu0 0.0
        %3599 = vmatprep.subr.mxu0 0.0
        %3600 = vmatpush1.msra.mxu0 0.0
        %3601 = vmatprep.subr.mxu0 0.0
        %3602 = vmatpush1.msra.mxu0 0.0
        %3603 = vmatprep.mubr.f32.mxu0 0.0
        %v3604 = vand.u32 %v3069, 4294901760
        %3605 = vmatmul.mubr.f32.gmra.mrb[0].mxu0 %v3604
        %v3606 = vpop.f32.mrb[0].mxu0
        %v3607 = vadd.f32 %v3524, %v3606
        %v3608 = vpop.f32.mrb[0].mxu0
        %v3609 = vadd.f32 %v3526, %v3608
        %3610 = vmatprep.mubr.f32.mxu0 0.0
        %v3611 = vand.u32 %v3072, 4294901760
        %3612 = vmatmul.mubr.f32.gmra.mrb[0].mxu0 %v3611
        %v3613 = vpop.f32.mrb[0].mxu0
        %v3614 = vadd.f32 %v3531, %v3613
        %v3615 = vpop.f32.mrb[0].mxu0
        %v3616 = vadd.f32 %v3533, %v3615
        %3617 = vdwg.mxu0
        %v3618 = vadd.f32 %v3048, %v3607
        %v3619 = vadd.f32 %v3049, %v3609
        %v3620 = vadd.f32 %v3050, %v3614
        %v3621 = vadd.f32 %v3051, %v3616
        %s3622 = scalar_lea.vmem [#allocation3], 96
        %v3623 = vld [vmem:[%s3622] sm:$0xff]
        %v3624 = vld [vmem:[%s3622 + $0x8] sm:$0x3]
        %3625 = vrot.lane.b32.xlu0 %v214, 96
        %v3626 = vpop.permute.xlu0 %3625
        %3627 = vrot.lane.b32.xlu0 %v215, 96
        %v3628 = vpop.permute.xlu0 %3627
        %3629 = vrot.lane.b32.xlu0 %v216, 96
        %v3630 = vpop.permute.xlu0 %3629
        %3631 = vrot.lane.b32.xlu0 %v217, 96
        %v3632 = vpop.permute.xlu0 %3631
        %vm3633 = vcmask 785408
        %v3634 = vsel %vm3633, %v3626, %v3628
        %v3635 = vsel %vm3633, %v3630, %v3632
        %v3639 = vsel %vm240, %v3623, 0
        %v3642 = vsel %vm240, %v3624, 0
        %v3644 = vsel %vm247, %v3635, 0
        %v3646 = vsel %vm247, %v3632, 0
        %v3648 = vand.u32 %v3628, 4294901760
        %3649 = vmatprep.subr.mxu0 %v3648
        %v3650 = vand.u32 %v3634, 4294901760
        %3651 = vmatpush1.msra.mxu0 %v3650
        %v3652 = vand.u32 %v3646, 4294901760
        %3653 = vmatprep.subr.mxu0 %v3652
        %v3654 = vand.u32 %v3644, 4294901760
        %3655 = vmatpush1.msra.mxu0 %v3654
        %3656 = vmatprep.subr.mxu0 0.0
        %3657 = vmatpush1.msra.mxu0 0.0
        %3658 = vmatprep.subr.mxu0 0.0
        %3659 = vmatpush1.msra.mxu0 0.0
        %3660 = vmatprep.subr.mxu0 0.0
        %3661 = vmatpush1.msra.mxu0 0.0
        %3662 = vmatprep.subr.mxu0 0.0
        %3663 = vmatpush1.msra.mxu0 0.0
        %3664 = vmatprep.subr.mxu0 0.0
        %3665 = vmatpush1.msra.mxu0 0.0
        %3666 = vmatprep.subr.mxu0 0.0
        %3667 = vmatpush1.msra.mxu0 0.0
        %3668 = vmatprep.subr.mxu0 0.0
        %3669 = vmatpush1.msra.mxu0 0.0
        %3670 = vmatprep.subr.mxu0 0.0
        %3671 = vmatpush1.msra.mxu0 0.0
        %3672 = vmatprep.subr.mxu0 0.0
        %3673 = vmatpush1.msra.mxu0 0.0
        %3674 = vmatprep.subr.mxu0 0.0
        %3675 = vmatpush1.msra.mxu0 0.0
        %3676 = vmatprep.subr.mxu0 0.0
        %3677 = vmatpush1.msra.mxu0 0.0
        %3678 = vmatprep.subr.mxu0 0.0
        %3679 = vmatpush1.msra.mxu0 0.0
        %3680 = vmatprep.subr.mxu0 0.0
        %3681 = vmatpush1.msra.mxu0 0.0
        %3682 = vmatprep.subr.mxu0 0.0
        %3683 = vmatpush1.msra.mxu0 0.0
        %3684 = vmatprep.subr.mxu0 0.0
        %3685 = vmatpush1.msra.mxu0 0.0
        %3686 = vmatprep.subr.mxu0 0.0
        %3687 = vmatpush1.msra.mxu0 0.0
        %3688 = vmatprep.subr.mxu0 0.0
        %3689 = vmatpush1.msra.mxu0 0.0
        %3690 = vmatprep.subr.mxu0 0.0
        %3691 = vmatpush1.msra.mxu0 0.0
        %3692 = vmatprep.subr.mxu0 0.0
        %3693 = vmatpush1.msra.mxu0 0.0
        %3694 = vmatprep.subr.mxu0 0.0
        %3695 = vmatpush1.msra.mxu0 0.0
        %3696 = vmatprep.subr.mxu0 0.0
        %3697 = vmatpush1.msra.mxu0 0.0
        %3698 = vmatprep.subr.mxu0 0.0
        %3699 = vmatpush1.msra.mxu0 0.0
        %3700 = vmatprep.subr.mxu0 0.0
        %3701 = vmatpush1.msra.mxu0 0.0
        %3702 = vmatprep.subr.mxu0 0.0
        %3703 = vmatpush1.msra.mxu0 0.0
        %3704 = vmatprep.subr.mxu0 0.0
        %3705 = vmatpush1.msra.mxu0 0.0
        %3706 = vmatprep.subr.mxu0 0.0
        %3707 = vmatpush1.msra.mxu0 0.0
        %3708 = vmatprep.subr.mxu0 0.0
        %3709 = vmatpush1.msra.mxu0 0.0
        %3710 = vmatprep.subr.mxu0 0.0
        %3711 = vmatpush1.msra.mxu0 0.0
        %3712 = vmatprep.subr.mxu0 0.0
        %3713 = vmatpush1.msra.mxu0 0.0
        %3714 = vmatprep.subr.mxu0 0.0
        %3715 = vmatpush1.msra.mxu0 0.0
        %3716 = vmatprep.mubr.f32.mxu0 0.0
        %v3717 = vand.u32 %v3639, 4294901760
        %v3718 = vsub.f32 %v3639, %v3717
        %v3719 = vand.u32 %v3718, 4294901760
        %v3720 = vsub.f32 %v3718, %v3719
        %v3721 = vand.u32 %v3720, 4294901760
        %3722 = vmatmul.mubr.f32.gmra.mrb[0].mxu0 %v3721
        %v3723 = vpop.f32.mrb[0].mxu0
        %v3724 = vadd.f32 0.0, %v3723
        %v3725 = vpop.f32.mrb[0].mxu0
        %v3726 = vadd.f32 0.0, %v3725
        %3727 = vmatprep.mubr.f32.mxu0 0.0
        %v3728 = vand.u32 %v3642, 4294901760
        %v3729 = vsub.f32 %v3642, %v3728
        %v3730 = vand.u32 %v3729, 4294901760
        %v3731 = vsub.f32 %v3729, %v3730
        %v3732 = vand.u32 %v3731, 4294901760
        %3733 = vmatmul.mubr.f32.gmra.mrb[0].mxu0 %v3732
        %v3734 = vpop.f32.mrb[0].mxu0
        %v3735 = vadd.f32 0.0, %v3734
        %v3736 = vpop.f32.mrb[0].mxu0
        %v3737 = vadd.f32 0.0, %v3736
        %3738 = vdwg.mxu0
        %v3739 = vand.u32 %v3628, 4294901760
        %v3740 = vsub.f32 %v3628, %v3739
        %v3741 = vand.u32 %v3740, 4294901760
        %v3742 = vsub.f32 %v3740, %v3741
        %v3743 = vand.u32 %v3742, 4294901760
        %3744 = vmatprep.subr.mxu0 %v3743
        %v3745 = vand.u32 %v3634, 4294901760
        %v3746 = vsub.f32 %v3634, %v3745
        %v3747 = vand.u32 %v3746, 4294901760
        %v3748 = vsub.f32 %v3746, %v3747
        %v3749 = vand.u32 %v3748, 4294901760
        %3750 = vmatpush1.msra.mxu0 %v3749
        %v3751 = vand.u32 %v3646, 4294901760
        %v3752 = vsub.f32 %v3646, %v3751
        %v3753 = vand.u32 %v3752, 4294901760
        %v3754 = vsub.f32 %v3752, %v3753
        %v3755 = vand.u32 %v3754, 4294901760
        %3756 = vmatprep.subr.mxu0 %v3755
        %v3757 = vand.u32 %v3644, 4294901760
        %v3758 = vsub.f32 %v3644, %v3757
        %v3759 = vand.u32 %v3758, 4294901760
        %v3760 = vsub.f32 %v3758, %v3759
        %v3761 = vand.u32 %v3760, 4294901760
        %3762 = vmatpush1.msra.mxu0 %v3761
        %3763 = vmatprep.subr.mxu0 0.0
        %3764 = vmatpush1.msra.mxu0 0.0
        %3765 = vmatprep.subr.mxu0 0.0
        %3766 = vmatpush1.msra.mxu0 0.0
        %3767 = vmatprep.subr.mxu0 0.0
        %3768 = vmatpush1.msra.mxu0 0.0
        %3769 = vmatprep.subr.mxu0 0.0
        %3770 = vmatpush1.msra.mxu0 0.0
        %3771 = vmatprep.subr.mxu0 0.0
        %3772 = vmatpush1.msra.mxu0 0.0
        %3773 = vmatprep.subr.mxu0 0.0
        %3774 = vmatpush1.msra.mxu0 0.0
        %3775 = vmatprep.subr.mxu0 0.0
        %3776 = vmatpush1.msra.mxu0 0.0
        %3777 = vmatprep.subr.mxu0 0.0
        %3778 = vmatpush1.msra.mxu0 0.0
        %3779 = vmatprep.subr.mxu0 0.0
        %3780 = vmatpush1.msra.mxu0 0.0
        %3781 = vmatprep.subr.mxu0 0.0
        %3782 = vmatpush1.msra.mxu0 0.0
        %3783 = vmatprep.subr.mxu0 0.0
        %3784 = vmatpush1.msra.mxu0 0.0
        %3785 = vmatprep.subr.mxu0 0.0
        %3786 = vmatpush1.msra.mxu0 0.0
        %3787 = vmatprep.subr.mxu0 0.0
        %3788 = vmatpush1.msra.mxu0 0.0
        %3789 = vmatprep.subr.mxu0 0.0
        %3790 = vmatpush1.msra.mxu0 0.0
        %3791 = vmatprep.subr.mxu0 0.0
        %3792 = vmatpush1.msra.mxu0 0.0
        %3793 = vmatprep.subr.mxu0 0.0
        %3794 = vmatpush1.msra.mxu0 0.0
        %3795 = vmatprep.subr.mxu0 0.0
        %3796 = vmatpush1.msra.mxu0 0.0
        %3797 = vmatprep.subr.mxu0 0.0
        %3798 = vmatpush1.msra.mxu0 0.0
        %3799 = vmatprep.subr.mxu0 0.0
        %3800 = vmatpush1.msra.mxu0 0.0
        %3801 = vmatprep.subr.mxu0 0.0
        %3802 = vmatpush1.msra.mxu0 0.0
        %3803 = vmatprep.subr.mxu0 0.0
        %3804 = vmatpush1.msra.mxu0 0.0
        %3805 = vmatprep.subr.mxu0 0.0
        %3806 = vmatpush1.msra.mxu0 0.0
        %3807 = vmatprep.subr.mxu0 0.0
        %3808 = vmatpush1.msra.mxu0 0.0
        %3809 = vmatprep.subr.mxu0 0.0
        %3810 = vmatpush1.msra.mxu0 0.0
        %3811 = vmatprep.subr.mxu0 0.0
        %3812 = vmatpush1.msra.mxu0 0.0
        %3813 = vmatprep.subr.mxu0 0.0
        %3814 = vmatpush1.msra.mxu0 0.0
        %3815 = vmatprep.subr.mxu0 0.0
        %3816 = vmatpush1.msra.mxu0 0.0
        %3817 = vmatprep.subr.mxu0 0.0
        %3818 = vmatpush1.msra.mxu0 0.0
        %3819 = vmatprep.subr.mxu0 0.0
        %3820 = vmatpush1.msra.mxu0 0.0
        %3821 = vmatprep.subr.mxu0 0.0
        %3822 = vmatpush1.msra.mxu0 0.0
        %3823 = vmatprep.mubr.f32.mxu0 0.0
        %v3824 = vand.u32 %v3639, 4294901760
        %3825 = vmatmul.mubr.f32.gmra.mrb[0].mxu0 %v3824
        %v3826 = vpop.f32.mrb[0].mxu0
        %v3827 = vadd.f32 %v3724, %v3826
        %v3828 = vpop.f32.mrb[0].mxu0
        %v3829 = vadd.f32 %v3726, %v3828
        %3830 = vmatprep.mubr.f32.mxu0 0.0
        %v3831 = vand.u32 %v3642, 4294901760
        %3832 = vmatmul.mubr.f32.gmra.mrb[0].mxu0 %v3831
        %v3833 = vpop.f32.mrb[0].mxu0
        %v3834 = vadd.f32 %v3735, %v3833
        %v3835 = vpop.f32.mrb[0].mxu0
        %v3836 = vadd.f32 %v3737, %v3835
        %3837 = vdwg.mxu0
        %v3838 = vand.u32 %v3628, 4294901760
        %v3839 = vsub.f32 %v3628, %v3838
        %3840 = vmatprep.subr.mxu0 %v3839
        %v3841 = vand.u32 %v3634, 4294901760
        %v3842 = vsub.f32 %v3634, %v3841
        %3843 = vmatpush1.msra.mxu0 %v3842
        %v3844 = vand.u32 %v3646, 4294901760
        %v3845 = vsub.f32 %v3646, %v3844
        %3846 = vmatprep.subr.mxu0 %v3845
        %v3847 = vand.u32 %v3644, 4294901760
        %v3848 = vsub.f32 %v3644, %v3847
        %3849 = vmatpush1.msra.mxu0 %v3848
        %3850 = vmatprep.subr.mxu0 0.0
        %3851 = vmatpush1.msra.mxu0 0.0
        %3852 = vmatprep.subr.mxu0 0.0
        %3853 = vmatpush1.msra.mxu0 0.0
        %3854 = vmatprep.subr.mxu0 0.0
        %3855 = vmatpush1.msra.mxu0 0.0
        %3856 = vmatprep.subr.mxu0 0.0
        %3857 = vmatpush1.msra.mxu0 0.0
        %3858 = vmatprep.subr.mxu0 0.0
        %3859 = vmatpush1.msra.mxu0 0.0
        %3860 = vmatprep.subr.mxu0 0.0
        %3861 = vmatpush1.msra.mxu0 0.0
        %3862 = vmatprep.subr.mxu0 0.0
        %3863 = vmatpush1.msra.mxu0 0.0
        %3864 = vmatprep.subr.mxu0 0.0
        %3865 = vmatpush1.msra.mxu0 0.0
        %3866 = vmatprep.subr.mxu0 0.0
        %3867 = vmatpush1.msra.mxu0 0.0
        %3868 = vmatprep.subr.mxu0 0.0
        %3869 = vmatpush1.msra.mxu0 0.0
        %3870 = vmatprep.subr.mxu0 0.0
        %3871 = vmatpush1.msra.mxu0 0.0
        %3872 = vmatprep.subr.mxu0 0.0
        %3873 = vmatpush1.msra.mxu0 0.0
        %3874 = vmatprep.subr.mxu0 0.0
        %3875 = vmatpush1.msra.mxu0 0.0
        %3876 = vmatprep.subr.mxu0 0.0
        %3877 = vmatpush1.msra.mxu0 0.0
        %3878 = vmatprep.subr.mxu0 0.0
        %3879 = vmatpush1.msra.mxu0 0.0
        %3880 = vmatprep.subr.mxu0 0.0
        %3881 = vmatpush1.msra.mxu0 0.0
        %3882 = vmatprep.subr.mxu0 0.0
        %3883 = vmatpush1.msra.mxu0 0.0
        %3884 = vmatprep.subr.mxu0 0.0
        %3885 = vmatpush1.msra.mxu0 0.0
        %3886 = vmatprep.subr.mxu0 0.0
        %3887 = vmatpush1.msra.mxu0 0.0
        %3888 = vmatprep.subr.mxu0 0.0
        %3889 = vmatpush1.msra.mxu0 0.0
        %3890 = vmatprep.subr.mxu0 0.0
        %3891 = vmatpush1.msra.mxu0 0.0
        %3892 = vmatprep.subr.mxu0 0.0
        %3893 = vmatpush1.msra.mxu0 0.0
        %3894 = vmatprep.subr.mxu0 0.0
        %3895 = vmatpush1.msra.mxu0 0.0
        %3896 = vmatprep.subr.mxu0 0.0
        %3897 = vmatpush1.msra.mxu0 0.0
        %3898 = vmatprep.subr.mxu0 0.0
        %3899 = vmatpush1.msra.mxu0 0.0
        %3900 = vmatprep.subr.mxu0 0.0
        %3901 = vmatpush1.msra.mxu0 0.0
        %3902 = vmatprep.subr.mxu0 0.0
        %3903 = vmatpush1.msra.mxu0 0.0
        %3904 = vmatprep.subr.mxu0 0.0
        %3905 = vmatpush1.msra.mxu0 0.0
        %3906 = vmatprep.subr.mxu0 0.0
        %3907 = vmatpush1.msra.mxu0 0.0
        %3908 = vmatprep.subr.mxu0 0.0
        %3909 = vmatpush1.msra.mxu0 0.0
        %3910 = vmatprep.mubr.f32.mxu0 0.0
        %v3911 = vand.u32 %v3639, 4294901760
        %v3912 = vsub.f32 %v3639, %v3911
        %3913 = vmatmul.mubr.f32.gmra.mrb[0].mxu0 %v3912
        %v3914 = vpop.f32.mrb[0].mxu0
        %v3915 = vadd.f32 %v3827, %v3914
        %v3916 = vpop.f32.mrb[0].mxu0
        %v3917 = vadd.f32 %v3829, %v3916
        %3918 = vmatprep.mubr.f32.mxu0 0.0
        %v3919 = vand.u32 %v3642, 4294901760
        %v3920 = vsub.f32 %v3642, %v3919
        %3921 = vmatmul.mubr.f32.gmra.mrb[0].mxu0 %v3920
        %v3922 = vpop.f32.mrb[0].mxu0
        %v3923 = vadd.f32 %v3834, %v3922
        %v3924 = vpop.f32.mrb[0].mxu0
        %v3925 = vadd.f32 %v3836, %v3924
        %3926 = vdwg.mxu0
        %v3927 = vand.u32 %v3628, 4294901760
        %3928 = vmatprep.subr.mxu0 %v3927
        %v3929 = vand.u32 %v3634, 4294901760
        %3930 = vmatpush1.msra.mxu0 %v3929
        %v3931 = vand.u32 %v3646, 4294901760
        %3932 = vmatprep.subr.mxu0 %v3931
        %v3933 = vand.u32 %v3644, 4294901760
        %3934 = vmatpush1.msra.mxu0 %v3933
        %3935 = vmatprep.subr.mxu0 0.0
        %3936 = vmatpush1.msra.mxu0 0.0
        %3937 = vmatprep.subr.mxu0 0.0
        %3938 = vmatpush1.msra.mxu0 0.0
        %3939 = vmatprep.subr.mxu0 0.0
        %3940 = vmatpush1.msra.mxu0 0.0
        %3941 = vmatprep.subr.mxu0 0.0
        %3942 = vmatpush1.msra.mxu0 0.0
        %3943 = vmatprep.subr.mxu0 0.0
        %3944 = vmatpush1.msra.mxu0 0.0
        %3945 = vmatprep.subr.mxu0 0.0
        %3946 = vmatpush1.msra.mxu0 0.0
        %3947 = vmatprep.subr.mxu0 0.0
        %3948 = vmatpush1.msra.mxu0 0.0
        %3949 = vmatprep.subr.mxu0 0.0
        %3950 = vmatpush1.msra.mxu0 0.0
        %3951 = vmatprep.subr.mxu0 0.0
        %3952 = vmatpush1.msra.mxu0 0.0
        %3953 = vmatprep.subr.mxu0 0.0
        %3954 = vmatpush1.msra.mxu0 0.0
        %3955 = vmatprep.subr.mxu0 0.0
        %3956 = vmatpush1.msra.mxu0 0.0
        %3957 = vmatprep.subr.mxu0 0.0
        %3958 = vmatpush1.msra.mxu0 0.0
        %3959 = vmatprep.subr.mxu0 0.0
        %3960 = vmatpush1.msra.mxu0 0.0
        %3961 = vmatprep.subr.mxu0 0.0
        %3962 = vmatpush1.msra.mxu0 0.0
        %3963 = vmatprep.subr.mxu0 0.0
        %3964 = vmatpush1.msra.mxu0 0.0
        %3965 = vmatprep.subr.mxu0 0.0
        %3966 = vmatpush1.msra.mxu0 0.0
        %3967 = vmatprep.subr.mxu0 0.0
        %3968 = vmatpush1.msra.mxu0 0.0
        %3969 = vmatprep.subr.mxu0 0.0
        %3970 = vmatpush1.msra.mxu0 0.0
        %3971 = vmatprep.subr.mxu0 0.0
        %3972 = vmatpush1.msra.mxu0 0.0
        %3973 = vmatprep.subr.mxu0 0.0
        %3974 = vmatpush1.msra.mxu0 0.0
        %3975 = vmatprep.subr.mxu0 0.0
        %3976 = vmatpush1.msra.mxu0 0.0
        %3977 = vmatprep.subr.mxu0 0.0
        %3978 = vmatpush1.msra.mxu0 0.0
        %3979 = vmatprep.subr.mxu0 0.0
        %3980 = vmatpush1.msra.mxu0 0.0
        %3981 = vmatprep.subr.mxu0 0.0
        %3982 = vmatpush1.msra.mxu0 0.0
        %3983 = vmatprep.subr.mxu0 0.0
        %3984 = vmatpush1.msra.mxu0 0.0
        %3985 = vmatprep.subr.mxu0 0.0
        %3986 = vmatpush1.msra.mxu0 0.0
        %3987 = vmatprep.subr.mxu0 0.0
        %3988 = vmatpush1.msra.mxu0 0.0
        %3989 = vmatprep.subr.mxu0 0.0
        %3990 = vmatpush1.msra.mxu0 0.0
        %3991 = vmatprep.subr.mxu0 0.0
        %3992 = vmatpush1.msra.mxu0 0.0
        %3993 = vmatprep.subr.mxu0 0.0
        %3994 = vmatpush1.msra.mxu0 0.0
        %3995 = vmatprep.mubr.f32.mxu0 0.0
        %v3996 = vand.u32 %v3639, 4294901760
        %v3997 = vsub.f32 %v3639, %v3996
        %v3998 = vand.u32 %v3997, 4294901760
        %3999 = vmatmul.mubr.f32.gmra.mrb[0].mxu0 %v3998
        %v4000 = vpop.f32.mrb[0].mxu0
        %v4001 = vadd.f32 %v3915, %v4000
        %v4002 = vpop.f32.mrb[0].mxu0
        %v4003 = vadd.f32 %v3917, %v4002
        %4004 = vmatprep.mubr.f32.mxu0 0.0
        %v4005 = vand.u32 %v3642, 4294901760
        %v4006 = vsub.f32 %v3642, %v4005
        %v4007 = vand.u32 %v4006, 4294901760
        %4008 = vmatmul.mubr.f32.gmra.mrb[0].mxu0 %v4007
        %v4009 = vpop.f32.mrb[0].mxu0
        %v4010 = vadd.f32 %v3923, %v4009
        %v4011 = vpop.f32.mrb[0].mxu0
        %v4012 = vadd.f32 %v3925, %v4011
        %4013 = vdwg.mxu0
        %v4014 = vand.u32 %v3628, 4294901760
        %v4015 = vsub.f32 %v3628, %v4014
        %v4016 = vand.u32 %v4015, 4294901760
        %4017 = vmatprep.subr.mxu0 %v4016
        %v4018 = vand.u32 %v3634, 4294901760
        %v4019 = vsub.f32 %v3634, %v4018
        %v4020 = vand.u32 %v4019, 4294901760
        %4021 = vmatpush1.msra.mxu0 %v4020
        %v4022 = vand.u32 %v3646, 4294901760
        %v4023 = vsub.f32 %v3646, %v4022
        %v4024 = vand.u32 %v4023, 4294901760
        %4025 = vmatprep.subr.mxu0 %v4024
        %v4026 = vand.u32 %v3644, 4294901760
        %v4027 = vsub.f32 %v3644, %v4026
        %v4028 = vand.u32 %v4027, 4294901760
        %4029 = vmatpush1.msra.mxu0 %v4028
        %4030 = vmatprep.subr.mxu0 0.0
        %4031 = vmatpush1.msra.mxu0 0.0
        %4032 = vmatprep.subr.mxu0 0.0
        %4033 = vmatpush1.msra.mxu0 0.0
        %4034 = vmatprep.subr.mxu0 0.0
        %4035 = vmatpush1.msra.mxu0 0.0
        %4036 = vmatprep.subr.mxu0 0.0
        %4037 = vmatpush1.msra.mxu0 0.0
        %4038 = vmatprep.subr.mxu0 0.0
        %4039 = vmatpush1.msra.mxu0 0.0
        %4040 = vmatprep.subr.mxu0 0.0
        %4041 = vmatpush1.msra.mxu0 0.0
        %4042 = vmatprep.subr.mxu0 0.0
        %4043 = vmatpush1.msra.mxu0 0.0
        %4044 = vmatprep.subr.mxu0 0.0
        %4045 = vmatpush1.msra.mxu0 0.0
        %4046 = vmatprep.subr.mxu0 0.0
        %4047 = vmatpush1.msra.mxu0 0.0
        %4048 = vmatprep.subr.mxu0 0.0
        %4049 = vmatpush1.msra.mxu0 0.0
        %4050 = vmatprep.subr.mxu0 0.0
        %4051 = vmatpush1.msra.mxu0 0.0
        %4052 = vmatprep.subr.mxu0 0.0
        %4053 = vmatpush1.msra.mxu0 0.0
        %4054 = vmatprep.subr.mxu0 0.0
        %4055 = vmatpush1.msra.mxu0 0.0
        %4056 = vmatprep.subr.mxu0 0.0
        %4057 = vmatpush1.msra.mxu0 0.0
        %4058 = vmatprep.subr.mxu0 0.0
        %4059 = vmatpush1.msra.mxu0 0.0
        %4060 = vmatprep.subr.mxu0 0.0
        %4061 = vmatpush1.msra.mxu0 0.0
        %4062 = vmatprep.subr.mxu0 0.0
        %4063 = vmatpush1.msra.mxu0 0.0
        %4064 = vmatprep.subr.mxu0 0.0
        %4065 = vmatpush1.msra.mxu0 0.0
        %4066 = vmatprep.subr.mxu0 0.0
        %4067 = vmatpush1.msra.mxu0 0.0
        %4068 = vmatprep.subr.mxu0 0.0
        %4069 = vmatpush1.msra.mxu0 0.0
        %4070 = vmatprep.subr.mxu0 0.0
        %4071 = vmatpush1.msra.mxu0 0.0
        %4072 = vmatprep.subr.mxu0 0.0
        %4073 = vmatpush1.msra.mxu0 0.0
        %4074 = vmatprep.subr.mxu0 0.0
        %4075 = vmatpush1.msra.mxu0 0.0
        %4076 = vmatprep.subr.mxu0 0.0
        %4077 = vmatpush1.msra.mxu0 0.0
        %4078 = vmatprep.subr.mxu0 0.0
        %4079 = vmatpush1.msra.mxu0 0.0
        %4080 = vmatprep.subr.mxu0 0.0
        %4081 = vmatpush1.msra.mxu0 0.0
        %4082 = vmatprep.subr.mxu0 0.0
        %4083 = vmatpush1.msra.mxu0 0.0
        %4084 = vmatprep.subr.mxu0 0.0
        %4085 = vmatpush1.msra.mxu0 0.0
        %4086 = vmatprep.subr.mxu0 0.0
        %4087 = vmatpush1.msra.mxu0 0.0
        %4088 = vmatprep.subr.mxu0 0.0
        %4089 = vmatpush1.msra.mxu0 0.0
        %4090 = vmatprep.mubr.f32.mxu0 0.0
        %v4091 = vand.u32 %v3639, 4294901760
        %4092 = vmatmul.mubr.f32.gmra.mrb[0].mxu0 %v4091
        %v4093 = vpop.f32.mrb[0].mxu0
        %v4094 = vadd.f32 %v4001, %v4093
        %v4095 = vpop.f32.mrb[0].mxu0
        %v4096 = vadd.f32 %v4003, %v4095
        %4097 = vmatprep.mubr.f32.mxu0 0.0
        %v4098 = vand.u32 %v3642, 4294901760
        %4099 = vmatmul.mubr.f32.gmra.mrb[0].mxu0 %v4098
        %v4100 = vpop.f32.mrb[0].mxu0
        %v4101 = vadd.f32 %v4010, %v4100
        %v4102 = vpop.f32.mrb[0].mxu0
        %v4103 = vadd.f32 %v4012, %v4102
        %4104 = vdwg.mxu0
        %v4105 = vand.u32 %v3628, 4294901760
        %4106 = vmatprep.subr.mxu0 %v4105
        %v4107 = vand.u32 %v3634, 4294901760
        %4108 = vmatpush1.msra.mxu0 %v4107
        %v4109 = vand.u32 %v3646, 4294901760
        %4110 = vmatprep.subr.mxu0 %v4109
        %v4111 = vand.u32 %v3644, 4294901760
        %4112 = vmatpush1.msra.mxu0 %v4111
        %4113 = vmatprep.subr.mxu0 0.0
        %4114 = vmatpush1.msra.mxu0 0.0
        %4115 = vmatprep.subr.mxu0 0.0
        %4116 = vmatpush1.msra.mxu0 0.0
        %4117 = vmatprep.subr.mxu0 0.0
        %4118 = vmatpush1.msra.mxu0 0.0
        %4119 = vmatprep.subr.mxu0 0.0
        %4120 = vmatpush1.msra.mxu0 0.0
        %4121 = vmatprep.subr.mxu0 0.0
        %4122 = vmatpush1.msra.mxu0 0.0
        %4123 = vmatprep.subr.mxu0 0.0
        %4124 = vmatpush1.msra.mxu0 0.0
        %4125 = vmatprep.subr.mxu0 0.0
        %4126 = vmatpush1.msra.mxu0 0.0
        %4127 = vmatprep.subr.mxu0 0.0
        %4128 = vmatpush1.msra.mxu0 0.0
        %4129 = vmatprep.subr.mxu0 0.0
        %4130 = vmatpush1.msra.mxu0 0.0
        %4131 = vmatprep.subr.mxu0 0.0
        %4132 = vmatpush1.msra.mxu0 0.0
        %4133 = vmatprep.subr.mxu0 0.0
        %4134 = vmatpush1.msra.mxu0 0.0
        %4135 = vmatprep.subr.mxu0 0.0
        %4136 = vmatpush1.msra.mxu0 0.0
        %4137 = vmatprep.subr.mxu0 0.0
        %4138 = vmatpush1.msra.mxu0 0.0
        %4139 = vmatprep.subr.mxu0 0.0
        %4140 = vmatpush1.msra.mxu0 0.0
        %4141 = vmatprep.subr.mxu0 0.0
        %4142 = vmatpush1.msra.mxu0 0.0
        %4143 = vmatprep.subr.mxu0 0.0
        %4144 = vmatpush1.msra.mxu0 0.0
        %4145 = vmatprep.subr.mxu0 0.0
        %4146 = vmatpush1.msra.mxu0 0.0
        %4147 = vmatprep.subr.mxu0 0.0
        %4148 = vmatpush1.msra.mxu0 0.0
        %4149 = vmatprep.subr.mxu0 0.0
        %4150 = vmatpush1.msra.mxu0 0.0
        %4151 = vmatprep.subr.mxu0 0.0
        %4152 = vmatpush1.msra.mxu0 0.0
        %4153 = vmatprep.subr.mxu0 0.0
        %4154 = vmatpush1.msra.mxu0 0.0
        %4155 = vmatprep.subr.mxu0 0.0
        %4156 = vmatpush1.msra.mxu0 0.0
        %4157 = vmatprep.subr.mxu0 0.0
        %4158 = vmatpush1.msra.mxu0 0.0
        %4159 = vmatprep.subr.mxu0 0.0
        %4160 = vmatpush1.msra.mxu0 0.0
        %4161 = vmatprep.subr.mxu0 0.0
        %4162 = vmatpush1.msra.mxu0 0.0
        %4163 = vmatprep.subr.mxu0 0.0
        %4164 = vmatpush1.msra.mxu0 0.0
        %4165 = vmatprep.subr.mxu0 0.0
        %4166 = vmatpush1.msra.mxu0 0.0
        %4167 = vmatprep.subr.mxu0 0.0
        %4168 = vmatpush1.msra.mxu0 0.0
        %4169 = vmatprep.subr.mxu0 0.0
        %4170 = vmatpush1.msra.mxu0 0.0
        %4171 = vmatprep.subr.mxu0 0.0
        %4172 = vmatpush1.msra.mxu0 0.0
        %4173 = vmatprep.mubr.f32.mxu0 0.0
        %v4174 = vand.u32 %v3639, 4294901760
        %4175 = vmatmul.mubr.f32.gmra.mrb[0].mxu0 %v4174
        %v4176 = vpop.f32.mrb[0].mxu0
        %v4177 = vadd.f32 %v4094, %v4176
        %v4178 = vpop.f32.mrb[0].mxu0
        %v4179 = vadd.f32 %v4096, %v4178
        %4180 = vmatprep.mubr.f32.mxu0 0.0
        %v4181 = vand.u32 %v3642, 4294901760
        %4182 = vmatmul.mubr.f32.gmra.mrb[0].mxu0 %v4181
        %v4183 = vpop.f32.mrb[0].mxu0
        %v4184 = vadd.f32 %v4101, %v4183
        %v4185 = vpop.f32.mrb[0].mxu0
        %v4186 = vadd.f32 %v4103, %v4185
        %4187 = vdwg.mxu0
        %v4188 = vadd.f32 %v3618, %v4177
        %v4189 = vadd.f32 %v3619, %v4179
        %v4190 = vadd.f32 %v3620, %v4184
        %v4191 = vadd.f32 %v3621, %v4186
        %s4192 = scalar_lea.vmem [#allocation3], 112
        %v4193 = vld [vmem:[%s4192] sm:$0xff]
        %v4194 = vld [vmem:[%s4192 + $0x8] sm:$0x3]
        %4195 = vrot.lane.b32.xlu0 %v214, 95
        %v4196 = vpop.permute.xlu0 %4195
        %4197 = vrot.lane.b32.xlu0 %v215, 95
        %v4198 = vpop.permute.xlu0 %4197
        %4199 = vrot.lane.b32.xlu0 %v216, 95
        %v4200 = vpop.permute.xlu0 %4199
        %4201 = vrot.lane.b32.xlu0 %v217, 95
        %v4202 = vpop.permute.xlu0 %4201
        %vm4203 = vcmask 777216
        %v4204 = vsel %vm4203, %v4196, %v4198
        %v4205 = vsel %vm4203, %v4200, %v4202
        %v4209 = vsel %vm240, %v4193, 0
        %v4212 = vsel %vm240, %v4194, 0
        %v4214 = vsel %vm247, %v4205, 0
        %v4216 = vsel %vm247, %v4202, 0
        %v4218 = vand.u32 %v4198, 4294901760
        %4219 = vmatprep.subr.mxu0 %v4218
        %v4220 = vand.u32 %v4204, 4294901760
        %4221 = vmatpush1.msra.mxu0 %v4220
        %v4222 = vand.u32 %v4216, 4294901760
        %4223 = vmatprep.subr.mxu0 %v4222
        %v4224 = vand.u32 %v4214, 4294901760
        %4225 = vmatpush1.msra.mxu0 %v4224
        %4226 = vmatprep.subr.mxu0 0.0
        %4227 = vmatpush1.msra.mxu0 0.0
        %4228 = vmatprep.subr.mxu0 0.0
        %4229 = vmatpush1.msra.mxu0 0.0
        %4230 = vmatprep.subr.mxu0 0.0
        %4231 = vmatpush1.msra.mxu0 0.0
        %4232 = vmatprep.subr.mxu0 0.0
        %4233 = vmatpush1.msra.mxu0 0.0
        %4234 = vmatprep.subr.mxu0 0.0
        %4235 = vmatpush1.msra.mxu0 0.0
        %4236 = vmatprep.subr.mxu0 0.0
        %4237 = vmatpush1.msra.mxu0 0.0
        %4238 = vmatprep.subr.mxu0 0.0
        %4239 = vmatpush1.msra.mxu0 0.0
        %4240 = vmatprep.subr.mxu0 0.0
        %4241 = vmatpush1.msra.mxu0 0.0
        %4242 = vmatprep.subr.mxu0 0.0
        %4243 = vmatpush1.msra.mxu0 0.0
        %4244 = vmatprep.subr.mxu0 0.0
        %4245 = vmatpush1.msra.mxu0 0.0
        %4246 = vmatprep.subr.mxu0 0.0
        %4247 = vmatpush1.msra.mxu0 0.0
        %4248 = vmatprep.subr.mxu0 0.0
        %4249 = vmatpush1.msra.mxu0 0.0
        %4250 = vmatprep.subr.mxu0 0.0
        %4251 = vmatpush1.msra.mxu0 0.0
        %4252 = vmatprep.subr.mxu0 0.0
        %4253 = vmatpush1.msra.mxu0 0.0
        %4254 = vmatprep.subr.mxu0 0.0
        %4255 = vmatpush1.msra.mxu0 0.0
        %4256 = vmatprep.subr.mxu0 0.0
        %4257 = vmatpush1.msra.mxu0 0.0
        %4258 = vmatprep.subr.mxu0 0.0
        %4259 = vmatpush1.msra.mxu0 0.0
        %4260 = vmatprep.subr.mxu0 0.0
        %4261 = vmatpush1.msra.mxu0 0.0
        %4262 = vmatprep.subr.mxu0 0.0
        %4263 = vmatpush1.msra.mxu0 0.0
        %4264 = vmatprep.subr.mxu0 0.0
        %4265 = vmatpush1.msra.mxu0 0.0
        %4266 = vmatprep.subr.mxu0 0.0
        %4267 = vmatpush1.msra.mxu0 0.0
        %4268 = vmatprep.subr.mxu0 0.0
        %4269 = vmatpush1.msra.mxu0 0.0
        %4270 = vmatprep.subr.mxu0 0.0
        %4271 = vmatpush1.msra.mxu0 0.0
        %4272 = vmatprep.subr.mxu0 0.0
        %4273 = vmatpush1.msra.mxu0 0.0
        %4274 = vmatprep.subr.mxu0 0.0
        %4275 = vmatpush1.msra.mxu0 0.0
        %4276 = vmatprep.subr.mxu0 0.0
        %4277 = vmatpush1.msra.mxu0 0.0
        %4278 = vmatprep.subr.mxu0 0.0
        %4279 = vmatpush1.msra.mxu0 0.0
        %4280 = vmatprep.subr.mxu0 0.0
        %4281 = vmatpush1.msra.mxu0 0.0
        %4282 = vmatprep.subr.mxu0 0.0
        %4283 = vmatpush1.msra.mxu0 0.0
        %4284 = vmatprep.subr.mxu0 0.0
        %4285 = vmatpush1.msra.mxu0 0.0
        %4286 = vmatprep.mubr.f32.mxu0 0.0
        %v4287 = vand.u32 %v4209, 4294901760
        %v4288 = vsub.f32 %v4209, %v4287
        %v4289 = vand.u32 %v4288, 4294901760
        %v4290 = vsub.f32 %v4288, %v4289
        %v4291 = vand.u32 %v4290, 4294901760
        %4292 = vmatmul.mubr.f32.gmra.mrb[0].mxu0 %v4291
        %v4293 = vpop.f32.mrb[0].mxu0
        %v4294 = vadd.f32 0.0, %v4293
        %v4295 = vpop.f32.mrb[0].mxu0
        %v4296 = vadd.f32 0.0, %v4295
        %4297 = vmatprep.mubr.f32.mxu0 0.0
        %v4298 = vand.u32 %v4212, 4294901760
        %v4299 = vsub.f32 %v4212, %v4298
        %v4300 = vand.u32 %v4299, 4294901760
        %v4301 = vsub.f32 %v4299, %v4300
        %v4302 = vand.u32 %v4301, 4294901760
        %4303 = vmatmul.mubr.f32.gmra.mrb[0].mxu0 %v4302
        %v4304 = vpop.f32.mrb[0].mxu0
        %v4305 = vadd.f32 0.0, %v4304
        %v4306 = vpop.f32.mrb[0].mxu0
        %v4307 = vadd.f32 0.0, %v4306
        %4308 = vdwg.mxu0
        %v4309 = vand.u32 %v4198, 4294901760
        %v4310 = vsub.f32 %v4198, %v4309
        %v4311 = vand.u32 %v4310, 4294901760
        %v4312 = vsub.f32 %v4310, %v4311
        %v4313 = vand.u32 %v4312, 4294901760
        %4314 = vmatprep.subr.mxu0 %v4313
        %v4315 = vand.u32 %v4204, 4294901760
        %v4316 = vsub.f32 %v4204, %v4315
        %v4317 = vand.u32 %v4316, 4294901760
        %v4318 = vsub.f32 %v4316, %v4317
        %v4319 = vand.u32 %v4318, 4294901760
        %4320 = vmatpush1.msra.mxu0 %v4319
        %v4321 = vand.u32 %v4216, 4294901760
        %v4322 = vsub.f32 %v4216, %v4321
        %v4323 = vand.u32 %v4322, 4294901760
        %v4324 = vsub.f32 %v4322, %v4323
        %v4325 = vand.u32 %v4324, 4294901760
        %4326 = vmatprep.subr.mxu0 %v4325
        %v4327 = vand.u32 %v4214, 4294901760
        %v4328 = vsub.f32 %v4214, %v4327
        %v4329 = vand.u32 %v4328, 4294901760
        %v4330 = vsub.f32 %v4328, %v4329
        %v4331 = vand.u32 %v4330, 4294901760
        %4332 = vmatpush1.msra.mxu0 %v4331
        %4333 = vmatprep.subr.mxu0 0.0
        %4334 = vmatpush1.msra.mxu0 0.0
        %4335 = vmatprep.subr.mxu0 0.0
        %4336 = vmatpush1.msra.mxu0 0.0
        %4337 = vmatprep.subr.mxu0 0.0
        %4338 = vmatpush1.msra.mxu0 0.0
        %4339 = vmatprep.subr.mxu0 0.0
        %4340 = vmatpush1.msra.mxu0 0.0
        %4341 = vmatprep.subr.mxu0 0.0
        %4342 = vmatpush1.msra.mxu0 0.0
        %4343 = vmatprep.subr.mxu0 0.0
        %4344 = vmatpush1.msra.mxu0 0.0
        %4345 = vmatprep.subr.mxu0 0.0
        %4346 = vmatpush1.msra.mxu0 0.0
        %4347 = vmatprep.subr.mxu0 0.0
        %4348 = vmatpush1.msra.mxu0 0.0
        %4349 = vmatprep.subr.mxu0 0.0
        %4350 = vmatpush1.msra.mxu0 0.0
        %4351 = vmatprep.subr.mxu0 0.0
        %4352 = vmatpush1.msra.mxu0 0.0
        %4353 = vmatprep.subr.mxu0 0.0
        %4354 = vmatpush1.msra.mxu0 0.0
        %4355 = vmatprep.subr.mxu0 0.0
        %4356 = vmatpush1.msra.mxu0 0.0
        %4357 = vmatprep.subr.mxu0 0.0
        %4358 = vmatpush1.msra.mxu0 0.0
        %4359 = vmatprep.subr.mxu0 0.0
        %4360 = vmatpush1.msra.mxu0 0.0
        %4361 = vmatprep.subr.mxu0 0.0
        %4362 = vmatpush1.msra.mxu0 0.0
        %4363 = vmatprep.subr.mxu0 0.0
        %4364 = vmatpush1.msra.mxu0 0.0
        %4365 = vmatprep.subr.mxu0 0.0
        %4366 = vmatpush1.msra.mxu0 0.0
        %4367 = vmatprep.subr.mxu0 0.0
        %4368 = vmatpush1.msra.mxu0 0.0
        %4369 = vmatprep.subr.mxu0 0.0
        %4370 = vmatpush1.msra.mxu0 0.0
        %4371 = vmatprep.subr.mxu0 0.0
        %4372 = vmatpush1.msra.mxu0 0.0
        %4373 = vmatprep.subr.mxu0 0.0
        %4374 = vmatpush1.msra.mxu0 0.0
        %4375 = vmatprep.subr.mxu0 0.0
        %4376 = vmatpush1.msra.mxu0 0.0
        %4377 = vmatprep.subr.mxu0 0.0
        %4378 = vmatpush1.msra.mxu0 0.0
        %4379 = vmatprep.subr.mxu0 0.0
        %4380 = vmatpush1.msra.mxu0 0.0
        %4381 = vmatprep.subr.mxu0 0.0
        %4382 = vmatpush1.msra.mxu0 0.0
        %4383 = vmatprep.subr.mxu0 0.0
        %4384 = vmatpush1.msra.mxu0 0.0
        %4385 = vmatprep.subr.mxu0 0.0
        %4386 = vmatpush1.msra.mxu0 0.0
        %4387 = vmatprep.subr.mxu0 0.0
        %4388 = vmatpush1.msra.mxu0 0.0
        %4389 = vmatprep.subr.mxu0 0.0
        %4390 = vmatpush1.msra.mxu0 0.0
        %4391 = vmatprep.subr.mxu0 0.0
        %4392 = vmatpush1.msra.mxu0 0.0
        %4393 = vmatprep.mubr.f32.mxu0 0.0
        %v4394 = vand.u32 %v4209, 4294901760
        %4395 = vmatmul.mubr.f32.gmra.mrb[0].mxu0 %v4394
        %v4396 = vpop.f32.mrb[0].mxu0
        %v4397 = vadd.f32 %v4294, %v4396
        %v4398 = vpop.f32.mrb[0].mxu0
        %v4399 = vadd.f32 %v4296, %v4398
        %4400 = vmatprep.mubr.f32.mxu0 0.0
        %v4401 = vand.u32 %v4212, 4294901760
        %4402 = vmatmul.mubr.f32.gmra.mrb[0].mxu0 %v4401
        %v4403 = vpop.f32.mrb[0].mxu0
        %v4404 = vadd.f32 %v4305, %v4403
        %v4405 = vpop.f32.mrb[0].mxu0
        %v4406 = vadd.f32 %v4307, %v4405
        %4407 = vdwg.mxu0
        %v4408 = vand.u32 %v4198, 4294901760
        %v4409 = vsub.f32 %v4198, %v4408
        %4410 = vmatprep.subr.mxu0 %v4409
        %v4411 = vand.u32 %v4204, 4294901760
        %v4412 = vsub.f32 %v4204, %v4411
        %4413 = vmatpush1.msra.mxu0 %v4412
        %v4414 = vand.u32 %v4216, 4294901760
        %v4415 = vsub.f32 %v4216, %v4414
        %4416 = vmatprep.subr.mxu0 %v4415
        %v4417 = vand.u32 %v4214, 4294901760
        %v4418 = vsub.f32 %v4214, %v4417
        %4419 = vmatpush1.msra.mxu0 %v4418
        %4420 = vmatprep.subr.mxu0 0.0
        %4421 = vmatpush1.msra.mxu0 0.0
        %4422 = vmatprep.subr.mxu0 0.0
        %4423 = vmatpush1.msra.mxu0 0.0
        %4424 = vmatprep.subr.mxu0 0.0
        %4425 = vmatpush1.msra.mxu0 0.0
        %4426 = vmatprep.subr.mxu0 0.0
        %4427 = vmatpush1.msra.mxu0 0.0
        %4428 = vmatprep.subr.mxu0 0.0
        %4429 = vmatpush1.msra.mxu0 0.0
        %4430 = vmatprep.subr.mxu0 0.0
        %4431 = vmatpush1.msra.mxu0 0.0
        %4432 = vmatprep.subr.mxu0 0.0
        %4433 = vmatpush1.msra.mxu0 0.0
        %4434 = vmatprep.subr.mxu0 0.0
        %4435 = vmatpush1.msra.mxu0 0.0
        %4436 = vmatprep.subr.mxu0 0.0
        %4437 = vmatpush1.msra.mxu0 0.0
        %4438 = vmatprep.subr.mxu0 0.0
        %4439 = vmatpush1.msra.mxu0 0.0
        %4440 = vmatprep.subr.mxu0 0.0
        %4441 = vmatpush1.msra.mxu0 0.0
        %4442 = vmatprep.subr.mxu0 0.0
        %4443 = vmatpush1.msra.mxu0 0.0
        %4444 = vmatprep.subr.mxu0 0.0
        %4445 = vmatpush1.msra.mxu0 0.0
        %4446 = vmatprep.subr.mxu0 0.0
        %4447 = vmatpush1.msra.mxu0 0.0
        %4448 = vmatprep.subr.mxu0 0.0
        %4449 = vmatpush1.msra.mxu0 0.0
        %4450 = vmatprep.subr.mxu0 0.0
        %4451 = vmatpush1.msra.mxu0 0.0
        %4452 = vmatprep.subr.mxu0 0.0
        %4453 = vmatpush1.msra.mxu0 0.0
        %4454 = vmatprep.subr.mxu0 0.0
        %4455 = vmatpush1.msra.mxu0 0.0
        %4456 = vmatprep.subr.mxu0 0.0
        %4457 = vmatpush1.msra.mxu0 0.0
        %4458 = vmatprep.subr.mxu0 0.0
        %4459 = vmatpush1.msra.mxu0 0.0
        %4460 = vmatprep.subr.mxu0 0.0
        %4461 = vmatpush1.msra.mxu0 0.0
        %4462 = vmatprep.subr.mxu0 0.0
        %4463 = vmatpush1.msra.mxu0 0.0
        %4464 = vmatprep.subr.mxu0 0.0
        %4465 = vmatpush1.msra.mxu0 0.0
        %4466 = vmatprep.subr.mxu0 0.0
        %4467 = vmatpush1.msra.mxu0 0.0
        %4468 = vmatprep.subr.mxu0 0.0
        %4469 = vmatpush1.msra.mxu0 0.0
        %4470 = vmatprep.subr.mxu0 0.0
        %4471 = vmatpush1.msra.mxu0 0.0
        %4472 = vmatprep.subr.mxu0 0.0
        %4473 = vmatpush1.msra.mxu0 0.0
        %4474 = vmatprep.subr.mxu0 0.0
        %4475 = vmatpush1.msra.mxu0 0.0
        %4476 = vmatprep.subr.mxu0 0.0
        %4477 = vmatpush1.msra.mxu0 0.0
        %4478 = vmatprep.subr.mxu0 0.0
        %4479 = vmatpush1.msra.mxu0 0.0
        %4480 = vmatprep.mubr.f32.mxu0 0.0
        %v4481 = vand.u32 %v4209, 4294901760
        %v4482 = vsub.f32 %v4209, %v4481
        %4483 = vmatmul.mubr.f32.gmra.mrb[0].mxu0 %v4482
        %v4484 = vpop.f32.mrb[0].mxu0
        %v4485 = vadd.f32 %v4397, %v4484
        %v4486 = vpop.f32.mrb[0].mxu0
        %v4487 = vadd.f32 %v4399, %v4486
        %4488 = vmatprep.mubr.f32.mxu0 0.0
        %v4489 = vand.u32 %v4212, 4294901760
        %v4490 = vsub.f32 %v4212, %v4489
        %4491 = vmatmul.mubr.f32.gmra.mrb[0].mxu0 %v4490
        %v4492 = vpop.f32.mrb[0].mxu0
        %v4493 = vadd.f32 %v4404, %v4492
        %v4494 = vpop.f32.mrb[0].mxu0
        %v4495 = vadd.f32 %v4406, %v4494
        %4496 = vdwg.mxu0
        %v4497 = vand.u32 %v4198, 4294901760
        %4498 = vmatprep.subr.mxu0 %v4497
        %v4499 = vand.u32 %v4204, 4294901760
        %4500 = vmatpush1.msra.mxu0 %v4499
        %v4501 = vand.u32 %v4216, 4294901760
        %4502 = vmatprep.subr.mxu0 %v4501
        %v4503 = vand.u32 %v4214, 4294901760
        %4504 = vmatpush1.msra.mxu0 %v4503
        %4505 = vmatprep.subr.mxu0 0.0
        %4506 = vmatpush1.msra.mxu0 0.0
        %4507 = vmatprep.subr.mxu0 0.0
        %4508 = vmatpush1.msra.mxu0 0.0
        %4509 = vmatprep.subr.mxu0 0.0
        %4510 = vmatpush1.msra.mxu0 0.0
        %4511 = vmatprep.subr.mxu0 0.0
        %4512 = vmatpush1.msra.mxu0 0.0
        %4513 = vmatprep.subr.mxu0 0.0
        %4514 = vmatpush1.msra.mxu0 0.0
        %4515 = vmatprep.subr.mxu0 0.0
        %4516 = vmatpush1.msra.mxu0 0.0
        %4517 = vmatprep.subr.mxu0 0.0
        %4518 = vmatpush1.msra.mxu0 0.0
        %4519 = vmatprep.subr.mxu0 0.0
        %4520 = vmatpush1.msra.mxu0 0.0
        %4521 = vmatprep.subr.mxu0 0.0
        %4522 = vmatpush1.msra.mxu0 0.0
        %4523 = vmatprep.subr.mxu0 0.0
        %4524 = vmatpush1.msra.mxu0 0.0
        %4525 = vmatprep.subr.mxu0 0.0
        %4526 = vmatpush1.msra.mxu0 0.0
        %4527 = vmatprep.subr.mxu0 0.0
        %4528 = vmatpush1.msra.mxu0 0.0
        %4529 = vmatprep.subr.mxu0 0.0
        %4530 = vmatpush1.msra.mxu0 0.0
        %4531 = vmatprep.subr.mxu0 0.0
        %4532 = vmatpush1.msra.mxu0 0.0
        %4533 = vmatprep.subr.mxu0 0.0
        %4534 = vmatpush1.msra.mxu0 0.0
        %4535 = vmatprep.subr.mxu0 0.0
        %4536 = vmatpush1.msra.mxu0 0.0
        %4537 = vmatprep.subr.mxu0 0.0
        %4538 = vmatpush1.msra.mxu0 0.0
        %4539 = vmatprep.subr.mxu0 0.0
        %4540 = vmatpush1.msra.mxu0 0.0
        %4541 = vmatprep.subr.mxu0 0.0
        %4542 = vmatpush1.msra.mxu0 0.0
        %4543 = vmatprep.subr.mxu0 0.0
        %4544 = vmatpush1.msra.mxu0 0.0
        %4545 = vmatprep.subr.mxu0 0.0
        %4546 = vmatpush1.msra.mxu0 0.0
        %4547 = vmatprep.subr.mxu0 0.0
        %4548 = vmatpush1.msra.mxu0 0.0
        %4549 = vmatprep.subr.mxu0 0.0
        %4550 = vmatpush1.msra.mxu0 0.0
        %4551 = vmatprep.subr.mxu0 0.0
        %4552 = vmatpush1.msra.mxu0 0.0
        %4553 = vmatprep.subr.mxu0 0.0
        %4554 = vmatpush1.msra.mxu0 0.0
        %4555 = vmatprep.subr.mxu0 0.0
        %4556 = vmatpush1.msra.mxu0 0.0
        %4557 = vmatprep.subr.mxu0 0.0
        %4558 = vmatpush1.msra.mxu0 0.0
        %4559 = vmatprep.subr.mxu0 0.0
        %4560 = vmatpush1.msra.mxu0 0.0
        %4561 = vmatprep.subr.mxu0 0.0
        %4562 = vmatpush1.msra.mxu0 0.0
        %4563 = vmatprep.subr.mxu0 0.0
        %4564 = vmatpush1.msra.mxu0 0.0
        %4565 = vmatprep.mubr.f32.mxu0 0.0
        %v4566 = vand.u32 %v4209, 4294901760
        %v4567 = vsub.f32 %v4209, %v4566
        %v4568 = vand.u32 %v4567, 4294901760
        %4569 = vmatmul.mubr.f32.gmra.mrb[0].mxu0 %v4568
        %v4570 = vpop.f32.mrb[0].mxu0
        %v4571 = vadd.f32 %v4485, %v4570
        %v4572 = vpop.f32.mrb[0].mxu0
        %v4573 = vadd.f32 %v4487, %v4572
        %4574 = vmatprep.mubr.f32.mxu0 0.0
        %v4575 = vand.u32 %v4212, 4294901760
        %v4576 = vsub.f32 %v4212, %v4575
        %v4577 = vand.u32 %v4576, 4294901760
        %4578 = vmatmul.mubr.f32.gmra.mrb[0].mxu0 %v4577
        %v4579 = vpop.f32.mrb[0].mxu0
        %v4580 = vadd.f32 %v4493, %v4579
        %v4581 = vpop.f32.mrb[0].mxu0
        %v4582 = vadd.f32 %v4495, %v4581
        %4583 = vdwg.mxu0
        %v4584 = vand.u32 %v4198, 4294901760
        %v4585 = vsub.f32 %v4198, %v4584
        %v4586 = vand.u32 %v4585, 4294901760
        %4587 = vmatprep.subr.mxu0 %v4586
        %v4588 = vand.u32 %v4204, 4294901760
        %v4589 = vsub.f32 %v4204, %v4588
        %v4590 = vand.u32 %v4589, 4294901760
        %4591 = vmatpush1.msra.mxu0 %v4590
        %v4592 = vand.u32 %v4216, 4294901760
        %v4593 = vsub.f32 %v4216, %v4592
        %v4594 = vand.u32 %v4593, 4294901760
        %4595 = vmatprep.subr.mxu0 %v4594
        %v4596 = vand.u32 %v4214, 4294901760
        %v4597 = vsub.f32 %v4214, %v4596
        %v4598 = vand.u32 %v4597, 4294901760
        %4599 = vmatpush1.msra.mxu0 %v4598
        %4600 = vmatprep.subr.mxu0 0.0
        %4601 = vmatpush1.msra.mxu0 0.0
        %4602 = vmatprep.subr.mxu0 0.0
        %4603 = vmatpush1.msra.mxu0 0.0
        %4604 = vmatprep.subr.mxu0 0.0
        %4605 = vmatpush1.msra.mxu0 0.0
        %4606 = vmatprep.subr.mxu0 0.0
        %4607 = vmatpush1.msra.mxu0 0.0
        %4608 = vmatprep.subr.mxu0 0.0
        %4609 = vmatpush1.msra.mxu0 0.0
        %4610 = vmatprep.subr.mxu0 0.0
        %4611 = vmatpush1.msra.mxu0 0.0
        %4612 = vmatprep.subr.mxu0 0.0
        %4613 = vmatpush1.msra.mxu0 0.0
        %4614 = vmatprep.subr.mxu0 0.0
        %4615 = vmatpush1.msra.mxu0 0.0
        %4616 = vmatprep.subr.mxu0 0.0
        %4617 = vmatpush1.msra.mxu0 0.0
        %4618 = vmatprep.subr.mxu0 0.0
        %4619 = vmatpush1.msra.mxu0 0.0
        %4620 = vmatprep.subr.mxu0 0.0
        %4621 = vmatpush1.msra.mxu0 0.0
        %4622 = vmatprep.subr.mxu0 0.0
        %4623 = vmatpush1.msra.mxu0 0.0
        %4624 = vmatprep.subr.mxu0 0.0
        %4625 = vmatpush1.msra.mxu0 0.0
        %4626 = vmatprep.subr.mxu0 0.0
        %4627 = vmatpush1.msra.mxu0 0.0
        %4628 = vmatprep.subr.mxu0 0.0
        %4629 = vmatpush1.msra.mxu0 0.0
        %4630 = vmatprep.subr.mxu0 0.0
        %4631 = vmatpush1.msra.mxu0 0.0
        %4632 = vmatprep.subr.mxu0 0.0
        %4633 = vmatpush1.msra.mxu0 0.0
        %4634 = vmatprep.subr.mxu0 0.0
        %4635 = vmatpush1.msra.mxu0 0.0
        %4636 = vmatprep.subr.mxu0 0.0
        %4637 = vmatpush1.msra.mxu0 0.0
        %4638 = vmatprep.subr.mxu0 0.0
        %4639 = vmatpush1.msra.mxu0 0.0
        %4640 = vmatprep.subr.mxu0 0.0
        %4641 = vmatpush1.msra.mxu0 0.0
        %4642 = vmatprep.subr.mxu0 0.0
        %4643 = vmatpush1.msra.mxu0 0.0
        %4644 = vmatprep.subr.mxu0 0.0
        %4645 = vmatpush1.msra.mxu0 0.0
        %4646 = vmatprep.subr.mxu0 0.0
        %4647 = vmatpush1.msra.mxu0 0.0
        %4648 = vmatprep.subr.mxu0 0.0
        %4649 = vmatpush1.msra.mxu0 0.0
        %4650 = vmatprep.subr.mxu0 0.0
        %4651 = vmatpush1.msra.mxu0 0.0
        %4652 = vmatprep.subr.mxu0 0.0
        %4653 = vmatpush1.msra.mxu0 0.0
        %4654 = vmatprep.subr.mxu0 0.0
        %4655 = vmatpush1.msra.mxu0 0.0
        %4656 = vmatprep.subr.mxu0 0.0
        %4657 = vmatpush1.msra.mxu0 0.0
        %4658 = vmatprep.subr.mxu0 0.0
        %4659 = vmatpush1.msra.mxu0 0.0
        %4660 = vmatprep.mubr.f32.mxu0 0.0
        %v4661 = vand.u32 %v4209, 4294901760
        %4662 = vmatmul.mubr.f32.gmra.mrb[0].mxu0 %v4661
        %v4663 = vpop.f32.mrb[0].mxu0
        %v4664 = vadd.f32 %v4571, %v4663
        %v4665 = vpop.f32.mrb[0].mxu0
        %v4666 = vadd.f32 %v4573, %v4665
        %4667 = vmatprep.mubr.f32.mxu0 0.0
        %v4668 = vand.u32 %v4212, 4294901760
        %4669 = vmatmul.mubr.f32.gmra.mrb[0].mxu0 %v4668
        %v4670 = vpop.f32.mrb[0].mxu0
        %v4671 = vadd.f32 %v4580, %v4670
        %v4672 = vpop.f32.mrb[0].mxu0
        %v4673 = vadd.f32 %v4582, %v4672
        %4674 = vdwg.mxu0
        %v4675 = vand.u32 %v4198, 4294901760
        %4676 = vmatprep.subr.mxu0 %v4675
        %v4677 = vand.u32 %v4204, 4294901760
        %4678 = vmatpush1.msra.mxu0 %v4677
        %v4679 = vand.u32 %v4216, 4294901760
        %4680 = vmatprep.subr.mxu0 %v4679
        %v4681 = vand.u32 %v4214, 4294901760
        %4682 = vmatpush1.msra.mxu0 %v4681
        %4683 = vmatprep.subr.mxu0 0.0
        %4684 = vmatpush1.msra.mxu0 0.0
        %4685 = vmatprep.subr.mxu0 0.0
        %4686 = vmatpush1.msra.mxu0 0.0
        %4687 = vmatprep.subr.mxu0 0.0
        %4688 = vmatpush1.msra.mxu0 0.0
        %4689 = vmatprep.subr.mxu0 0.0
        %4690 = vmatpush1.msra.mxu0 0.0
        %4691 = vmatprep.subr.mxu0 0.0
        %4692 = vmatpush1.msra.mxu0 0.0
        %4693 = vmatprep.subr.mxu0 0.0
        %4694 = vmatpush1.msra.mxu0 0.0
        %4695 = vmatprep.subr.mxu0 0.0
        %4696 = vmatpush1.msra.mxu0 0.0
        %4697 = vmatprep.subr.mxu0 0.0
        %4698 = vmatpush1.msra.mxu0 0.0
        %4699 = vmatprep.subr.mxu0 0.0
        %4700 = vmatpush1.msra.mxu0 0.0
        %4701 = vmatprep.subr.mxu0 0.0
        %4702 = vmatpush1.msra.mxu0 0.0
        %4703 = vmatprep.subr.mxu0 0.0
        %4704 = vmatpush1.msra.mxu0 0.0
        %4705 = vmatprep.subr.mxu0 0.0
        %4706 = vmatpush1.msra.mxu0 0.0
        %4707 = vmatprep.subr.mxu0 0.0
        %4708 = vmatpush1.msra.mxu0 0.0
        %4709 = vmatprep.subr.mxu0 0.0
        %4710 = vmatpush1.msra.mxu0 0.0
        %4711 = vmatprep.subr.mxu0 0.0
        %4712 = vmatpush1.msra.mxu0 0.0
        %4713 = vmatprep.subr.mxu0 0.0
        %4714 = vmatpush1.msra.mxu0 0.0
        %4715 = vmatprep.subr.mxu0 0.0
        %4716 = vmatpush1.msra.mxu0 0.0
        %4717 = vmatprep.subr.mxu0 0.0
        %4718 = vmatpush1.msra.mxu0 0.0
        %4719 = vmatprep.subr.mxu0 0.0
        %4720 = vmatpush1.msra.mxu0 0.0
        %4721 = vmatprep.subr.mxu0 0.0
        %4722 = vmatpush1.msra.mxu0 0.0
        %4723 = vmatprep.subr.mxu0 0.0
        %4724 = vmatpush1.msra.mxu0 0.0
        %4725 = vmatprep.subr.mxu0 0.0
        %4726 = vmatpush1.msra.mxu0 0.0
        %4727 = vmatprep.subr.mxu0 0.0
        %4728 = vmatpush1.msra.mxu0 0.0
        %4729 = vmatprep.subr.mxu0 0.0
        %4730 = vmatpush1.msra.mxu0 0.0
        %4731 = vmatprep.subr.mxu0 0.0
        %4732 = vmatpush1.msra.mxu0 0.0
        %4733 = vmatprep.subr.mxu0 0.0
        %4734 = vmatpush1.msra.mxu0 0.0
        %4735 = vmatprep.subr.mxu0 0.0
        %4736 = vmatpush1.msra.mxu0 0.0
        %4737 = vmatprep.subr.mxu0 0.0
        %4738 = vmatpush1.msra.mxu0 0.0
        %4739 = vmatprep.subr.mxu0 0.0
        %4740 = vmatpush1.msra.mxu0 0.0
        %4741 = vmatprep.subr.mxu0 0.0
        %4742 = vmatpush1.msra.mxu0 0.0
        %4743 = vmatprep.mubr.f32.mxu0 0.0
        %v4744 = vand.u32 %v4209, 4294901760
        %4745 = vmatmul.mubr.f32.gmra.mrb[0].mxu0 %v4744
        %v4746 = vpop.f32.mrb[0].mxu0
        %v4747 = vadd.f32 %v4664, %v4746
        %v4748 = vpop.f32.mrb[0].mxu0
        %v4749 = vadd.f32 %v4666, %v4748
        %4750 = vmatprep.mubr.f32.mxu0 0.0
        %v4751 = vand.u32 %v4212, 4294901760
        %4752 = vmatmul.mubr.f32.gmra.mrb[0].mxu0 %v4751
        %v4753 = vpop.f32.mrb[0].mxu0
        %v4754 = vadd.f32 %v4671, %v4753
        %v4755 = vpop.f32.mrb[0].mxu0
        %v4756 = vadd.f32 %v4673, %v4755
        %4757 = vdwg.mxu0
        %v4758 = vadd.f32 %v4188, %v4747
        %v4759 = vadd.f32 %v4189, %v4749
        %v4760 = vadd.f32 %v4190, %v4754
        %v4761 = vadd.f32 %v4191, %v4756
        %s4762 = scalar_lea.vmem [#allocation3], 128
        %v4763 = vld [vmem:[%s4762] sm:$0xff]
        %v4764 = vld [vmem:[%s4762 + $0x8] sm:$0x3]
        %4765 = vrot.lane.b32.xlu0 %v214, 94
        %v4766 = vpop.permute.xlu0 %4765
        %4767 = vrot.lane.b32.xlu0 %v215, 94
        %v4768 = vpop.permute.xlu0 %4767
        %4769 = vrot.lane.b32.xlu0 %v216, 94
        %v4770 = vpop.permute.xlu0 %4769
        %4771 = vrot.lane.b32.xlu0 %v217, 94
        %v4772 = vpop.permute.xlu0 %4771
        %vm4773 = vcmask 769024
        %v4774 = vsel %vm4773, %v4766, %v4768
        %v4775 = vsel %vm4773, %v4770, %v4772
        %v4779 = vsel %vm240, %v4763, 0
        %v4782 = vsel %vm240, %v4764, 0
        %v4784 = vsel %vm247, %v4775, 0
        %v4786 = vsel %vm247, %v4772, 0
        %v4788 = vand.u32 %v4768, 4294901760
        %4789 = vmatprep.subr.mxu0 %v4788
        %v4790 = vand.u32 %v4774, 4294901760
        %4791 = vmatpush1.msra.mxu0 %v4790
        %v4792 = vand.u32 %v4786, 4294901760
        %4793 = vmatprep.subr.mxu0 %v4792
        %v4794 = vand.u32 %v4784, 4294901760
        %4795 = vmatpush1.msra.mxu0 %v4794
        %4796 = vmatprep.subr.mxu0 0.0
        %4797 = vmatpush1.msra.mxu0 0.0
        %4798 = vmatprep.subr.mxu0 0.0
        %4799 = vmatpush1.msra.mxu0 0.0
        %4800 = vmatprep.subr.mxu0 0.0
        %4801 = vmatpush1.msra.mxu0 0.0
        %4802 = vmatprep.subr.mxu0 0.0
        %4803 = vmatpush1.msra.mxu0 0.0
        %4804 = vmatprep.subr.mxu0 0.0
        %4805 = vmatpush1.msra.mxu0 0.0
        %4806 = vmatprep.subr.mxu0 0.0
        %4807 = vmatpush1.msra.mxu0 0.0
        %4808 = vmatprep.subr.mxu0 0.0
        %4809 = vmatpush1.msra.mxu0 0.0
        %4810 = vmatprep.subr.mxu0 0.0
        %4811 = vmatpush1.msra.mxu0 0.0
        %4812 = vmatprep.subr.mxu0 0.0
        %4813 = vmatpush1.msra.mxu0 0.0
        %4814 = vmatprep.subr.mxu0 0.0
        %4815 = vmatpush1.msra.mxu0 0.0
        %4816 = vmatprep.subr.mxu0 0.0
        %4817 = vmatpush1.msra.mxu0 0.0
        %4818 = vmatprep.subr.mxu0 0.0
        %4819 = vmatpush1.msra.mxu0 0.0
        %4820 = vmatprep.subr.mxu0 0.0
        %4821 = vmatpush1.msra.mxu0 0.0
        %4822 = vmatprep.subr.mxu0 0.0
        %4823 = vmatpush1.msra.mxu0 0.0
        %4824 = vmatprep.subr.mxu0 0.0
        %4825 = vmatpush1.msra.mxu0 0.0
        %4826 = vmatprep.subr.mxu0 0.0
        %4827 = vmatpush1.msra.mxu0 0.0
        %4828 = vmatprep.subr.mxu0 0.0
        %4829 = vmatpush1.msra.mxu0 0.0
        %4830 = vmatprep.subr.mxu0 0.0
        %4831 = vmatpush1.msra.mxu0 0.0
        %4832 = vmatprep.subr.mxu0 0.0
        %4833 = vmatpush1.msra.mxu0 0.0
        %4834 = vmatprep.subr.mxu0 0.0
        %4835 = vmatpush1.msra.mxu0 0.0
        %4836 = vmatprep.subr.mxu0 0.0
        %4837 = vmatpush1.msra.mxu0 0.0
        %4838 = vmatprep.subr.mxu0 0.0
        %4839 = vmatpush1.msra.mxu0 0.0
        %4840 = vmatprep.subr.mxu0 0.0
        %4841 = vmatpush1.msra.mxu0 0.0
        %4842 = vmatprep.subr.mxu0 0.0
        %4843 = vmatpush1.msra.mxu0 0.0
        %4844 = vmatprep.subr.mxu0 0.0
        %4845 = vmatpush1.msra.mxu0 0.0
        %4846 = vmatprep.subr.mxu0 0.0
        %4847 = vmatpush1.msra.mxu0 0.0
        %4848 = vmatprep.subr.mxu0 0.0
        %4849 = vmatpush1.msra.mxu0 0.0
        %4850 = vmatprep.subr.mxu0 0.0
        %4851 = vmatpush1.msra.mxu0 0.0
        %4852 = vmatprep.subr.mxu0 0.0
        %4853 = vmatpush1.msra.mxu0 0.0
        %4854 = vmatprep.subr.mxu0 0.0
        %4855 = vmatpush1.msra.mxu0 0.0
        %4856 = vmatprep.mubr.f32.mxu0 0.0
        %v4857 = vand.u32 %v4779, 4294901760
        %v4858 = vsub.f32 %v4779, %v4857
        %v4859 = vand.u32 %v4858, 4294901760
        %v4860 = vsub.f32 %v4858, %v4859
        %v4861 = vand.u32 %v4860, 4294901760
        %4862 = vmatmul.mubr.f32.gmra.mrb[0].mxu0 %v4861
        %v4863 = vpop.f32.mrb[0].mxu0
        %v4864 = vadd.f32 0.0, %v4863
        %v4865 = vpop.f32.mrb[0].mxu0
        %v4866 = vadd.f32 0.0, %v4865
        %4867 = vmatprep.mubr.f32.mxu0 0.0
        %v4868 = vand.u32 %v4782, 4294901760
        %v4869 = vsub.f32 %v4782, %v4868
        %v4870 = vand.u32 %v4869, 4294901760
        %v4871 = vsub.f32 %v4869, %v4870
        %v4872 = vand.u32 %v4871, 4294901760
        %4873 = vmatmul.mubr.f32.gmra.mrb[0].mxu0 %v4872
        %v4874 = vpop.f32.mrb[0].mxu0
        %v4875 = vadd.f32 0.0, %v4874
        %v4876 = vpop.f32.mrb[0].mxu0
        %v4877 = vadd.f32 0.0, %v4876
        %4878 = vdwg.mxu0
        %v4879 = vand.u32 %v4768, 4294901760
        %v4880 = vsub.f32 %v4768, %v4879
        %v4881 = vand.u32 %v4880, 4294901760
        %v4882 = vsub.f32 %v4880, %v4881
        %v4883 = vand.u32 %v4882, 4294901760
        %4884 = vmatprep.subr.mxu0 %v4883
        %v4885 = vand.u32 %v4774, 4294901760
        %v4886 = vsub.f32 %v4774, %v4885
        %v4887 = vand.u32 %v4886, 4294901760
        %v4888 = vsub.f32 %v4886, %v4887
        %v4889 = vand.u32 %v4888, 4294901760
        %4890 = vmatpush1.msra.mxu0 %v4889
        %v4891 = vand.u32 %v4786, 4294901760
        %v4892 = vsub.f32 %v4786, %v4891
        %v4893 = vand.u32 %v4892, 4294901760
        %v4894 = vsub.f32 %v4892, %v4893
        %v4895 = vand.u32 %v4894, 4294901760
        %4896 = vmatprep.subr.mxu0 %v4895
        %v4897 = vand.u32 %v4784, 4294901760
        %v4898 = vsub.f32 %v4784, %v4897
        %v4899 = vand.u32 %v4898, 4294901760
        %v4900 = vsub.f32 %v4898, %v4899
        %v4901 = vand.u32 %v4900, 4294901760
        %4902 = vmatpush1.msra.mxu0 %v4901
        %4903 = vmatprep.subr.mxu0 0.0
        %4904 = vmatpush1.msra.mxu0 0.0
        %4905 = vmatprep.subr.mxu0 0.0
        %4906 = vmatpush1.msra.mxu0 0.0
        %4907 = vmatprep.subr.mxu0 0.0
        %4908 = vmatpush1.msra.mxu0 0.0
        %4909 = vmatprep.subr.mxu0 0.0
        %4910 = vmatpush1.msra.mxu0 0.0
        %4911 = vmatprep.subr.mxu0 0.0
        %4912 = vmatpush1.msra.mxu0 0.0
        %4913 = vmatprep.subr.mxu0 0.0
        %4914 = vmatpush1.msra.mxu0 0.0
        %4915 = vmatprep.subr.mxu0 0.0
        %4916 = vmatpush1.msra.mxu0 0.0
        %4917 = vmatprep.subr.mxu0 0.0
        %4918 = vmatpush1.msra.mxu0 0.0
        %4919 = vmatprep.subr.mxu0 0.0
        %4920 = vmatpush1.msra.mxu0 0.0
        %4921 = vmatprep.subr.mxu0 0.0
        %4922 = vmatpush1.msra.mxu0 0.0
        %4923 = vmatprep.subr.mxu0 0.0
        %4924 = vmatpush1.msra.mxu0 0.0
        %4925 = vmatprep.subr.mxu0 0.0
        %4926 = vmatpush1.msra.mxu0 0.0
        %4927 = vmatprep.subr.mxu0 0.0
        %4928 = vmatpush1.msra.mxu0 0.0
        %4929 = vmatprep.subr.mxu0 0.0
        %4930 = vmatpush1.msra.mxu0 0.0
        %4931 = vmatprep.subr.mxu0 0.0
        %4932 = vmatpush1.msra.mxu0 0.0
        %4933 = vmatprep.subr.mxu0 0.0
        %4934 = vmatpush1.msra.mxu0 0.0
        %4935 = vmatprep.subr.mxu0 0.0
        %4936 = vmatpush1.msra.mxu0 0.0
        %4937 = vmatprep.subr.mxu0 0.0
        %4938 = vmatpush1.msra.mxu0 0.0
        %4939 = vmatprep.subr.mxu0 0.0
        %4940 = vmatpush1.msra.mxu0 0.0
        %4941 = vmatprep.subr.mxu0 0.0
        %4942 = vmatpush1.msra.mxu0 0.0
        %4943 = vmatprep.subr.mxu0 0.0
        %4944 = vmatpush1.msra.mxu0 0.0
        %4945 = vmatprep.subr.mxu0 0.0
        %4946 = vmatpush1.msra.mxu0 0.0
        %4947 = vmatprep.subr.mxu0 0.0
        %4948 = vmatpush1.msra.mxu0 0.0
        %4949 = vmatprep.subr.mxu0 0.0
        %4950 = vmatpush1.msra.mxu0 0.0
        %4951 = vmatprep.subr.mxu0 0.0
        %4952 = vmatpush1.msra.mxu0 0.0
        %4953 = vmatprep.subr.mxu0 0.0
        %4954 = vmatpush1.msra.mxu0 0.0
        %4955 = vmatprep.subr.mxu0 0.0
        %4956 = vmatpush1.msra.mxu0 0.0
        %4957 = vmatprep.subr.mxu0 0.0
        %4958 = vmatpush1.msra.mxu0 0.0
        %4959 = vmatprep.subr.mxu0 0.0
        %4960 = vmatpush1.msra.mxu0 0.0
        %4961 = vmatprep.subr.mxu0 0.0
        %4962 = vmatpush1.msra.mxu0 0.0
        %4963 = vmatprep.mubr.f32.mxu0 0.0
        %v4964 = vand.u32 %v4779, 4294901760
        %4965 = vmatmul.mubr.f32.gmra.mrb[0].mxu0 %v4964
        %v4966 = vpop.f32.mrb[0].mxu0
        %v4967 = vadd.f32 %v4864, %v4966
        %v4968 = vpop.f32.mrb[0].mxu0
        %v4969 = vadd.f32 %v4866, %v4968
        %4970 = vmatprep.mubr.f32.mxu0 0.0
        %v4971 = vand.u32 %v4782, 4294901760
        %4972 = vmatmul.mubr.f32.gmra.mrb[0].mxu0 %v4971
        %v4973 = vpop.f32.mrb[0].mxu0
        %v4974 = vadd.f32 %v4875, %v4973
        %v4975 = vpop.f32.mrb[0].mxu0
        %v4976 = vadd.f32 %v4877, %v4975
        %4977 = vdwg.mxu0
        %v4978 = vand.u32 %v4768, 4294901760
        %v4979 = vsub.f32 %v4768, %v4978
        %4980 = vmatprep.subr.mxu0 %v4979
        %v4981 = vand.u32 %v4774, 4294901760
        %v4982 = vsub.f32 %v4774, %v4981
        %4983 = vmatpush1.msra.mxu0 %v4982
        %v4984 = vand.u32 %v4786, 4294901760
        %v4985 = vsub.f32 %v4786, %v4984
        %4986 = vmatprep.subr.mxu0 %v4985
        %v4987 = vand.u32 %v4784, 4294901760
        %v4988 = vsub.f32 %v4784, %v4987
        %4989 = vmatpush1.msra.mxu0 %v4988
        %4990 = vmatprep.subr.mxu0 0.0
        %4991 = vmatpush1.msra.mxu0 0.0
        %4992 = vmatprep.subr.mxu0 0.0
        %4993 = vmatpush1.msra.mxu0 0.0
        %4994 = vmatprep.subr.mxu0 0.0
        %4995 = vmatpush1.msra.mxu0 0.0
        %4996 = vmatprep.subr.mxu0 0.0
        %4997 = vmatpush1.msra.mxu0 0.0
        %4998 = vmatprep.subr.mxu0 0.0
        %4999 = vmatpush1.msra.mxu0 0.0
        %5000 = vmatprep.subr.mxu0 0.0
        %5001 = vmatpush1.msra.mxu0 0.0
        %5002 = vmatprep.subr.mxu0 0.0
        %5003 = vmatpush1.msra.mxu0 0.0
        %5004 = vmatprep.subr.mxu0 0.0
        %5005 = vmatpush1.msra.mxu0 0.0
        %5006 = vmatprep.subr.mxu0 0.0
        %5007 = vmatpush1.msra.mxu0 0.0
        %5008 = vmatprep.subr.mxu0 0.0
        %5009 = vmatpush1.msra.mxu0 0.0
        %5010 = vmatprep.subr.mxu0 0.0
        %5011 = vmatpush1.msra.mxu0 0.0
        %5012 = vmatprep.subr.mxu0 0.0
        %5013 = vmatpush1.msra.mxu0 0.0
        %5014 = vmatprep.subr.mxu0 0.0
        %5015 = vmatpush1.msra.mxu0 0.0
        %5016 = vmatprep.subr.mxu0 0.0
        %5017 = vmatpush1.msra.mxu0 0.0
        %5018 = vmatprep.subr.mxu0 0.0
        %5019 = vmatpush1.msra.mxu0 0.0
        %5020 = vmatprep.subr.mxu0 0.0
        %5021 = vmatpush1.msra.mxu0 0.0
        %5022 = vmatprep.subr.mxu0 0.0
        %5023 = vmatpush1.msra.mxu0 0.0
        %5024 = vmatprep.subr.mxu0 0.0
        %5025 = vmatpush1.msra.mxu0 0.0
        %5026 = vmatprep.subr.mxu0 0.0
        %5027 = vmatpush1.msra.mxu0 0.0
        %5028 = vmatprep.subr.mxu0 0.0
        %5029 = vmatpush1.msra.mxu0 0.0
        %5030 = vmatprep.subr.mxu0 0.0
        %5031 = vmatpush1.msra.mxu0 0.0
        %5032 = vmatprep.subr.mxu0 0.0
        %5033 = vmatpush1.msra.mxu0 0.0
        %5034 = vmatprep.subr.mxu0 0.0
        %5035 = vmatpush1.msra.mxu0 0.0
        %5036 = vmatprep.subr.mxu0 0.0
        %5037 = vmatpush1.msra.mxu0 0.0
        %5038 = vmatprep.subr.mxu0 0.0
        %5039 = vmatpush1.msra.mxu0 0.0
        %5040 = vmatprep.subr.mxu0 0.0
        %5041 = vmatpush1.msra.mxu0 0.0
        %5042 = vmatprep.subr.mxu0 0.0
        %5043 = vmatpush1.msra.mxu0 0.0
        %5044 = vmatprep.subr.mxu0 0.0
        %5045 = vmatpush1.msra.mxu0 0.0
        %5046 = vmatprep.subr.mxu0 0.0
        %5047 = vmatpush1.msra.mxu0 0.0
        %5048 = vmatprep.subr.mxu0 0.0
        %5049 = vmatpush1.msra.mxu0 0.0
        %5050 = vmatprep.mubr.f32.mxu0 0.0
        %v5051 = vand.u32 %v4779, 4294901760
        %v5052 = vsub.f32 %v4779, %v5051
        %5053 = vmatmul.mubr.f32.gmra.mrb[0].mxu0 %v5052
        %v5054 = vpop.f32.mrb[0].mxu0
        %v5055 = vadd.f32 %v4967, %v5054
        %v5056 = vpop.f32.mrb[0].mxu0
        %v5057 = vadd.f32 %v4969, %v5056
        %5058 = vmatprep.mubr.f32.mxu0 0.0
        %v5059 = vand.u32 %v4782, 4294901760
        %v5060 = vsub.f32 %v4782, %v5059
        %5061 = vmatmul.mubr.f32.gmra.mrb[0].mxu0 %v5060
        %v5062 = vpop.f32.mrb[0].mxu0
        %v5063 = vadd.f32 %v4974, %v5062
        %v5064 = vpop.f32.mrb[0].mxu0
        %v5065 = vadd.f32 %v4976, %v5064
        %5066 = vdwg.mxu0
        %v5067 = vand.u32 %v4768, 4294901760
        %5068 = vmatprep.subr.mxu0 %v5067
        %v5069 = vand.u32 %v4774, 4294901760
        %5070 = vmatpush1.msra.mxu0 %v5069
        %v5071 = vand.u32 %v4786, 4294901760
        %5072 = vmatprep.subr.mxu0 %v5071
        %v5073 = vand.u32 %v4784, 4294901760
        %5074 = vmatpush1.msra.mxu0 %v5073
        %5075 = vmatprep.subr.mxu0 0.0
        %5076 = vmatpush1.msra.mxu0 0.0
        %5077 = vmatprep.subr.mxu0 0.0
        %5078 = vmatpush1.msra.mxu0 0.0
        %5079 = vmatprep.subr.mxu0 0.0
        %5080 = vmatpush1.msra.mxu0 0.0
        %5081 = vmatprep.subr.mxu0 0.0
        %5082 = vmatpush1.msra.mxu0 0.0
        %5083 = vmatprep.subr.mxu0 0.0
        %5084 = vmatpush1.msra.mxu0 0.0
        %5085 = vmatprep.subr.mxu0 0.0
        %5086 = vmatpush1.msra.mxu0 0.0
        %5087 = vmatprep.subr.mxu0 0.0
        %5088 = vmatpush1.msra.mxu0 0.0
        %5089 = vmatprep.subr.mxu0 0.0
        %5090 = vmatpush1.msra.mxu0 0.0
        %5091 = vmatprep.subr.mxu0 0.0
        %5092 = vmatpush1.msra.mxu0 0.0
        %5093 = vmatprep.subr.mxu0 0.0
        %5094 = vmatpush1.msra.mxu0 0.0
        %5095 = vmatprep.subr.mxu0 0.0
        %5096 = vmatpush1.msra.mxu0 0.0
        %5097 = vmatprep.subr.mxu0 0.0
        %5098 = vmatpush1.msra.mxu0 0.0
        %5099 = vmatprep.subr.mxu0 0.0
        %5100 = vmatpush1.msra.mxu0 0.0
        %5101 = vmatprep.subr.mxu0 0.0
        %5102 = vmatpush1.msra.mxu0 0.0
        %5103 = vmatprep.subr.mxu0 0.0
        %5104 = vmatpush1.msra.mxu0 0.0
        %5105 = vmatprep.subr.mxu0 0.0
        %5106 = vmatpush1.msra.mxu0 0.0
        %5107 = vmatprep.subr.mxu0 0.0
        %5108 = vmatpush1.msra.mxu0 0.0
        %5109 = vmatprep.subr.mxu0 0.0
        %5110 = vmatpush1.msra.mxu0 0.0
        %5111 = vmatprep.subr.mxu0 0.0
        %5112 = vmatpush1.msra.mxu0 0.0
        %5113 = vmatprep.subr.mxu0 0.0
        %5114 = vmatpush1.msra.mxu0 0.0
        %5115 = vmatprep.subr.mxu0 0.0
        %5116 = vmatpush1.msra.mxu0 0.0
        %5117 = vmatprep.subr.mxu0 0.0
        %5118 = vmatpush1.msra.mxu0 0.0
        %5119 = vmatprep.subr.mxu0 0.0
        %5120 = vmatpush1.msra.mxu0 0.0
        %5121 = vmatprep.subr.mxu0 0.0
        %5122 = vmatpush1.msra.mxu0 0.0
        %5123 = vmatprep.subr.mxu0 0.0
        %5124 = vmatpush1.msra.mxu0 0.0
        %5125 = vmatprep.subr.mxu0 0.0
        %5126 = vmatpush1.msra.mxu0 0.0
        %5127 = vmatprep.subr.mxu0 0.0
        %5128 = vmatpush1.msra.mxu0 0.0
        %5129 = vmatprep.subr.mxu0 0.0
        %5130 = vmatpush1.msra.mxu0 0.0
        %5131 = vmatprep.subr.mxu0 0.0
        %5132 = vmatpush1.msra.mxu0 0.0
        %5133 = vmatprep.subr.mxu0 0.0
        %5134 = vmatpush1.msra.mxu0 0.0
        %5135 = vmatprep.mubr.f32.mxu0 0.0
        %v5136 = vand.u32 %v4779, 4294901760
        %v5137 = vsub.f32 %v4779, %v5136
        %v5138 = vand.u32 %v5137, 4294901760
        %5139 = vmatmul.mubr.f32.gmra.mrb[0].mxu0 %v5138
        %v5140 = vpop.f32.mrb[0].mxu0
        %v5141 = vadd.f32 %v5055, %v5140
        %v5142 = vpop.f32.mrb[0].mxu0
        %v5143 = vadd.f32 %v5057, %v5142
        %5144 = vmatprep.mubr.f32.mxu0 0.0
        %v5145 = vand.u32 %v4782, 4294901760
        %v5146 = vsub.f32 %v4782, %v5145
        %v5147 = vand.u32 %v5146, 4294901760
        %5148 = vmatmul.mubr.f32.gmra.mrb[0].mxu0 %v5147
        %v5149 = vpop.f32.mrb[0].mxu0
        %v5150 = vadd.f32 %v5063, %v5149
        %v5151 = vpop.f32.mrb[0].mxu0
        %v5152 = vadd.f32 %v5065, %v5151
        %5153 = vdwg.mxu0
        %v5154 = vand.u32 %v4768, 4294901760
        %v5155 = vsub.f32 %v4768, %v5154
        %v5156 = vand.u32 %v5155, 4294901760
        %5157 = vmatprep.subr.mxu0 %v5156
        %v5158 = vand.u32 %v4774, 4294901760
        %v5159 = vsub.f32 %v4774, %v5158
        %v5160 = vand.u32 %v5159, 4294901760
        %5161 = vmatpush1.msra.mxu0 %v5160
        %v5162 = vand.u32 %v4786, 4294901760
        %v5163 = vsub.f32 %v4786, %v5162
        %v5164 = vand.u32 %v5163, 4294901760
        %5165 = vmatprep.subr.mxu0 %v5164
        %v5166 = vand.u32 %v4784, 4294901760
        %v5167 = vsub.f32 %v4784, %v5166
        %v5168 = vand.u32 %v5167, 4294901760
        %5169 = vmatpush1.msra.mxu0 %v5168
        %5170 = vmatprep.subr.mxu0 0.0
        %5171 = vmatpush1.msra.mxu0 0.0
        %5172 = vmatprep.subr.mxu0 0.0
        %5173 = vmatpush1.msra.mxu0 0.0
        %5174 = vmatprep.subr.mxu0 0.0
        %5175 = vmatpush1.msra.mxu0 0.0
        %5176 = vmatprep.subr.mxu0 0.0
        %5177 = vmatpush1.msra.mxu0 0.0
        %5178 = vmatprep.subr.mxu0 0.0
        %5179 = vmatpush1.msra.mxu0 0.0
        %5180 = vmatprep.subr.mxu0 0.0
        %5181 = vmatpush1.msra.mxu0 0.0
        %5182 = vmatprep.subr.mxu0 0.0
        %5183 = vmatpush1.msra.mxu0 0.0
        %5184 = vmatprep.subr.mxu0 0.0
        %5185 = vmatpush1.msra.mxu0 0.0
        %5186 = vmatprep.subr.mxu0 0.0
        %5187 = vmatpush1.msra.mxu0 0.0
        %5188 = vmatprep.subr.mxu0 0.0
        %5189 = vmatpush1.msra.mxu0 0.0
        %5190 = vmatprep.subr.mxu0 0.0
        %5191 = vmatpush1.msra.mxu0 0.0
        %5192 = vmatprep.subr.mxu0 0.0
        %5193 = vmatpush1.msra.mxu0 0.0
        %5194 = vmatprep.subr.mxu0 0.0
        %5195 = vmatpush1.msra.mxu0 0.0
        %5196 = vmatprep.subr.mxu0 0.0
        %5197 = vmatpush1.msra.mxu0 0.0
        %5198 = vmatprep.subr.mxu0 0.0
        %5199 = vmatpush1.msra.mxu0 0.0
        %5200 = vmatprep.subr.mxu0 0.0
        %5201 = vmatpush1.msra.mxu0 0.0
        %5202 = vmatprep.subr.mxu0 0.0
        %5203 = vmatpush1.msra.mxu0 0.0
        %5204 = vmatprep.subr.mxu0 0.0
        %5205 = vmatpush1.msra.mxu0 0.0
        %5206 = vmatprep.subr.mxu0 0.0
        %5207 = vmatpush1.msra.mxu0 0.0
        %5208 = vmatprep.subr.mxu0 0.0
        %5209 = vmatpush1.msra.mxu0 0.0
        %5210 = vmatprep.subr.mxu0 0.0
        %5211 = vmatpush1.msra.mxu0 0.0
        %5212 = vmatprep.subr.mxu0 0.0
        %5213 = vmatpush1.msra.mxu0 0.0
        %5214 = vmatprep.subr.mxu0 0.0
        %5215 = vmatpush1.msra.mxu0 0.0
        %5216 = vmatprep.subr.mxu0 0.0
        %5217 = vmatpush1.msra.mxu0 0.0
        %5218 = vmatprep.subr.mxu0 0.0
        %5219 = vmatpush1.msra.mxu0 0.0
        %5220 = vmatprep.subr.mxu0 0.0
        %5221 = vmatpush1.msra.mxu0 0.0
        %5222 = vmatprep.subr.mxu0 0.0
        %5223 = vmatpush1.msra.mxu0 0.0
        %5224 = vmatprep.subr.mxu0 0.0
        %5225 = vmatpush1.msra.mxu0 0.0
        %5226 = vmatprep.subr.mxu0 0.0
        %5227 = vmatpush1.msra.mxu0 0.0
        %5228 = vmatprep.subr.mxu0 0.0
        %5229 = vmatpush1.msra.mxu0 0.0
        %5230 = vmatprep.mubr.f32.mxu0 0.0
        %v5231 = vand.u32 %v4779, 4294901760
        %5232 = vmatmul.mubr.f32.gmra.mrb[0].mxu0 %v5231
        %v5233 = vpop.f32.mrb[0].mxu0
        %v5234 = vadd.f32 %v5141, %v5233
        %v5235 = vpop.f32.mrb[0].mxu0
        %v5236 = vadd.f32 %v5143, %v5235
        %5237 = vmatprep.mubr.f32.mxu0 0.0
        %v5238 = vand.u32 %v4782, 4294901760
        %5239 = vmatmul.mubr.f32.gmra.mrb[0].mxu0 %v5238
        %v5240 = vpop.f32.mrb[0].mxu0
        %v5241 = vadd.f32 %v5150, %v5240
        %v5242 = vpop.f32.mrb[0].mxu0
        %v5243 = vadd.f32 %v5152, %v5242
        %5244 = vdwg.mxu0
        %v5245 = vand.u32 %v4768, 4294901760
        %5246 = vmatprep.subr.mxu0 %v5245
        %v5247 = vand.u32 %v4774, 4294901760
        %5248 = vmatpush1.msra.mxu0 %v5247
        %v5249 = vand.u32 %v4786, 4294901760
        %5250 = vmatprep.subr.mxu0 %v5249
        %v5251 = vand.u32 %v4784, 4294901760
        %5252 = vmatpush1.msra.mxu0 %v5251
        %5253 = vmatprep.subr.mxu0 0.0
        %5254 = vmatpush1.msra.mxu0 0.0
        %5255 = vmatprep.subr.mxu0 0.0
        %5256 = vmatpush1.msra.mxu0 0.0
        %5257 = vmatprep.subr.mxu0 0.0
        %5258 = vmatpush1.msra.mxu0 0.0
        %5259 = vmatprep.subr.mxu0 0.0
        %5260 = vmatpush1.msra.mxu0 0.0
        %5261 = vmatprep.subr.mxu0 0.0
        %5262 = vmatpush1.msra.mxu0 0.0
        %5263 = vmatprep.subr.mxu0 0.0
        %5264 = vmatpush1.msra.mxu0 0.0
        %5265 = vmatprep.subr.mxu0 0.0
        %5266 = vmatpush1.msra.mxu0 0.0
        %5267 = vmatprep.subr.mxu0 0.0
        %5268 = vmatpush1.msra.mxu0 0.0
        %5269 = vmatprep.subr.mxu0 0.0
        %5270 = vmatpush1.msra.mxu0 0.0
        %5271 = vmatprep.subr.mxu0 0.0
        %5272 = vmatpush1.msra.mxu0 0.0
        %5273 = vmatprep.subr.mxu0 0.0
        %5274 = vmatpush1.msra.mxu0 0.0
        %5275 = vmatprep.subr.mxu0 0.0
        %5276 = vmatpush1.msra.mxu0 0.0
        %5277 = vmatprep.subr.mxu0 0.0
        %5278 = vmatpush1.msra.mxu0 0.0
        %5279 = vmatprep.subr.mxu0 0.0
        %5280 = vmatpush1.msra.mxu0 0.0
        %5281 = vmatprep.subr.mxu0 0.0
        %5282 = vmatpush1.msra.mxu0 0.0
        %5283 = vmatprep.subr.mxu0 0.0
        %5284 = vmatpush1.msra.mxu0 0.0
        %5285 = vmatprep.subr.mxu0 0.0
        %5286 = vmatpush1.msra.mxu0 0.0
        %5287 = vmatprep.subr.mxu0 0.0
        %5288 = vmatpush1.msra.mxu0 0.0
        %5289 = vmatprep.subr.mxu0 0.0
        %5290 = vmatpush1.msra.mxu0 0.0
        %5291 = vmatprep.subr.mxu0 0.0
        %5292 = vmatpush1.msra.mxu0 0.0
        %5293 = vmatprep.subr.mxu0 0.0
        %5294 = vmatpush1.msra.mxu0 0.0
        %5295 = vmatprep.subr.mxu0 0.0
        %5296 = vmatpush1.msra.mxu0 0.0
        %5297 = vmatprep.subr.mxu0 0.0
        %5298 = vmatpush1.msra.mxu0 0.0
        %5299 = vmatprep.subr.mxu0 0.0
        %5300 = vmatpush1.msra.mxu0 0.0
        %5301 = vmatprep.subr.mxu0 0.0
        %5302 = vmatpush1.msra.mxu0 0.0
        %5303 = vmatprep.subr.mxu0 0.0
        %5304 = vmatpush1.msra.mxu0 0.0
        %5305 = vmatprep.subr.mxu0 0.0
        %5306 = vmatpush1.msra.mxu0 0.0
        %5307 = vmatprep.subr.mxu0 0.0
        %5308 = vmatpush1.msra.mxu0 0.0
        %5309 = vmatprep.subr.mxu0 0.0
        %5310 = vmatpush1.msra.mxu0 0.0
        %5311 = vmatprep.subr.mxu0 0.0
        %5312 = vmatpush1.msra.mxu0 0.0
        %5313 = vmatprep.mubr.f32.mxu0 0.0
        %v5314 = vand.u32 %v4779, 4294901760
        %5315 = vmatmul.mubr.f32.gmra.mrb[0].mxu0 %v5314
        %v5316 = vpop.f32.mrb[0].mxu0
        %v5317 = vadd.f32 %v5234, %v5316
        %v5318 = vpop.f32.mrb[0].mxu0
        %v5319 = vadd.f32 %v5236, %v5318
        %5320 = vmatprep.mubr.f32.mxu0 0.0
        %v5321 = vand.u32 %v4782, 4294901760
        %5322 = vmatmul.mubr.f32.gmra.mrb[0].mxu0 %v5321
        %v5323 = vpop.f32.mrb[0].mxu0
        %v5324 = vadd.f32 %v5241, %v5323
        %v5325 = vpop.f32.mrb[0].mxu0
        %v5326 = vadd.f32 %v5243, %v5325
        %5327 = vdwg.mxu0
        %v5328 = vadd.f32 %v4758, %v5317
        %v5329 = vadd.f32 %v4759, %v5319
        %v5330 = vadd.f32 %v4760, %v5324
        %v5331 = vadd.f32 %v4761, %v5326
        %v5332 = vld [vmem:[%s2] sm:$0xff]
        %v5333 = vld [vmem:[%s2 + $0x8] sm:$0x3]
        %5335 = vset.pattern.permute.xlu0 0
        %5336 = vperm.xlu0 %5335, %v5332
        %v5337 = vpop.permute.xlu0 %5336
        %5340 = vset.pattern.permute.xlu0 0
        %5341 = vperm.xlu0 %5340, %v5333
        %v5342 = vpop.permute.xlu0 %5341
        %v5344 = vadd.f32 %v5328, %v5337
        %v5345 = vadd.f32 %v5329, %v5337
        %v5346 = vadd.f32 %v5330, %v5342
        %v5347 = vadd.f32 %v5331, %v5342
        %s5348 = sld [smem:[#allocation2]]
        %vm5349 = vcmp.ge.f32.partialorder %v5344, 0.0
        %vm5350 = vcmp.ge.f32.partialorder %v5345, 0.0
        %vm5351 = vcmp.ge.f32.partialorder %v5346, 0.0
        %vm5352 = vcmp.ge.f32.partialorder %v5347, 0.0
        %v5353 = vstv %s5348
        %v5354 = vmul.f32 %v5353, %v5344
        %v5355 = vmul.f32 %v5353, %v5345
        %v5356 = vmul.f32 %v5353, %v5346
        %v5357 = vmul.f32 %v5353, %v5347
        %v5358 = vsel %vm5349, %v5344, %v5354
        %v5359 = vsel %vm5350, %v5345, %v5355
        %v5360 = vsel %vm5351, %v5346, %v5356
        %v5361 = vsel %vm5352, %v5347, %v5357
        %5362 = vst [vmem:[%s213] sm:$0xff] %v5358
        %5363 = vst.msk [vmem:[%s213 + $0x8] sm:$0xff] %vm4773, %v5359
        %5364 = vst [vmem:[%s213 + $0x10] sm:$0x3] %v5360
        %vm5365 = vcmask 762880
        %5366 = vst.msk [vmem:[%s213 + $0x18] sm:$0x3] %vm5365, %v5361
        %p5367 = scmp.lt.s32.totalorder %s17, 1
        %s5368 = scalar_select %p5367, %s17, 1
        %s5369 = smul.addr %s5368, 4
        %s5370 = smul.addr %s5369, 8
        %s5371 = scalar_lea.vmem %s4, %s5370
        // Predicated region
        $region41: #{tpu_custom_call.1} parent=35 // pred_check
          %p5372 = pneg %p124
        $region42: #{tpu_custom_call.1} parent=35 // pred_check_branch
          %5374 = sbr.rel (%p5372) target = $region44
        $region43: #{tpu_custom_call.1} parent=35 // pred_region
          _
        $region44: #{tpu_custom_call.1} parent=35 // pred_fallthru
          _
      $region36: #{tpu_custom_call.1} parent=5 // pred_fallthru
        _
      %p5375 = scmp.le.s32.totalorder 2, %s12
      // Predicated region
      $region45: #{tpu_custom_call.1} parent=5 // pred_check
        %p5376 = pneg %p5375
      $region46: #{tpu_custom_call.1} parent=5 // pred_check_branch
        %5378 = sbr.rel (%p5376) target = $region48
      $region47: #{tpu_custom_call.1} parent=5 // pred_region
        %s5379 = ssub.s32 %s12, 2
        // Predicated region
        $region49: #{tpu_custom_call.1} parent=47 // pred_check
          %p5380 = pneg %p130
        $region50: #{tpu_custom_call.1} parent=47 // pred_check_branch
          %5382 = sbr.rel (%p5380) target = $region52
        $region51: #{tpu_custom_call.1} parent=47 // pred_region
          %p5383 = scmp.lt.s32.totalorder %s18, 1
          %s5384 = scalar_select %p5383, %s18, 1
          %s5385 = smul.addr %s5384, 4
          %s5386 = smul.addr %s5385, 8
          %s5387 = scalar_lea.vmem %s4, %s5386
        $region52: #{tpu_custom_call.1} parent=47 // pred_fallthru
          _
      $region48: #{tpu_custom_call.1} parent=5 // pred_fallthru
        _
    $region6: #{tpu_custom_call.1} parent=1 // loop_footer
      %s16 = sadd.s32 1, %s12
    $region7: #{tpu_custom_call.1} parent=1 // loop_footer_branch
      %11 = sbr.rel target = $region3
    $region8: #{tpu_custom_call.1} parent=1 // loop_exit
      _
    %5388 = vsyncpa [#allocation4], 1
    %s5389 = scalar_lea.sflag [#allocation4], 1
    %5390 = vsyncpa %s5389, 1

</llo_original>
